<compile_context>
chip_gen: v5e
topology: v5e:2x2
jax: 0.10.0
libtpu: 0.0.40
codegen_flags: <defaults>
</compile_context>

<pallas_src>
import numpy as np
import jax
import jax.numpy as jnp
from jax.experimental import pallas as pl
from jax.experimental.pallas import tpu as pltpu

EPS = 1e-5       # nn.BatchNorm2d default eps
LANES = 128


def _round_up(x, m):
    return (x + m - 1) // m * m


def _conv3x3(x_img, w_flat, b_row):
    """3x3 / stride-1 / pad-1 conv on one image as a single MXU contraction.

    x_img:  (H, W, Cp) f32 activations (channels on lanes, Cp % 128 == 0).
    w_flat: (9*Cp, Cp) bf16 weights, tap-major (HWIO flattened).
    b_row:  (1, Cp)    f32 bias.
    Returns (H*W, Cp) f32.
    """
    H, W, Cp = x_img.shape
    x_bf = x_img.astype(jnp.bfloat16)                    # bf16 MXU operands
    # Pad once with a 1-pixel zero halo, then take the 9 static tap slices.
    # All data movement here is sublane / major-dim moves on bf16 and stays
    # off the MXU critical path.
    zrow = jnp.zeros((1, W, Cp), jnp.bfloat16)
    zcol = jnp.zeros((H + 2, 1, Cp), jnp.bfloat16)
    xpad = jnp.concatenate(
        [zcol, jnp.concatenate([zrow, x_bf, zrow], axis=0), zcol], axis=1)
    # taps[ky*3+kx][h, w, :] = x[h+ky-1, w+kx-1, :]  (zero outside) — matches
    # the tap-major HWIO weight flattening below.
    taps = [xpad[ky:ky + H, kx:kx + W, :] for ky in range(3) for kx in range(3)]
    stacked = jnp.concatenate(taps, axis=-1).reshape(H * W, 9 * Cp)
    y = jnp.dot(stacked, w_flat, preferred_element_type=jnp.float32)   # f32 acc
    return y + b_row


def _stats(y):
    """Per-block channel sum / sum-of-squares, stacked -> (2, Cp)."""
    return jnp.concatenate([jnp.sum(y, axis=0, keepdims=True),
                            jnp.sum(y * y, axis=0, keepdims=True)], axis=0)


def _conv_bias_kernel(x_ref, w_ref, b_ref, y_ref, stat_ref):
    """conv1 + bias; also emits per-batch-block BN partial statistics."""
    _, H, W, Cp = x_ref.shape
    y = _conv3x3(x_ref[0], w_ref[...], b_ref[0])            # (HW, Cp) f32
    y_ref[0] = y.reshape(H, W, Cp)
    stat_ref[0] = _stats(y)


def _bn_relu_conv_bias_kernel(x_ref, sc_ref, sh_ref, w_ref, b_ref,
                              y_ref, stat_ref):
    """bn1 (folded scale/shift) + relu + conv2 + bias (+ partial BN stats)."""
    _, H, W, Cp = x_ref.shape
    xin = jnp.maximum(x_ref[0] * sc_ref[...] + sh_ref[...], 0.0)
    y = _conv3x3(xin, w_ref[...], b_ref[0])
    y_ref[0] = y.reshape(H, W, Cp)
    stat_ref[0] = _stats(y)


def _bn_add_relu_kernel(y_ref, x_ref, sc_ref, sh_ref, o_ref):
    """bn2 (folded scale/shift) + identity residual + relu."""
    o_ref[0] = jnp.maximum(y_ref[0] * sc_ref[...] + sh_ref[...] + x_ref[0], 0.0)


def basic_block_pallas(x_nchw, params):
    """x_nchw: (N, C, H, W) float32 -> (N, C, H, W) float32."""
    N, C, H, W = x_nchw.shape
    w1, b1, g1, be1, w2, b2, g2, be2 = params
    assert w1.shape == (3, 3, C, C) and w2.shape == (3, 3, C, C), \
        "identity residual requires in_channels == out_channels, stride 1"
    Cp = _round_up(C, LANES)

    # NCHW -> channels-last, channel-padded to a lane-dense multiple of 128.
    xp = jnp.pad(jnp.transpose(x_nchw, (0, 2, 3, 1)),
                 ((0, 0), (0, 0), (0, 0), (0, Cp - C)))       # (N,H,W,Cp) f32

    def prep_w(w):        # (3,3,C,C) HWIO -> (9*Cp, Cp) bf16, tap-major
        wp = jnp.pad(w, ((0, 0), (0, 0), (0, Cp - C), (0, Cp - C)))
        return wp.reshape(9 * Cp, Cp).astype(jnp.bfloat16)

    def prep_vec(v):      # (C,) -> (1, 1, Cp) f32
        return jnp.pad(v, (0, Cp - C)).reshape(1, 1, Cp).astype(jnp.float32)

    w1f, w2f = prep_w(w1), prep_w(w2)
    b1p, b2p = prep_vec(b1), prep_vec(b2)

    grid = (N,)
    act_spec = pl.BlockSpec((1, H, W, Cp), lambda i: (i, 0, 0, 0))
    vec_spec = pl.BlockSpec((1, 1, Cp), lambda i: (0, 0, 0))
    stat_spec = pl.BlockSpec((1, 2, Cp), lambda i: (i, 0, 0))
    w_spec = pl.BlockSpec((9 * Cp, Cp), lambda i: (0, 0))
    cparams = pltpu.CompilerParams(dimension_semantics=("parallel",),
                                   vmem_limit_bytes=32 * 1024 * 1024)
    act_shape = jax.ShapeDtypeStruct((N, H, W, Cp), jnp.float32)
    stat_shape = jax.ShapeDtypeStruct((N, 2, Cp), jnp.float32)

    # ---- conv1 + bias (+ per-batch partial BN statistics) -------------------
    y1, st1 = pl.pallas_call(
        _conv_bias_kernel,
        grid=grid,
        in_specs=[act_spec, w_spec, vec_spec],
        out_specs=(act_spec, stat_spec),
        out_shape=(act_shape, stat_shape),
        compiler_params=cparams,
    )(xp, w1f, b1p)

    def bn_fold(stats, gamma, beta):
        """Reduce per-batch partial sums -> folded BN scale/shift, (1,1,Cp)."""
        cnt = float(N * H * W)
        s = jnp.sum(stats, axis=0)                          # (2, Cp)
        mean = s[0] / cnt
        var = s[1] / cnt - mean * mean                      # biased (BN train)
        inv = jax.lax.rsqrt(var + EPS)
        g = jnp.pad(gamma, (0, Cp - C))
        b = jnp.pad(beta, (0, Cp - C))
        scale = g * inv
        shift = b - mean * scale
        return scale.reshape(1, 1, Cp), shift.reshape(1, 1, Cp)

    sc1, sh1 = bn_fold(st1, g1, be1)

    # ---- bn1 + relu + conv2 + bias (+ partial BN statistics) ----------------
    y2, st2 = pl.pallas_call(
        _bn_relu_conv_bias_kernel,
        grid=grid,
        in_specs=[act_spec, vec_spec, vec_spec, w_spec, vec_spec],
        out_specs=(act_spec, stat_spec),
        out_shape=(act_shape, stat_shape),
        compiler_params=cparams,
    )(y1, sc1, sh1, w2f, b2p)

    sc2, sh2 = bn_fold(st2, g2, be2)

    # ---- bn2 + identity residual + relu -------------------------------------
    outp = pl.pallas_call(
        _bn_add_relu_kernel,
        grid=grid,
        in_specs=[act_spec, act_spec, vec_spec, vec_spec],
        out_specs=act_spec,
        out_shape=act_shape,
        compiler_params=cparams,
    )(y2, xp, sc2, sh2)

    # Drop channel padding, back to NCHW.
    return jnp.transpose(outp[..., :C], (0, 3, 1, 2))


def basic_block_reference(x_nchw, params, matmul_dtype=jnp.float32):
    """Pure-JAX (XLA) reference.  `matmul_dtype` controls the conv operand
    precision so the kernel's bf16-operand / f32-accumulate policy can be
    matched exactly (the full-f32 reference is a loose sanity check)."""
    w1, b1, g1, be1, w2, b2, g2, be2 = params

    def conv(x, w_hwio, b):
        w_oihw = jnp.transpose(w_hwio, (3, 2, 0, 1)).astype(matmul_dtype)
        y = jax.lax.conv_general_dilated(
            x.astype(matmul_dtype), w_oihw, window_strides=(1, 1),
            padding=((1, 1), (1, 1)),
            dimension_numbers=('NCHW', 'OIHW', 'NCHW'),
            preferred_element_type=jnp.float32)
        return y + b[None, :, None, None]

    def bn(x, g, be):
        mean = x.mean(axis=(0, 2, 3), keepdims=True)
        var = ((x - mean) ** 2).mean(axis=(0, 2, 3), keepdims=True)
        return ((x - mean) * jax.lax.rsqrt(var + EPS)
                * g[None, :, None, None] + be[None, :, None, None])

    out = jnp.maximum(bn(conv(x_nchw, w1, b1), g1, be1), 0.0)
    out = bn(conv(out, w2, b2), g2, be2)
    return jnp.maximum(out + x_nchw, 0.0)


if __name__ == "__main__":
    N, C, H, W = 2, 4, 16, 16          # in_channel == out_channel == 4
    key = jax.random.PRNGKey(0)
    kx, kw1, kb1, kw2, kb2 = jax.random.split(key, 5)

    x = jax.random.normal(kx, (N, C, H, W), jnp.float32)

    # Synthetic parameters (conv weights stored HWIO = (3,3,Ci,Co)).
    w1 = jax.random.normal(kw1, (3, 3, C, C), jnp.float32) * 0.1
    b1 = jax.random.normal(kb1, (C,), jnp.float32) * 0.05
    w2 = jax.random.normal(kw2, (3, 3, C, C), jnp.float32) * 0.1
    b2 = jax.random.normal(kb2, (C,), jnp.float32) * 0.05
    g1 = jnp.ones((C,), jnp.float32);  be1 = jnp.zeros((C,), jnp.float32)
    g2 = jnp.ones((C,), jnp.float32);  be2 = jnp.zeros((C,), jnp.float32)
    params = (w1, b1, g1, be1, w2, b2, g2, be2)

    out = jax.block_until_ready(jax.jit(basic_block_pallas)(x, params))
    assert out.shape == (N, C, H, W)

    # Precision-matched reference (bf16 conv operands, f32 accumulation).
    ref_bf16 = jax.block_until_ready(
        basic_block_reference(x, params, matmul_dtype=jnp.bfloat16))
    np.testing.assert_allclose(np.asarray(out), np.asarray(ref_bf16),
                               rtol=1e-2, atol=1e-2)

    # Loose sanity check against the full-f32 reference (catches wiring bugs;
    # tolerance accounts for the intentional bf16 matmul operands).
    ref_f32 = jax.block_until_ready(basic_block_reference(x, params))
    np.testing.assert_allclose(np.asarray(out), np.asarray(ref_f32),
                               rtol=1e-1, atol=1e-1)

    print("KERNEL_OK")
</pallas_src>

<mosaic_0001>
module attributes {stable_mosaic.version = 11 : i64} {
  func.func @_conv_bias_kernel(%arg0: i32, %arg1: memref<1x16x16x128xf32, #tpu.memory_space<vmem>>, %arg2: memref<1152x128xbf16, #tpu.memory_space<vmem>>, %arg3: memref<1x1x128xf32, #tpu.memory_space<vmem>>, %arg4: memref<1x16x16x128xf32, #tpu.memory_space<vmem>>, %arg5: memref<1x2x128xf32, #tpu.memory_space<vmem>>) attributes {dimension_semantics = [#tpu.dimension_semantics<parallel>], iteration_bounds = array<i64: 2>, scalar_prefetch = 0 : i64, scratch_operands = 0 : i64, tpu.core_type = #tpu.core_type<tc>, window_params = [{transform_indices = @transform_0, window_bounds = array<i64: 1, 16, 16, 128>}, {pipeline_mode = #tpu.pipeline_mode<synchronous>, transform_indices = @transform_1, window_bounds = array<i64: 1152, 128>}, {pipeline_mode = #tpu.pipeline_mode<synchronous>, transform_indices = @transform_2, window_bounds = array<i64: 1, 1, 128>}, {transform_indices = @transform_3, window_bounds = array<i64: 1, 16, 16, 128>}, {transform_indices = @transform_4, window_bounds = array<i64: 1, 2, 128>}]} {
    %c0 = arith.constant 0 : index
    %c0_0 = arith.constant 0 : index
    %c0_1 = arith.constant 0 : index
    %c0_2 = arith.constant 0 : index
    %0 = vector.load %arg1[%c0, %c0_0, %c0_1, %c0_2] : memref<1x16x16x128xf32, #tpu.memory_space<vmem>>, vector<1x16x16x128xf32>
    %1 = vector.shape_cast %0 : vector<1x16x16x128xf32> to vector<16x16x128xf32>
    %c0_3 = arith.constant 0 : index
    %c0_4 = arith.constant 0 : index
    %2 = vector.load %arg2[%c0_3, %c0_4] : memref<1152x128xbf16, #tpu.memory_space<vmem>>, vector<1152x128xbf16>
    %c0_5 = arith.constant 0 : index
    %c0_6 = arith.constant 0 : index
    %c0_7 = arith.constant 0 : index
    %3 = vector.load %arg3[%c0_5, %c0_6, %c0_7] : memref<1x1x128xf32, #tpu.memory_space<vmem>>, vector<1x1x128xf32>
    %4 = vector.shape_cast %3 : vector<1x1x128xf32> to vector<1x128xf32>
    %5 = arith.truncf %1 : vector<16x16x128xf32> to vector<16x16x128xbf16>
    %cst = arith.constant 0.000000e+00 : bf16
    %6 = vector.broadcast %cst : bf16 to vector<1x16x128xbf16>
    %cst_8 = arith.constant 0.000000e+00 : bf16
    %7 = vector.broadcast %cst_8 : bf16 to vector<18x1x128xbf16>
    %8 = tpu.concatenate %6, %5, %6 in 0 : vector<1x16x128xbf16>, vector<16x16x128xbf16>, vector<1x16x128xbf16> -> vector<18x16x128xbf16>
    %9 = tpu.concatenate %7, %8, %7 in 1 : vector<18x1x128xbf16>, vector<18x16x128xbf16>, vector<18x1x128xbf16> -> vector<18x18x128xbf16>
    %10 = vector.extract_strided_slice %9 {offsets = [0, 0, 0], sizes = [16, 16, 128], strides = [1, 1, 1]} : vector<18x18x128xbf16> to vector<16x16x128xbf16>
    %11 = vector.extract_strided_slice %9 {offsets = [0, 1, 0], sizes = [16, 16, 128], strides = [1, 1, 1]} : vector<18x18x128xbf16> to vector<16x16x128xbf16>
    %12 = vector.extract_strided_slice %9 {offsets = [0, 2, 0], sizes = [16, 16, 128], strides = [1, 1, 1]} : vector<18x18x128xbf16> to vector<16x16x128xbf16>
    %13 = vector.extract_strided_slice %9 {offsets = [1, 0, 0], sizes = [16, 16, 128], strides = [1, 1, 1]} : vector<18x18x128xbf16> to vector<16x16x128xbf16>
    %14 = vector.extract_strided_slice %9 {offsets = [1, 1, 0], sizes = [16, 16, 128], strides = [1, 1, 1]} : vector<18x18x128xbf16> to vector<16x16x128xbf16>
    %15 = vector.extract_strided_slice %9 {offsets = [1, 2, 0], sizes = [16, 16, 128], strides = [1, 1, 1]} : vector<18x18x128xbf16> to vector<16x16x128xbf16>
    %16 = vector.extract_strided_slice %9 {offsets = [2, 0, 0], sizes = [16, 16, 128], strides = [1, 1, 1]} : vector<18x18x128xbf16> to vector<16x16x128xbf16>
    %17 = vector.extract_strided_slice %9 {offsets = [2, 1, 0], sizes = [16, 16, 128], strides = [1, 1, 1]} : vector<18x18x128xbf16> to vector<16x16x128xbf16>
    %18 = vector.extract_strided_slice %9 {offsets = [2, 2, 0], sizes = [16, 16, 128], strides = [1, 1, 1]} : vector<18x18x128xbf16> to vector<16x16x128xbf16>
    %19 = tpu.concatenate %10, %11, %12, %13, %14, %15, %16, %17, %18 in 2 : vector<16x16x128xbf16>, vector<16x16x128xbf16>, vector<16x16x128xbf16>, vector<16x16x128xbf16>, vector<16x16x128xbf16>, vector<16x16x128xbf16>, vector<16x16x128xbf16>, vector<16x16x128xbf16>, vector<16x16x128xbf16> -> vector<16x16x1152xbf16>
    %20 = vector.shape_cast %19 : vector<16x16x1152xbf16> to vector<256x1152xbf16>
    %cst_9 = arith.constant dense<0.000000e+00> : vector<256x128xf32>
    %21 = tpu.matmul %20, %2, %cst_9 {dimension_numbers = #tpu.dot_dimension_numbers<[1], [0], [0], [1], [0, 0, 1, 1], [], []>} : vector<256x1152xbf16>, vector<1152x128xbf16>, vector<256x128xf32> -> vector<256x128xf32>
    %22 = vector.broadcast %4 : vector<1x128xf32> to vector<256x128xf32>
    %23 = arith.addf %21, %22 : vector<256x128xf32>
    %24 = vector.shape_cast %23 : vector<256x128xf32> to vector<16x16x128xf32>
    %c0_10 = arith.constant 0 : index
    %c0_11 = arith.constant 0 : index
    %c0_12 = arith.constant 0 : index
    %c0_13 = arith.constant 0 : index
    %25 = vector.load %arg4[%c0_10, %c0_11, %c0_12, %c0_13] : memref<1x16x16x128xf32, #tpu.memory_space<vmem>>, vector<1x16x16x128xf32>
    %26 = vector.shape_cast %25 : vector<1x16x16x128xf32> to vector<16x16x128xf32>
    %27 = vector.shape_cast %24 : vector<16x16x128xf32> to vector<1x16x16x128xf32>
    tpu.vector_store %arg4[%c0_10, %c0_11, %c0_12, %c0_13], %27 {strides = array<i32>} : memref<1x16x16x128xf32, #tpu.memory_space<vmem>>, vector<1x16x16x128xf32>,
    %cst_14 = arith.constant dense<0.000000e+00> : vector<128xf32>
    %28 = vector.multi_reduction <add>, %23, %cst_14 [0] : vector<256x128xf32> to vector<128xf32>
    %29 = vector.shape_cast %28 : vector<128xf32> to vector<1x128xf32>
    %30 = arith.mulf %23, %23 : vector<256x128xf32>
    %cst_15 = arith.constant dense<0.000000e+00> : vector<128xf32>
    %31 = vector.multi_reduction <add>, %30, %cst_15 [0] : vector<256x128xf32> to vector<128xf32>
    %32 = vector.shape_cast %31 : vector<128xf32> to vector<1x128xf32>
    %33 = tpu.concatenate %29, %32 in 0 : vector<1x128xf32>, vector<1x128xf32> -> vector<2x128xf32>
    %c0_16 = arith.constant 0 : index
    %c0_17 = arith.constant 0 : index
    %c0_18 = arith.constant 0 : index
    %34 = vector.load %arg5[%c0_16, %c0_17, %c0_18] : memref<1x2x128xf32, #tpu.memory_space<vmem>>, vector<1x2x128xf32>
    %35 = vector.shape_cast %34 : vector<1x2x128xf32> to vector<2x128xf32>
    %36 = vector.shape_cast %33 : vector<2x128xf32> to vector<1x2x128xf32>
    tpu.vector_store %arg5[%c0_16, %c0_17, %c0_18], %36 {strides = array<i32>} : memref<1x2x128xf32, #tpu.memory_space<vmem>>, vector<1x2x128xf32>,
    return
  }
  func.func @transform_0(%arg0: i32) -> (i32, i32, i32, i32) {
    %c0_i32 = arith.constant 0 : i32
    %c0_i32_0 = arith.constant 0 : i32
    %c0_i32_1 = arith.constant 0 : i32
    %c0_i32_2 = arith.constant 0 : i32
    return %arg0, %c0_i32, %c0_i32_0, %c0_i32_1 : i32, i32, i32, i32
  }
  func.func @transform_1(%arg0: i32) -> (i32, i32) {
    %c0_i32 = arith.constant 0 : i32
    %c0_i32_0 = arith.constant 0 : i32
    %c0_i32_1 = arith.constant 0 : i32
    return %c0_i32, %c0_i32_0 : i32, i32
  }
  func.func @transform_2(%arg0: i32) -> (i32, i32, i32) {
    %c0_i32 = arith.constant 0 : i32
    %c0_i32_0 = arith.constant 0 : i32
    %c0_i32_1 = arith.constant 0 : i32
    %c0_i32_2 = arith.constant 0 : i32
    return %c0_i32, %c0_i32_0, %c0_i32_1 : i32, i32, i32
  }
  func.func @transform_3(%arg0: i32) -> (i32, i32, i32, i32) {
    %c0_i32 = arith.constant 0 : i32
    %c0_i32_0 = arith.constant 0 : i32
    %c0_i32_1 = arith.constant 0 : i32
    %c0_i32_2 = arith.constant 0 : i32
    return %arg0, %c0_i32, %c0_i32_0, %c0_i32_1 : i32, i32, i32, i32
  }
  func.func @transform_4(%arg0: i32) -> (i32, i32, i32) {
    %c0_i32 = arith.constant 0 : i32
    %c0_i32_0 = arith.constant 0 : i32
    %c0_i32_1 = arith.constant 0 : i32
    return %arg0, %c0_i32, %c0_i32_0 : i32, i32, i32
  }
}

module attributes {stable_mosaic.version = 11 : i64} {
  func.func @_bn_add_relu_kernel(%arg0: i32, %arg1: memref<1x16x16x128xf32, #tpu.memory_space<vmem>>, %arg2: memref<1x16x16x128xf32, #tpu.memory_space<vmem>>, %arg3: memref<1x1x128xf32, #tpu.memory_space<vmem>>, %arg4: memref<1x1x128xf32, #tpu.memory_space<vmem>>, %arg5: memref<1x16x16x128xf32, #tpu.memory_space<vmem>>) attributes {dimension_semantics = [#tpu.dimension_semantics<parallel>], iteration_bounds = array<i64: 2>, scalar_prefetch = 0 : i64, scratch_operands = 0 : i64, tpu.core_type = #tpu.core_type<tc>, window_params = [{transform_indices = @transform_0, window_bounds = array<i64: 1, 16, 16, 128>}, {transform_indices = @transform_1, window_bounds = array<i64: 1, 16, 16, 128>}, {pipeline_mode = #tpu.pipeline_mode<synchronous>, transform_indices = @transform_2, window_bounds = array<i64: 1, 1, 128>}, {pipeline_mode = #tpu.pipeline_mode<synchronous>, transform_indices = @transform_3, window_bounds = array<i64: 1, 1, 128>}, {transform_indices = @transform_4, window_bounds = array<i64: 1, 16, 16, 128>}]} {
    %c0 = arith.constant 0 : index
    %c0_0 = arith.constant 0 : index
    %c0_1 = arith.constant 0 : index
    %c0_2 = arith.constant 0 : index
    %0 = vector.load %arg1[%c0, %c0_0, %c0_1, %c0_2] : memref<1x16x16x128xf32, #tpu.memory_space<vmem>>, vector<1x16x16x128xf32>
    %1 = vector.shape_cast %0 : vector<1x16x16x128xf32> to vector<16x16x128xf32>
    %c0_3 = arith.constant 0 : index
    %c0_4 = arith.constant 0 : index
    %c0_5 = arith.constant 0 : index
    %2 = vector.load %arg3[%c0_3, %c0_4, %c0_5] : memref<1x1x128xf32, #tpu.memory_space<vmem>>, vector<1x1x128xf32>
    %3 = vector.broadcast %2 : vector<1x1x128xf32> to vector<16x16x128xf32>
    %4 = arith.mulf %1, %3 : vector<16x16x128xf32>
    %c0_6 = arith.constant 0 : index
    %c0_7 = arith.constant 0 : index
    %c0_8 = arith.constant 0 : index
    %5 = vector.load %arg4[%c0_6, %c0_7, %c0_8] : memref<1x1x128xf32, #tpu.memory_space<vmem>>, vector<1x1x128xf32>
    %6 = vector.broadcast %5 : vector<1x1x128xf32> to vector<16x16x128xf32>
    %7 = arith.addf %4, %6 : vector<16x16x128xf32>
    %c0_9 = arith.constant 0 : index
    %c0_10 = arith.constant 0 : index
    %c0_11 = arith.constant 0 : index
    %c0_12 = arith.constant 0 : index
    %8 = vector.load %arg2[%c0_9, %c0_10, %c0_11, %c0_12] : memref<1x16x16x128xf32, #tpu.memory_space<vmem>>, vector<1x16x16x128xf32>
    %9 = vector.shape_cast %8 : vector<1x16x16x128xf32> to vector<16x16x128xf32>
    %10 = arith.addf %7, %9 : vector<16x16x128xf32>
    %cst = arith.constant 0.000000e+00 : f32
    %11 = vector.broadcast %cst : f32 to vector<16x16x128xf32>
    %12 = arith.maximumf %10, %11 : vector<16x16x128xf32>
    %c0_13 = arith.constant 0 : index
    %c0_14 = arith.constant 0 : index
    %c0_15 = arith.constant 0 : index
    %c0_16 = arith.constant 0 : index
    %13 = vector.load %arg5[%c0_13, %c0_14, %c0_15, %c0_16] : memref<1x16x16x128xf32, #tpu.memory_space<vmem>>, vector<1x16x16x128xf32>
    %14 = vector.shape_cast %13 : vector<1x16x16x128xf32> to vector<16x16x128xf32>
    %15 = vector.shape_cast %12 : vector<16x16x128xf32> to vector<1x16x16x128xf32>
    tpu.vector_store %arg5[%c0_13, %c0_14, %c0_15, %c0_16], %15 {strides = array<i32>} : memref<1x16x16x128xf32, #tpu.memory_space<vmem>>, vector<1x16x16x128xf32>,
    return
  }
  func.func @transform_0(%arg0: i32) -> (i32, i32, i32, i32) {
    %c0_i32 = arith.constant 0 : i32
    %c0_i32_0 = arith.constant 0 : i32
    %c0_i32_1 = arith.constant 0 : i32
    %c0_i32_2 = arith.constant 0 : i32
    return %arg0, %c0_i32, %c0_i32_0, %c0_i32_1 : i32, i32, i32, i32
  }
  func.func @transform_1(%arg0: i32) -> (i32, i32, i32, i32) {
    %c0_i32 = arith.constant 0 : i32
    %c0_i32_0 = arith.constant 0 : i32
    %c0_i32_1 = arith.constant 0 : i32
    %c0_i32_2 = arith.constant 0 : i32
    return %arg0, %c0_i32, %c0_i32_0, %c0_i32_1 : i32, i32, i32, i32
  }
  func.func @transform_2(%arg0: i32) -> (i32, i32, i32) {
    %c0_i32 = arith.constant 0 : i32
    %c0_i32_0 = arith.constant 0 : i32
    %c0_i32_1 = arith.constant 0 : i32
    %c0_i32_2 = arith.constant 0 : i32
    return %c0_i32, %c0_i32_0, %c0_i32_1 : i32, i32, i32
  }
  func.func @transform_3(%arg0: i32) -> (i32, i32, i32) {
    %c0_i32 = arith.constant 0 : i32
    %c0_i32_0 = arith.constant 0 : i32
    %c0_i32_1 = arith.constant 0 : i32
    %c0_i32_2 = arith.constant 0 : i32
    return %c0_i32, %c0_i32_0, %c0_i32_1 : i32, i32, i32
  }
  func.func @transform_4(%arg0: i32) -> (i32, i32, i32, i32) {
    %c0_i32 = arith.constant 0 : i32
    %c0_i32_0 = arith.constant 0 : i32
    %c0_i32_1 = arith.constant 0 : i32
    %c0_i32_2 = arith.constant 0 : i32
    return %arg0, %c0_i32, %c0_i32_0, %c0_i32_1 : i32, i32, i32, i32
  }
}

module attributes {stable_mosaic.version = 11 : i64} {
  func.func @_bn_relu_conv_bias_kernel(%arg0: i32, %arg1: memref<1x16x16x128xf32, #tpu.memory_space<vmem>>, %arg2: memref<1x1x128xf32, #tpu.memory_space<vmem>>, %arg3: memref<1x1x128xf32, #tpu.memory_space<vmem>>, %arg4: memref<1152x128xbf16, #tpu.memory_space<vmem>>, %arg5: memref<1x1x128xf32, #tpu.memory_space<vmem>>, %arg6: memref<1x16x16x128xf32, #tpu.memory_space<vmem>>, %arg7: memref<1x2x128xf32, #tpu.memory_space<vmem>>) attributes {dimension_semantics = [#tpu.dimension_semantics<parallel>], iteration_bounds = array<i64: 2>, scalar_prefetch = 0 : i64, scratch_operands = 0 : i64, tpu.core_type = #tpu.core_type<tc>, window_params = [{transform_indices = @transform_0, window_bounds = array<i64: 1, 16, 16, 128>}, {pipeline_mode = #tpu.pipeline_mode<synchronous>, transform_indices = @transform_1, window_bounds = array<i64: 1, 1, 128>}, {pipeline_mode = #tpu.pipeline_mode<synchronous>, transform_indices = @transform_2, window_bounds = array<i64: 1, 1, 128>}, {pipeline_mode = #tpu.pipeline_mode<synchronous>, transform_indices = @transform_3, window_bounds = array<i64: 1152, 128>}, {pipeline_mode = #tpu.pipeline_mode<synchronous>, transform_indices = @transform_4, window_bounds = array<i64: 1, 1, 128>}, {transform_indices = @transform_5, window_bounds = array<i64: 1, 16, 16, 128>}, {transform_indices = @transform_6, window_bounds = array<i64: 1, 2, 128>}]} {
    %c0 = arith.constant 0 : index
    %c0_0 = arith.constant 0 : index
    %c0_1 = arith.constant 0 : index
    %c0_2 = arith.constant 0 : index
    %0 = vector.load %arg1[%c0, %c0_0, %c0_1, %c0_2] : memref<1x16x16x128xf32, #tpu.memory_space<vmem>>, vector<1x16x16x128xf32>
    %1 = vector.shape_cast %0 : vector<1x16x16x128xf32> to vector<16x16x128xf32>
    %c0_3 = arith.constant 0 : index
    %c0_4 = arith.constant 0 : index
    %c0_5 = arith.constant 0 : index
    %2 = vector.load %arg2[%c0_3, %c0_4, %c0_5] : memref<1x1x128xf32, #tpu.memory_space<vmem>>, vector<1x1x128xf32>
    %3 = vector.broadcast %2 : vector<1x1x128xf32> to vector<16x16x128xf32>
    %4 = arith.mulf %1, %3 : vector<16x16x128xf32>
    %c0_6 = arith.constant 0 : index
    %c0_7 = arith.constant 0 : index
    %c0_8 = arith.constant 0 : index
    %5 = vector.load %arg3[%c0_6, %c0_7, %c0_8] : memref<1x1x128xf32, #tpu.memory_space<vmem>>, vector<1x1x128xf32>
    %6 = vector.broadcast %5 : vector<1x1x128xf32> to vector<16x16x128xf32>
    %7 = arith.addf %4, %6 : vector<16x16x128xf32>
    %cst = arith.constant 0.000000e+00 : f32
    %8 = vector.broadcast %cst : f32 to vector<16x16x128xf32>
    %9 = arith.maximumf %7, %8 : vector<16x16x128xf32>
    %c0_9 = arith.constant 0 : index
    %c0_10 = arith.constant 0 : index
    %10 = vector.load %arg4[%c0_9, %c0_10] : memref<1152x128xbf16, #tpu.memory_space<vmem>>, vector<1152x128xbf16>
    %c0_11 = arith.constant 0 : index
    %c0_12 = arith.constant 0 : index
    %c0_13 = arith.constant 0 : index
    %11 = vector.load %arg5[%c0_11, %c0_12, %c0_13] : memref<1x1x128xf32, #tpu.memory_space<vmem>>, vector<1x1x128xf32>
    %12 = vector.shape_cast %11 : vector<1x1x128xf32> to vector<1x128xf32>
    %13 = arith.truncf %9 : vector<16x16x128xf32> to vector<16x16x128xbf16>
    %cst_14 = arith.constant 0.000000e+00 : bf16
    %14 = vector.broadcast %cst_14 : bf16 to vector<1x16x128xbf16>
    %cst_15 = arith.constant 0.000000e+00 : bf16
    %15 = vector.broadcast %cst_15 : bf16 to vector<18x1x128xbf16>
    %16 = tpu.concatenate %14, %13, %14 in 0 : vector<1x16x128xbf16>, vector<16x16x128xbf16>, vector<1x16x128xbf16> -> vector<18x16x128xbf16>
    %17 = tpu.concatenate %15, %16, %15 in 1 : vector<18x1x128xbf16>, vector<18x16x128xbf16>, vector<18x1x128xbf16> -> vector<18x18x128xbf16>
    %18 = vector.extract_strided_slice %17 {offsets = [0, 0, 0], sizes = [16, 16, 128], strides = [1, 1, 1]} : vector<18x18x128xbf16> to vector<16x16x128xbf16>
    %19 = vector.extract_strided_slice %17 {offsets = [0, 1, 0], sizes = [16, 16, 128], strides = [1, 1, 1]} : vector<18x18x128xbf16> to vector<16x16x128xbf16>
    %20 = vector.extract_strided_slice %17 {offsets = [0, 2, 0], sizes = [16, 16, 128], strides = [1, 1, 1]} : vector<18x18x128xbf16> to vector<16x16x128xbf16>
    %21 = vector.extract_strided_slice %17 {offsets = [1, 0, 0], sizes = [16, 16, 128], strides = [1, 1, 1]} : vector<18x18x128xbf16> to vector<16x16x128xbf16>
    %22 = vector.extract_strided_slice %17 {offsets = [1, 1, 0], sizes = [16, 16, 128], strides = [1, 1, 1]} : vector<18x18x128xbf16> to vector<16x16x128xbf16>
    %23 = vector.extract_strided_slice %17 {offsets = [1, 2, 0], sizes = [16, 16, 128], strides = [1, 1, 1]} : vector<18x18x128xbf16> to vector<16x16x128xbf16>
    %24 = vector.extract_strided_slice %17 {offsets = [2, 0, 0], sizes = [16, 16, 128], strides = [1, 1, 1]} : vector<18x18x128xbf16> to vector<16x16x128xbf16>
    %25 = vector.extract_strided_slice %17 {offsets = [2, 1, 0], sizes = [16, 16, 128], strides = [1, 1, 1]} : vector<18x18x128xbf16> to vector<16x16x128xbf16>
    %26 = vector.extract_strided_slice %17 {offsets = [2, 2, 0], sizes = [16, 16, 128], strides = [1, 1, 1]} : vector<18x18x128xbf16> to vector<16x16x128xbf16>
    %27 = tpu.concatenate %18, %19, %20, %21, %22, %23, %24, %25, %26 in 2 : vector<16x16x128xbf16>, vector<16x16x128xbf16>, vector<16x16x128xbf16>, vector<16x16x128xbf16>, vector<16x16x128xbf16>, vector<16x16x128xbf16>, vector<16x16x128xbf16>, vector<16x16x128xbf16>, vector<16x16x128xbf16> -> vector<16x16x1152xbf16>
    %28 = vector.shape_cast %27 : vector<16x16x1152xbf16> to vector<256x1152xbf16>
    %cst_16 = arith.constant dense<0.000000e+00> : vector<256x128xf32>
    %29 = tpu.matmul %28, %10, %cst_16 {dimension_numbers = #tpu.dot_dimension_numbers<[1], [0], [0], [1], [0, 0, 1, 1], [], []>} : vector<256x1152xbf16>, vector<1152x128xbf16>, vector<256x128xf32> -> vector<256x128xf32>
    %30 = vector.broadcast %12 : vector<1x128xf32> to vector<256x128xf32>
    %31 = arith.addf %29, %30 : vector<256x128xf32>
    %32 = vector.shape_cast %31 : vector<256x128xf32> to vector<16x16x128xf32>
    %c0_17 = arith.constant 0 : index
    %c0_18 = arith.constant 0 : index
    %c0_19 = arith.constant 0 : index
    %c0_20 = arith.constant 0 : index
    %33 = vector.load %arg6[%c0_17, %c0_18, %c0_19, %c0_20] : memref<1x16x16x128xf32, #tpu.memory_space<vmem>>, vector<1x16x16x128xf32>
    %34 = vector.shape_cast %33 : vector<1x16x16x128xf32> to vector<16x16x128xf32>
    %35 = vector.shape_cast %32 : vector<16x16x128xf32> to vector<1x16x16x128xf32>
    tpu.vector_store %arg6[%c0_17, %c0_18, %c0_19, %c0_20], %35 {strides = array<i32>} : memref<1x16x16x128xf32, #tpu.memory_space<vmem>>, vector<1x16x16x128xf32>,
    %cst_21 = arith.constant dense<0.000000e+00> : vector<128xf32>
    %36 = vector.multi_reduction <add>, %31, %cst_21 [0] : vector<256x128xf32> to vector<128xf32>
    %37 = vector.shape_cast %36 : vector<128xf32> to vector<1x128xf32>
    %38 = arith.mulf %31, %31 : vector<256x128xf32>
    %cst_22 = arith.constant dense<0.000000e+00> : vector<128xf32>
    %39 = vector.multi_reduction <add>, %38, %cst_22 [0] : vector<256x128xf32> to vector<128xf32>
    %40 = vector.shape_cast %39 : vector<128xf32> to vector<1x128xf32>
    %41 = tpu.concatenate %37, %40 in 0 : vector<1x128xf32>, vector<1x128xf32> -> vector<2x128xf32>
    %c0_23 = arith.constant 0 : index
    %c0_24 = arith.constant 0 : index
    %c0_25 = arith.constant 0 : index
    %42 = vector.load %arg7[%c0_23, %c0_24, %c0_25] : memref<1x2x128xf32, #tpu.memory_space<vmem>>, vector<1x2x128xf32>
    %43 = vector.shape_cast %42 : vector<1x2x128xf32> to vector<2x128xf32>
    %44 = vector.shape_cast %41 : vector<2x128xf32> to vector<1x2x128xf32>
    tpu.vector_store %arg7[%c0_23, %c0_24, %c0_25], %44 {strides = array<i32>} : memref<1x2x128xf32, #tpu.memory_space<vmem>>, vector<1x2x128xf32>,
    return
  }
  func.func @transform_0(%arg0: i32) -> (i32, i32, i32, i32) {
    %c0_i32 = arith.constant 0 : i32
    %c0_i32_0 = arith.constant 0 : i32
    %c0_i32_1 = arith.constant 0 : i32
    %c0_i32_2 = arith.constant 0 : i32
    return %arg0, %c0_i32, %c0_i32_0, %c0_i32_1 : i32, i32, i32, i32
  }
  func.func @transform_1(%arg0: i32) -> (i32, i32, i32) {
    %c0_i32 = arith.constant 0 : i32
    %c0_i32_0 = arith.constant 0 : i32
    %c0_i32_1 = arith.constant 0 : i32
    %c0_i32_2 = arith.constant 0 : i32
    return %c0_i32, %c0_i32_0, %c0_i32_1 : i32, i32, i32
  }
  func.func @transform_2(%arg0: i32) -> (i32, i32, i32) {
    %c0_i32 = arith.constant 0 : i32
    %c0_i32_0 = arith.constant 0 : i32
    %c0_i32_1 = arith.constant 0 : i32
    %c0_i32_2 = arith.constant 0 : i32
    return %c0_i32, %c0_i32_0, %c0_i32_1 : i32, i32, i32
  }
  func.func @transform_3(%arg0: i32) -> (i32, i32) {
    %c0_i32 = arith.constant 0 : i32
    %c0_i32_0 = arith.constant 0 : i32
    %c0_i32_1 = arith.constant 0 : i32
    return %c0_i32, %c0_i32_0 : i32, i32
  }
  func.func @transform_4(%arg0: i32) -> (i32, i32, i32) {
    %c0_i32 = arith.constant 0 : i32
    %c0_i32_0 = arith.constant 0 : i32
    %c0_i32_1 = arith.constant 0 : i32
    %c0_i32_2 = arith.constant 0 : i32
    return %c0_i32, %c0_i32_0, %c0_i32_1 : i32, i32, i32
  }
  func.func @transform_5(%arg0: i32) -> (i32, i32, i32, i32) {
    %c0_i32 = arith.constant 0 : i32
    %c0_i32_0 = arith.constant 0 : i32
    %c0_i32_1 = arith.constant 0 : i32
    %c0_i32_2 = arith.constant 0 : i32
    return %arg0, %c0_i32, %c0_i32_0, %c0_i32_1 : i32, i32, i32, i32
  }
  func.func @transform_6(%arg0: i32) -> (i32, i32, i32) {
    %c0_i32 = arith.constant 0 : i32
    %c0_i32_0 = arith.constant 0 : i32
    %c0_i32_1 = arith.constant 0 : i32
    return %arg0, %c0_i32, %c0_i32_0 : i32, i32, i32
  }
}

</mosaic_0001>

<llo_original>
// kernel: basic_block_pallas.5
$region0: #{basic_block_pallas.5}
  #allocation0 [shape = 'u32[]', space=smem, size = 0x4, offset = 0x4, fixed_abs, tag = 'smem constant byte address 0x4 - core index']
  #allocation1 [shape = 'u32[72,128]{1,0:T(1,128)}', space=vmem, size = 0x9000, scoped, tag = 'internal scratch']
  %s0 = inlined_call_operand.vmem [shape: f32[2,16,16,128], index: 0, kind: input, shape index: {}]
  %s1 = inlined_call_operand.vmem [shape: f32[2,16,16,128], index: 1, kind: input, shape index: {}]
  %s2 = inlined_call_operand.vmem [shape: f32[1,1,128], index: 2, kind: input, shape index: {}]
  %s3 = inlined_call_operand.vmem [shape: f32[1,1,128], index: 3, kind: input, shape index: {}]
  %s4 = inlined_call_operand.vmem [shape: f32[2,16,16,128], index: 4, kind: output, shape index: {}]
  %s5 = sld [smem:[#allocation0]]
  $region49: #{basic_block_pallas.5} parent=0
    _
  %s7 = ssub.s32 1, %s5
  %s8 = scalar_select 0, %s7, %s5
  loop: start=0, step=1, limit=4
  $region2: #{basic_block_pallas.5} parent=0 // loop_pre_header
    _
  $region3: #{basic_block_pallas.5} parent=0 // loop_header
    %s10 = sphi 0, %s14
    %p11 = scmp.ge.s32.totalorder %s10, 4
    %s20 = sphi 0, %s22
    %s23 = sphi 0, %s20
    %s24 = sphi 0, %s23
    %s40 = sphi 0, %s24
    %s46 = sphi 0, %s48
    %s49 = sphi 0, %s46
    %s50 = sphi 0, %s49
    %s66 = sphi 0, %s50
    %s70 = sphi 0, %s70
    %s72 = sphi 0, %s70
    %s73 = sphi 0, %s72
    %s87 = sphi 0, %s73
    %s91 = sphi 0, %s91
    %s93 = sphi 0, %s91
    %s94 = sphi 0, %s93
    %s108 = sphi 0, %s94
    %s114 = sphi 0, %s116
    %s117 = sphi 0, %s114
    %s118 = sphi 0, %s117
    %s134 = sphi 0, %s118
  $region4: #{basic_block_pallas.5} parent=0 // loop_header_branch
    %13 = sbr.rel (%p11) target = $region8
  $region5: #{basic_block_pallas.5} parent=0 // loop_body
    %s15 = ssub.s32 %s10, 1
    %s16 = ssub.s32 %s10, 2
    %s17 = sadd.s32 %s10, 1
    %s18 = ssub.s32 %s10, %s17
    %p19 = scmp.eq.s32.totalorder %s18, 0
    %s21 = sadd.s32 %s20, 1
    %s22 = scalar_select %p19, %s20, %s21
    %p25 = pneg %p19
    %p26 = scmp.eq.s32.totalorder %s10, 1
    %p27 = por %p25, %p26
    %p28 = scmp.ne.s32.totalorder %s20, %s23
    %p29 = scmp.eq.s32.totalorder %s10, 0
    %p30 = por %p28, %p29
    %p31 = scmp.ne.s32.totalorder %s20, %s23
    %p32 = scmp.eq.s32.totalorder %s15, 1
    %p33 = por %p31, %p32
    %p34 = scmp.ne.s32.totalorder %s23, %s24
    %p35 = scmp.eq.s32.totalorder %s15, 0
    %p36 = por %p34, %p35
    %p37 = scmp.ne.s32.totalorder %s23, %s24
    %p38 = scmp.eq.s32.totalorder %s16, 1
    %p39 = por %p37, %p38
    %p41 = scmp.ne.s32.totalorder %s24, %s40
    %p42 = scmp.eq.s32.totalorder %s16, 0
    %p43 = por %p41, %p42
    %s44 = ssub.s32 %s10, %s17
    %p45 = scmp.eq.s32.totalorder %s44, 0
    %s47 = sadd.s32 %s46, 1
    %s48 = scalar_select %p45, %s46, %s47
    %p51 = pneg %p45
    %p52 = scmp.eq.s32.totalorder %s10, 1
    %p53 = por %p51, %p52
    %p54 = scmp.ne.s32.totalorder %s46, %s49
    %p55 = scmp.eq.s32.totalorder %s10, 0
    %p56 = por %p54, %p55
    %p57 = scmp.ne.s32.totalorder %s46, %s49
    %p58 = scmp.eq.s32.totalorder %s15, 1
    %p59 = por %p57, %p58
    %p60 = scmp.ne.s32.totalorder %s49, %s50
    %p61 = scmp.eq.s32.totalorder %s15, 0
    %p62 = por %p60, %p61
    %p63 = scmp.ne.s32.totalorder %s49, %s50
    %p64 = scmp.eq.s32.totalorder %s16, 1
    %p65 = por %p63, %p64
    %p67 = scmp.ne.s32.totalorder %s50, %s66
    %p68 = scmp.eq.s32.totalorder %s16, 0
    %p69 = por %p67, %p68
    %s71 = sadd.s32 %s70, 1
    %p74 = scmp.eq.s32.totalorder %s10, 1
    %p75 = scmp.ne.s32.totalorder %s70, %s72
    %p76 = scmp.eq.s32.totalorder %s10, 0
    %p77 = por %p75, %p76
    %p78 = scmp.ne.s32.totalorder %s70, %s72
    %p79 = scmp.eq.s32.totalorder %s15, 1
    %p80 = por %p78, %p79
    %p81 = scmp.ne.s32.totalorder %s72, %s73
    %p82 = scmp.eq.s32.totalorder %s15, 0
    %p83 = por %p81, %p82
    %p84 = scmp.ne.s32.totalorder %s72, %s73
    %p85 = scmp.eq.s32.totalorder %s16, 1
    %p86 = por %p84, %p85
    %p88 = scmp.ne.s32.totalorder %s73, %s87
    %p89 = scmp.eq.s32.totalorder %s16, 0
    %p90 = por %p88, %p89
    %s92 = sadd.s32 %s91, 1
    %p95 = scmp.eq.s32.totalorder %s10, 1
    %p96 = scmp.ne.s32.totalorder %s91, %s93
    %p97 = scmp.eq.s32.totalorder %s10, 0
    %p98 = por %p96, %p97
    %p99 = scmp.ne.s32.totalorder %s91, %s93
    %p100 = scmp.eq.s32.totalorder %s15, 1
    %p101 = por %p99, %p100
    %p102 = scmp.ne.s32.totalorder %s93, %s94
    %p103 = scmp.eq.s32.totalorder %s15, 0
    %p104 = por %p102, %p103
    %p105 = scmp.ne.s32.totalorder %s93, %s94
    %p106 = scmp.eq.s32.totalorder %s16, 1
    %p107 = por %p105, %p106
    %p109 = scmp.ne.s32.totalorder %s94, %s108
    %p110 = scmp.eq.s32.totalorder %s16, 0
    %p111 = por %p109, %p110
    %s112 = ssub.s32 %s10, %s17
    %p113 = scmp.eq.s32.totalorder %s112, 0
    %s115 = sadd.s32 %s114, 1
    %s116 = scalar_select %p113, %s114, %s115
    %p119 = pneg %p113
    %p120 = scmp.eq.s32.totalorder %s10, 1
    %p121 = por %p119, %p120
    %p122 = scmp.ne.s32.totalorder %s114, %s117
    %p123 = scmp.eq.s32.totalorder %s10, 0
    %p124 = por %p122, %p123
    %p125 = scmp.ne.s32.totalorder %s114, %s117
    %p126 = scmp.eq.s32.totalorder %s15, 1
    %p127 = por %p125, %p126
    %p128 = scmp.ne.s32.totalorder %s117, %s118
    %p129 = scmp.eq.s32.totalorder %s15, 0
    %p130 = por %p128, %p129
    %p131 = scmp.ne.s32.totalorder %s117, %s118
    %p132 = scmp.eq.s32.totalorder %s16, 1
    %p133 = por %p131, %p132
    %p135 = scmp.ne.s32.totalorder %s118, %s134
    %p136 = scmp.eq.s32.totalorder %s16, 0
    %p137 = por %p135, %p136
    %p138 = scmp.le.s32.totalorder 1, %s10
    %p139 = scmp.lt.s32.totalorder %s10, 3
    %p140 = pnand %p138, %p139
    %p141 = pneg %p140
    // Predicated region
    $region9: #{basic_block_pallas.5} parent=5 // pred_check
      _
    $region10: #{basic_block_pallas.5} parent=5 // pred_check_branch
      %143 = sbr.rel (%p140) target = $region12
    $region11: #{basic_block_pallas.5} parent=5 // pred_region
      %s144 = ssub.s32 %s10, 1
      // Predicated region
      $region13: #{basic_block_pallas.5} parent=11 // pred_check
        %p145 = pneg %p83
      $region14: #{basic_block_pallas.5} parent=11 // pred_check_branch
        %147 = sbr.rel (%p145) target = $region16
      $region15: #{basic_block_pallas.5} parent=11 // pred_region
        _
      $region16: #{basic_block_pallas.5} parent=11 // pred_fallthru
        _
      // Predicated region
      $region17: #{basic_block_pallas.5} parent=11 // pred_check
        %p148 = pneg %p104
      $region18: #{basic_block_pallas.5} parent=11 // pred_check_branch
        %150 = sbr.rel (%p148) target = $region20
      $region19: #{basic_block_pallas.5} parent=11 // pred_region
        _
      $region20: #{basic_block_pallas.5} parent=11 // pred_fallthru
        _
    $region12: #{basic_block_pallas.5} parent=5 // pred_fallthru
      _
    %p151 = scmp.lt.s32.totalorder %s10, 2
    // Predicated region
    $region21: #{basic_block_pallas.5} parent=5 // pred_check
      %p152 = pneg %p151
    $region22: #{basic_block_pallas.5} parent=5 // pred_check_branch
      %154 = sbr.rel (%p152) target = $region24
    $region23: #{basic_block_pallas.5} parent=5 // pred_region
      // Predicated region
      $region25: #{basic_block_pallas.5} parent=23 // pred_check
        %p155 = pneg %p30
      $region26: #{basic_block_pallas.5} parent=23 // pred_check_branch
        %157 = sbr.rel (%p155) target = $region28
      $region27: #{basic_block_pallas.5} parent=23 // pred_region
        %p158 = scmp.lt.s32.totalorder %s10, 1
        %s159 = scalar_select %p158, %s10, 1
        %s160 = smul.addr %s159, 32
        %s161 = smul.addr %s160, 8
        %s162 = scalar_lea.vmem %s0, %s161
      $region28: #{basic_block_pallas.5} parent=23 // pred_fallthru
        _
      // Predicated region
      $region29: #{basic_block_pallas.5} parent=23 // pred_check
        %p163 = pneg %p56
      $region30: #{basic_block_pallas.5} parent=23 // pred_check_branch
        %165 = sbr.rel (%p163) target = $region32
      $region31: #{basic_block_pallas.5} parent=23 // pred_region
        %p166 = scmp.lt.s32.totalorder %s10, 1
        %s167 = scalar_select %p166, %s10, 1
        %s168 = smul.addr %s167, 32
        %s169 = smul.addr %s168, 8
        %s170 = scalar_lea.vmem %s1, %s169
      $region32: #{basic_block_pallas.5} parent=23 // pred_fallthru
        _
    $region24: #{basic_block_pallas.5} parent=5 // pred_fallthru
      _
    %p171 = scmp.le.s32.totalorder 1, %s10
    %p172 = scmp.lt.s32.totalorder %s10, 3
    %p173 = pnand %p171, %p172
    %p174 = pneg %p173
    // Predicated region
    $region33: #{basic_block_pallas.5} parent=5 // pred_check
      _
    $region34: #{basic_block_pallas.5} parent=5 // pred_check_branch
      %176 = sbr.rel (%p173) target = $region36
    $region35: #{basic_block_pallas.5} parent=5 // pred_region
      %s177 = ssub.s32 %s10, 1
      %p178 = scmp.lt.s32.totalorder %s15, 1
      %s179 = scalar_select %p178, %s15, 1
      %s180 = smul.addr %s179, 32
      %s181 = smul.addr %s180, 8
      %s182 = scalar_lea.vmem %s0, %s181
      %p183 = pneg %p36
      %p184 = pneg %p33
      %p185 = scmp.lt.s32.totalorder %s15, 1
      %s186 = scalar_select %p185, %s15, 1
      %s187 = smul.addr %s186, 32
      %s188 = smul.addr %s187, 8
      %s189 = scalar_lea.vmem %s1, %s188
      %p190 = pneg %p62
      %p191 = pneg %p59
      %p192 = pneg %p83
      %p193 = pneg %p80
      %p194 = pneg %p104
      %p195 = pneg %p101
      %p196 = pneg %p130
      %p197 = pneg %p127
      %p198 = scmp.lt.s32.totalorder %s15, 1
      %s199 = scalar_select %p198, %s15, 1
      %s200 = smul.addr %s199, 32
      %s201 = smul.addr %s200, 8
      %s202 = scalar_lea.vmem %s4, %s201
      %p203 = scmp.lt.s32.totalorder %s15, 1
      %s204 = scalar_select %p203, %s15, 1
      %s205 = smul.addr %s204, 32
      %s206 = smul.addr %s205, 8
      %s207 = scalar_lea.vmem %s0, %s206
      %p208 = scmp.lt.s32.totalorder %s15, 1
      %s209 = scalar_select %p208, %s15, 1
      %s210 = smul.addr %s209, 32
      %s211 = smul.addr %s210, 8
      %s212 = scalar_lea.vmem %s1, %s211
      %p213 = scmp.lt.s32.totalorder %s15, 1
      %s214 = scalar_select %p213, %s15, 1
      %s215 = smul.addr %s214, 32
      %s216 = smul.addr %s215, 8
      %s217 = scalar_lea.vmem %s4, %s216
      %v218 = vld [vmem:[%s207] sm:$0xff]
      %v219 = vld [vmem:[%s207 + $0x8] sm:$0xff]
      %v220 = vld [vmem:[%s207 + $0x10] sm:$0xff]
      %v221 = vld [vmem:[%s207 + $0x18] sm:$0xff]
      %v222 = vld [vmem:[%s207 + $0x20] sm:$0xff]
      %v223 = vld [vmem:[%s207 + $0x28] sm:$0xff]
      %v224 = vld [vmem:[%s207 + $0x30] sm:$0xff]
      %v225 = vld [vmem:[%s207 + $0x38] sm:$0xff]
      %v226 = vld [vmem:[%s207 + $0x40] sm:$0xff]
      %v227 = vld [vmem:[%s207 + $0x48] sm:$0xff]
      %v228 = vld [vmem:[%s207 + $0x50] sm:$0xff]
      %v229 = vld [vmem:[%s207 + $0x58] sm:$0xff]
      %v230 = vld [vmem:[%s207 + $0x60] sm:$0xff]
      %v231 = vld [vmem:[%s207 + $0x68] sm:$0xff]
      %v232 = vld [vmem:[%s207 + $0x70] sm:$0xff]
      %v233 = vld [vmem:[%s207 + $0x78] sm:$0xff]
      %v234 = vld [vmem:[%s207 + $0x80] sm:$0xff]
      %v235 = vld [vmem:[%s207 + $0x88] sm:$0xff]
      %v236 = vld [vmem:[%s207 + $0x90] sm:$0xff]
      %v237 = vld [vmem:[%s207 + $0x98] sm:$0xff]
      %v238 = vld [vmem:[%s207 + $0xa0] sm:$0xff]
      %v239 = vld [vmem:[%s207 + $0xa8] sm:$0xff]
      %v240 = vld [vmem:[%s207 + $0xb0] sm:$0xff]
      %v241 = vld [vmem:[%s207 + $0xb8] sm:$0xff]
      %v242 = vld [vmem:[%s207 + $0xc0] sm:$0xff]
      %v243 = vld [vmem:[%s207 + $0xc8] sm:$0xff]
      %v244 = vld [vmem:[%s207 + $0xd0] sm:$0xff]
      %v245 = vld [vmem:[%s207 + $0xd8] sm:$0xff]
      %v246 = vld [vmem:[%s207 + $0xe0] sm:$0xff]
      %v247 = vld [vmem:[%s207 + $0xe8] sm:$0xff]
      %v248 = vld [vmem:[%s207 + $0xf0] sm:$0xff]
      %v249 = vld [vmem:[%s207 + $0xf8] sm:$0xff]
      %v250 = vld [vmem:[%s2] sm:$0x1]
      %v252 = vperm.slane %v250, 0
      %v254 = vmul.f32 %v218, %v252
      %v255 = vmul.f32 %v219, %v252
      %v256 = vmul.f32 %v220, %v252
      %v257 = vmul.f32 %v221, %v252
      %v258 = vmul.f32 %v222, %v252
      %v259 = vmul.f32 %v223, %v252
      %v260 = vmul.f32 %v224, %v252
      %v261 = vmul.f32 %v225, %v252
      %v262 = vmul.f32 %v226, %v252
      %v263 = vmul.f32 %v227, %v252
      %v264 = vmul.f32 %v228, %v252
      %v265 = vmul.f32 %v229, %v252
      %v266 = vmul.f32 %v230, %v252
      %v267 = vmul.f32 %v231, %v252
      %v268 = vmul.f32 %v232, %v252
      %v269 = vmul.f32 %v233, %v252
      %v270 = vmul.f32 %v234, %v252
      %v271 = vmul.f32 %v235, %v252
      %v272 = vmul.f32 %v236, %v252
      %v273 = vmul.f32 %v237, %v252
      %v274 = vmul.f32 %v238, %v252
      %v275 = vmul.f32 %v239, %v252
      %v276 = vmul.f32 %v240, %v252
      %v277 = vmul.f32 %v241, %v252
      %v278 = vmul.f32 %v242, %v252
      %v279 = vmul.f32 %v243, %v252
      %v280 = vmul.f32 %v244, %v252
      %v281 = vmul.f32 %v245, %v252
      %v282 = vmul.f32 %v246, %v252
      %v283 = vmul.f32 %v247, %v252
      %v284 = vmul.f32 %v248, %v252
      %v285 = vmul.f32 %v249, %v252
      %v286 = vld [vmem:[%s3] sm:$0x1]
      %v288 = vperm.slane %v286, 0
      %v290 = vadd.f32 %v254, %v288
      %v291 = vadd.f32 %v255, %v288
      %v292 = vadd.f32 %v256, %v288
      %v293 = vadd.f32 %v257, %v288
      %v294 = vadd.f32 %v258, %v288
      %v295 = vadd.f32 %v259, %v288
      %v296 = vadd.f32 %v260, %v288
      %v297 = vadd.f32 %v261, %v288
      %v298 = vadd.f32 %v262, %v288
      %v299 = vadd.f32 %v263, %v288
      %v300 = vadd.f32 %v264, %v288
      %v301 = vadd.f32 %v265, %v288
      %v302 = vadd.f32 %v266, %v288
      %v303 = vadd.f32 %v267, %v288
      %v304 = vadd.f32 %v268, %v288
      %v305 = vadd.f32 %v269, %v288
      %v306 = vadd.f32 %v270, %v288
      %v307 = vadd.f32 %v271, %v288
      %v308 = vadd.f32 %v272, %v288
      %v309 = vadd.f32 %v273, %v288
      %v310 = vadd.f32 %v274, %v288
      %v311 = vadd.f32 %v275, %v288
      %v312 = vadd.f32 %v276, %v288
      %v313 = vadd.f32 %v277, %v288
      %v314 = vadd.f32 %v278, %v288
      %v315 = vadd.f32 %v279, %v288
      %v316 = vadd.f32 %v280, %v288
      %v317 = vadd.f32 %v281, %v288
      %v318 = vadd.f32 %v282, %v288
      %v319 = vadd.f32 %v283, %v288
      %v320 = vadd.f32 %v284, %v288
      %v321 = vadd.f32 %v285, %v288
      %v322 = vld [vmem:[%s212] sm:$0xff]
      %v323 = vld [vmem:[%s212 + $0x8] sm:$0xff]
      %v324 = vld [vmem:[%s212 + $0x10] sm:$0xff]
      %v325 = vld [vmem:[%s212 + $0x18] sm:$0xff]
      %v326 = vld [vmem:[%s212 + $0x20] sm:$0xff]
      %v327 = vld [vmem:[%s212 + $0x28] sm:$0xff]
      %v328 = vld [vmem:[%s212 + $0x30] sm:$0xff]
      %v329 = vld [vmem:[%s212 + $0x38] sm:$0xff]
      %v330 = vld [vmem:[%s212 + $0x40] sm:$0xff]
      %v331 = vld [vmem:[%s212 + $0x48] sm:$0xff]
      %v332 = vld [vmem:[%s212 + $0x50] sm:$0xff]
      %v333 = vld [vmem:[%s212 + $0x58] sm:$0xff]
      %v334 = vld [vmem:[%s212 + $0x60] sm:$0xff]
      %v335 = vld [vmem:[%s212 + $0x68] sm:$0xff]
      %v336 = vld [vmem:[%s212 + $0x70] sm:$0xff]
      %v337 = vld [vmem:[%s212 + $0x78] sm:$0xff]
      %v338 = vld [vmem:[%s212 + $0x80] sm:$0xff]
      %v339 = vld [vmem:[%s212 + $0x88] sm:$0xff]
      %v340 = vld [vmem:[%s212 + $0x90] sm:$0xff]
      %v341 = vld [vmem:[%s212 + $0x98] sm:$0xff]
      %v342 = vld [vmem:[%s212 + $0xa0] sm:$0xff]
      %v343 = vld [vmem:[%s212 + $0xa8] sm:$0xff]
      %v344 = vld [vmem:[%s212 + $0xb0] sm:$0xff]
      %v345 = vld [vmem:[%s212 + $0xb8] sm:$0xff]
      %v346 = vld [vmem:[%s212 + $0xc0] sm:$0xff]
      %v347 = vld [vmem:[%s212 + $0xc8] sm:$0xff]
      %v348 = vld [vmem:[%s212 + $0xd0] sm:$0xff]
      %v349 = vld [vmem:[%s212 + $0xd8] sm:$0xff]
      %v350 = vld [vmem:[%s212 + $0xe0] sm:$0xff]
      %v351 = vld [vmem:[%s212 + $0xe8] sm:$0xff]
      %v352 = vld [vmem:[%s212 + $0xf0] sm:$0xff]
      %v353 = vld [vmem:[%s212 + $0xf8] sm:$0xff]
      %v354 = vadd.f32 %v290, %v322
      %v355 = vadd.f32 %v291, %v323
      %v356 = vadd.f32 %v292, %v324
      %v357 = vadd.f32 %v293, %v325
      %v358 = vadd.f32 %v294, %v326
      %v359 = vadd.f32 %v295, %v327
      %v360 = vadd.f32 %v296, %v328
      %v361 = vadd.f32 %v297, %v329
      %v362 = vadd.f32 %v298, %v330
      %v363 = vadd.f32 %v299, %v331
      %v364 = vadd.f32 %v300, %v332
      %v365 = vadd.f32 %v301, %v333
      %v366 = vadd.f32 %v302, %v334
      %v367 = vadd.f32 %v303, %v335
      %v368 = vadd.f32 %v304, %v336
      %v369 = vadd.f32 %v305, %v337
      %v370 = vadd.f32 %v306, %v338
      %v371 = vadd.f32 %v307, %v339
      %v372 = vadd.f32 %v308, %v340
      %v373 = vadd.f32 %v309, %v341
      %v374 = vadd.f32 %v310, %v342
      %v375 = vadd.f32 %v311, %v343
      %v376 = vadd.f32 %v312, %v344
      %v377 = vadd.f32 %v313, %v345
      %v378 = vadd.f32 %v314, %v346
      %v379 = vadd.f32 %v315, %v347
      %v380 = vadd.f32 %v316, %v348
      %v381 = vadd.f32 %v317, %v349
      %v382 = vadd.f32 %v318, %v350
      %v383 = vadd.f32 %v319, %v351
      %v384 = vadd.f32 %v320, %v352
      %v385 = vadd.f32 %v321, %v353
      %v386 = vmax.f32 %v354, 0.0
      %v387 = vmax.f32 %v355, 0.0
      %v388 = vmax.f32 %v356, 0.0
      %v389 = vmax.f32 %v357, 0.0
      %v390 = vmax.f32 %v358, 0.0
      %v391 = vmax.f32 %v359, 0.0
      %v392 = vmax.f32 %v360, 0.0
      %v393 = vmax.f32 %v361, 0.0
      %v394 = vmax.f32 %v362, 0.0
      %v395 = vmax.f32 %v363, 0.0
      %v396 = vmax.f32 %v364, 0.0
      %v397 = vmax.f32 %v365, 0.0
      %v398 = vmax.f32 %v366, 0.0
      %v399 = vmax.f32 %v367, 0.0
      %v400 = vmax.f32 %v368, 0.0
      %v401 = vmax.f32 %v369, 0.0
      %v402 = vmax.f32 %v370, 0.0
      %v403 = vmax.f32 %v371, 0.0
      %v404 = vmax.f32 %v372, 0.0
      %v405 = vmax.f32 %v373, 0.0
      %v406 = vmax.f32 %v374, 0.0
      %v407 = vmax.f32 %v375, 0.0
      %v408 = vmax.f32 %v376, 0.0
      %v409 = vmax.f32 %v377, 0.0
      %v410 = vmax.f32 %v378, 0.0
      %v411 = vmax.f32 %v379, 0.0
      %v412 = vmax.f32 %v380, 0.0
      %v413 = vmax.f32 %v381, 0.0
      %v414 = vmax.f32 %v382, 0.0
      %v415 = vmax.f32 %v383, 0.0
      %v416 = vmax.f32 %v384, 0.0
      %v417 = vmax.f32 %v385, 0.0
      %418 = vst [vmem:[%s217] sm:$0xff] %v386
      %419 = vst [vmem:[%s217 + $0x8] sm:$0xff] %v387
      %420 = vst [vmem:[%s217 + $0x10] sm:$0xff] %v388
      %421 = vst [vmem:[%s217 + $0x18] sm:$0xff] %v389
      %422 = vst [vmem:[%s217 + $0x20] sm:$0xff] %v390
      %423 = vst [vmem:[%s217 + $0x28] sm:$0xff] %v391
      %424 = vst [vmem:[%s217 + $0x30] sm:$0xff] %v392
      %425 = vst [vmem:[%s217 + $0x38] sm:$0xff] %v393
      %426 = vst [vmem:[%s217 + $0x40] sm:$0xff] %v394
      %427 = vst [vmem:[%s217 + $0x48] sm:$0xff] %v395
      %428 = vst [vmem:[%s217 + $0x50] sm:$0xff] %v396
      %429 = vst [vmem:[%s217 + $0x58] sm:$0xff] %v397
      %430 = vst [vmem:[%s217 + $0x60] sm:$0xff] %v398
      %431 = vst [vmem:[%s217 + $0x68] sm:$0xff] %v399
      %432 = vst [vmem:[%s217 + $0x70] sm:$0xff] %v400
      %433 = vst [vmem:[%s217 + $0x78] sm:$0xff] %v401
      %434 = vst [vmem:[%s217 + $0x80] sm:$0xff] %v402
      %435 = vst [vmem:[%s217 + $0x88] sm:$0xff] %v403
      %436 = vst [vmem:[%s217 + $0x90] sm:$0xff] %v404
      %437 = vst [vmem:[%s217 + $0x98] sm:$0xff] %v405
      %438 = vst [vmem:[%s217 + $0xa0] sm:$0xff] %v406
      %439 = vst [vmem:[%s217 + $0xa8] sm:$0xff] %v407
      %440 = vst [vmem:[%s217 + $0xb0] sm:$0xff] %v408
      %441 = vst [vmem:[%s217 + $0xb8] sm:$0xff] %v409
      %442 = vst [vmem:[%s217 + $0xc0] sm:$0xff] %v410
      %443 = vst [vmem:[%s217 + $0xc8] sm:$0xff] %v411
      %444 = vst [vmem:[%s217 + $0xd0] sm:$0xff] %v412
      %445 = vst [vmem:[%s217 + $0xd8] sm:$0xff] %v413
      %446 = vst [vmem:[%s217 + $0xe0] sm:$0xff] %v414
      %447 = vst [vmem:[%s217 + $0xe8] sm:$0xff] %v415
      %448 = vst [vmem:[%s217 + $0xf0] sm:$0xff] %v416
      %449 = vst [vmem:[%s217 + $0xf8] sm:$0xff] %v417
      %p450 = scmp.lt.s32.totalorder %s15, 1
      %s451 = scalar_select %p450, %s15, 1
      %s452 = smul.addr %s451, 32
      %s453 = smul.addr %s452, 8
      %s454 = scalar_lea.vmem %s4, %s453
      // Predicated region
      $region37: #{basic_block_pallas.5} parent=35 // pred_check
        %p455 = pneg %p127
      $region38: #{basic_block_pallas.5} parent=35 // pred_check_branch
        %457 = sbr.rel (%p455) target = $region40
      $region39: #{basic_block_pallas.5} parent=35 // pred_region
        _
      $region40: #{basic_block_pallas.5} parent=35 // pred_fallthru
        _
    $region36: #{basic_block_pallas.5} parent=5 // pred_fallthru
      _
    %p458 = scmp.le.s32.totalorder 2, %s10
    // Predicated region
    $region41: #{basic_block_pallas.5} parent=5 // pred_check
      %p459 = pneg %p458
    $region42: #{basic_block_pallas.5} parent=5 // pred_check_branch
      %461 = sbr.rel (%p459) target = $region44
    $region43: #{basic_block_pallas.5} parent=5 // pred_region
      %s462 = ssub.s32 %s10, 2
      // Predicated region
      $region45: #{basic_block_pallas.5} parent=43 // pred_check
        %p463 = pneg %p133
      $region46: #{basic_block_pallas.5} parent=43 // pred_check_branch
        %465 = sbr.rel (%p463) target = $region48
      $region47: #{basic_block_pallas.5} parent=43 // pred_region
        %p466 = scmp.lt.s32.totalorder %s16, 1
        %s467 = scalar_select %p466, %s16, 1
        %s468 = smul.addr %s467, 32
        %s469 = smul.addr %s468, 8
        %s470 = scalar_lea.vmem %s4, %s469
      $region48: #{basic_block_pallas.5} parent=43 // pred_fallthru
        _
    $region44: #{basic_block_pallas.5} parent=5 // pred_fallthru
      _
  $region6: #{basic_block_pallas.5} parent=0 // loop_footer
    %s14 = sadd.s32 1, %s10
  $region7: #{basic_block_pallas.5} parent=0 // loop_footer_branch
    %9 = sbr.rel target = $region3
  $region8: #{basic_block_pallas.5} parent=0 // loop_exit
    _

// kernel: basic_block_pallas.4
$region0: #{basic_block_pallas.4}
  #allocation0 [shape = 'u32[]', space=smem, size = 0x4, offset = 0x4, fixed_abs, tag = 'smem constant byte address 0x4 - core index']
  #allocation1 [shape = 'u32[72,128]{1,0:T(1,128)}', space=vmem, size = 0x9000, scoped, tag = 'internal scratch']
  %s0 = inlined_call_operand.vmem [shape: f32[2,16,16,128], index: 0, kind: input, shape index: {}]
  %s1 = inlined_call_operand.vmem [shape: f32[1,1,128], index: 1, kind: input, shape index: {}]
  %s2 = inlined_call_operand.vmem [shape: f32[1,1,128], index: 2, kind: input, shape index: {}]
  %s3 = inlined_call_operand.vmem [shape: bf16[1152,128], index: 3, kind: input, shape index: {}]
  %s4 = inlined_call_operand.vmem [shape: f32[1,1,128], index: 4, kind: input, shape index: {}]
  %s5 = inlined_call_operand.vmem [shape: f32[2,16,16,128], index: 5, kind: output, shape index: {0}]
  %s6 = inlined_call_operand.vmem [shape: f32[2,2,128], index: 6, kind: output, shape index: {1}]
  %7 = xla_tuple %s5, %s6
  %s8 = sld [smem:[#allocation0]]
  $region61: #{basic_block_pallas.4} parent=0
    _
  %s10 = ssub.s32 1, %s8
  %s11 = scalar_select 0, %s10, %s8
  loop: start=0, step=1, limit=4
  $region2: #{basic_block_pallas.4} parent=0 // loop_pre_header
    _
  $region3: #{basic_block_pallas.4} parent=0 // loop_header
    %s13 = sphi 0, %s17
    %p14 = scmp.ge.s32.totalorder %s13, 4
    %s23 = sphi 0, %s25
    %s26 = sphi 0, %s23
    %s27 = sphi 0, %s26
    %s43 = sphi 0, %s27
    %s47 = sphi 0, %s47
    %s49 = sphi 0, %s47
    %s50 = sphi 0, %s49
    %s64 = sphi 0, %s50
    %s68 = sphi 0, %s68
    %s70 = sphi 0, %s68
    %s71 = sphi 0, %s70
    %s85 = sphi 0, %s71
    %s89 = sphi 0, %s89
    %s91 = sphi 0, %s89
    %s92 = sphi 0, %s91
    %s106 = sphi 0, %s92
    %s110 = sphi 0, %s110
    %s112 = sphi 0, %s110
    %s113 = sphi 0, %s112
    %s127 = sphi 0, %s113
    %s133 = sphi 0, %s135
    %s136 = sphi 0, %s133
    %s137 = sphi 0, %s136
    %s153 = sphi 0, %s137
    %s159 = sphi 0, %s161
    %s162 = sphi 0, %s159
    %s163 = sphi 0, %s162
    %s179 = sphi 0, %s163
  $region4: #{basic_block_pallas.4} parent=0 // loop_header_branch
    %16 = sbr.rel (%p14) target = $region8
  $region5: #{basic_block_pallas.4} parent=0 // loop_body
    %s18 = ssub.s32 %s13, 1
    %s19 = ssub.s32 %s13, 2
    %s20 = sadd.s32 %s13, 1
    %s21 = ssub.s32 %s13, %s20
    %p22 = scmp.eq.s32.totalorder %s21, 0
    %s24 = sadd.s32 %s23, 1
    %s25 = scalar_select %p22, %s23, %s24
    %p28 = pneg %p22
    %p29 = scmp.eq.s32.totalorder %s13, 1
    %p30 = por %p28, %p29
    %p31 = scmp.ne.s32.totalorder %s23, %s26
    %p32 = scmp.eq.s32.totalorder %s13, 0
    %p33 = por %p31, %p32
    %p34 = scmp.ne.s32.totalorder %s23, %s26
    %p35 = scmp.eq.s32.totalorder %s18, 1
    %p36 = por %p34, %p35
    %p37 = scmp.ne.s32.totalorder %s26, %s27
    %p38 = scmp.eq.s32.totalorder %s18, 0
    %p39 = por %p37, %p38
    %p40 = scmp.ne.s32.totalorder %s26, %s27
    %p41 = scmp.eq.s32.totalorder %s19, 1
    %p42 = por %p40, %p41
    %p44 = scmp.ne.s32.totalorder %s27, %s43
    %p45 = scmp.eq.s32.totalorder %s19, 0
    %p46 = por %p44, %p45
    %s48 = sadd.s32 %s47, 1
    %p51 = scmp.eq.s32.totalorder %s13, 1
    %p52 = scmp.ne.s32.totalorder %s47, %s49
    %p53 = scmp.eq.s32.totalorder %s13, 0
    %p54 = por %p52, %p53
    %p55 = scmp.ne.s32.totalorder %s47, %s49
    %p56 = scmp.eq.s32.totalorder %s18, 1
    %p57 = por %p55, %p56
    %p58 = scmp.ne.s32.totalorder %s49, %s50
    %p59 = scmp.eq.s32.totalorder %s18, 0
    %p60 = por %p58, %p59
    %p61 = scmp.ne.s32.totalorder %s49, %s50
    %p62 = scmp.eq.s32.totalorder %s19, 1
    %p63 = por %p61, %p62
    %p65 = scmp.ne.s32.totalorder %s50, %s64
    %p66 = scmp.eq.s32.totalorder %s19, 0
    %p67 = por %p65, %p66
    %s69 = sadd.s32 %s68, 1
    %p72 = scmp.eq.s32.totalorder %s13, 1
    %p73 = scmp.ne.s32.totalorder %s68, %s70
    %p74 = scmp.eq.s32.totalorder %s13, 0
    %p75 = por %p73, %p74
    %p76 = scmp.ne.s32.totalorder %s68, %s70
    %p77 = scmp.eq.s32.totalorder %s18, 1
    %p78 = por %p76, %p77
    %p79 = scmp.ne.s32.totalorder %s70, %s71
    %p80 = scmp.eq.s32.totalorder %s18, 0
    %p81 = por %p79, %p80
    %p82 = scmp.ne.s32.totalorder %s70, %s71
    %p83 = scmp.eq.s32.totalorder %s19, 1
    %p84 = por %p82, %p83
    %p86 = scmp.ne.s32.totalorder %s71, %s85
    %p87 = scmp.eq.s32.totalorder %s19, 0
    %p88 = por %p86, %p87
    %s90 = sadd.s32 %s89, 1
    %p93 = scmp.eq.s32.totalorder %s13, 1
    %p94 = scmp.ne.s32.totalorder %s89, %s91
    %p95 = scmp.eq.s32.totalorder %s13, 0
    %p96 = por %p94, %p95
    %p97 = scmp.ne.s32.totalorder %s89, %s91
    %p98 = scmp.eq.s32.totalorder %s18, 1
    %p99 = por %p97, %p98
    %p100 = scmp.ne.s32.totalorder %s91, %s92
    %p101 = scmp.eq.s32.totalorder %s18, 0
    %p102 = por %p100, %p101
    %p103 = scmp.ne.s32.totalorder %s91, %s92
    %p104 = scmp.eq.s32.totalorder %s19, 1
    %p105 = por %p103, %p104
    %p107 = scmp.ne.s32.totalorder %s92, %s106
    %p108 = scmp.eq.s32.totalorder %s19, 0
    %p109 = por %p107, %p108
    %s111 = sadd.s32 %s110, 1
    %p114 = scmp.eq.s32.totalorder %s13, 1
    %p115 = scmp.ne.s32.totalorder %s110, %s112
    %p116 = scmp.eq.s32.totalorder %s13, 0
    %p117 = por %p115, %p116
    %p118 = scmp.ne.s32.totalorder %s110, %s112
    %p119 = scmp.eq.s32.totalorder %s18, 1
    %p120 = por %p118, %p119
    %p121 = scmp.ne.s32.totalorder %s112, %s113
    %p122 = scmp.eq.s32.totalorder %s18, 0
    %p123 = por %p121, %p122
    %p124 = scmp.ne.s32.totalorder %s112, %s113
    %p125 = scmp.eq.s32.totalorder %s19, 1
    %p126 = por %p124, %p125
    %p128 = scmp.ne.s32.totalorder %s113, %s127
    %p129 = scmp.eq.s32.totalorder %s19, 0
    %p130 = por %p128, %p129
    %s131 = ssub.s32 %s13, %s20
    %p132 = scmp.eq.s32.totalorder %s131, 0
    %s134 = sadd.s32 %s133, 1
    %s135 = scalar_select %p132, %s133, %s134
    %p138 = pneg %p132
    %p139 = scmp.eq.s32.totalorder %s13, 1
    %p140 = por %p138, %p139
    %p141 = scmp.ne.s32.totalorder %s133, %s136
    %p142 = scmp.eq.s32.totalorder %s13, 0
    %p143 = por %p141, %p142
    %p144 = scmp.ne.s32.totalorder %s133, %s136
    %p145 = scmp.eq.s32.totalorder %s18, 1
    %p146 = por %p144, %p145
    %p147 = scmp.ne.s32.totalorder %s136, %s137
    %p148 = scmp.eq.s32.totalorder %s18, 0
    %p149 = por %p147, %p148
    %p150 = scmp.ne.s32.totalorder %s136, %s137
    %p151 = scmp.eq.s32.totalorder %s19, 1
    %p152 = por %p150, %p151
    %p154 = scmp.ne.s32.totalorder %s137, %s153
    %p155 = scmp.eq.s32.totalorder %s19, 0
    %p156 = por %p154, %p155
    %s157 = ssub.s32 %s13, %s20
    %p158 = scmp.eq.s32.totalorder %s157, 0
    %s160 = sadd.s32 %s159, 1
    %s161 = scalar_select %p158, %s159, %s160
    %p164 = pneg %p158
    %p165 = scmp.eq.s32.totalorder %s13, 1
    %p166 = por %p164, %p165
    %p167 = scmp.ne.s32.totalorder %s159, %s162
    %p168 = scmp.eq.s32.totalorder %s13, 0
    %p169 = por %p167, %p168
    %p170 = scmp.ne.s32.totalorder %s159, %s162
    %p171 = scmp.eq.s32.totalorder %s18, 1
    %p172 = por %p170, %p171
    %p173 = scmp.ne.s32.totalorder %s162, %s163
    %p174 = scmp.eq.s32.totalorder %s18, 0
    %p175 = por %p173, %p174
    %p176 = scmp.ne.s32.totalorder %s162, %s163
    %p177 = scmp.eq.s32.totalorder %s19, 1
    %p178 = por %p176, %p177
    %p180 = scmp.ne.s32.totalorder %s163, %s179
    %p181 = scmp.eq.s32.totalorder %s19, 0
    %p182 = por %p180, %p181
    %p183 = scmp.le.s32.totalorder 1, %s13
    %p184 = scmp.lt.s32.totalorder %s13, 3
    %p185 = pnand %p183, %p184
    %p186 = pneg %p185
    // Predicated region
    $region9: #{basic_block_pallas.4} parent=5 // pred_check
      _
    $region10: #{basic_block_pallas.4} parent=5 // pred_check_branch
      %188 = sbr.rel (%p185) target = $region12
    $region11: #{basic_block_pallas.4} parent=5 // pred_region
      %s189 = ssub.s32 %s13, 1
      // Predicated region
      $region13: #{basic_block_pallas.4} parent=11 // pred_check
        %p190 = pneg %p60
      $region14: #{basic_block_pallas.4} parent=11 // pred_check_branch
        %192 = sbr.rel (%p190) target = $region16
      $region15: #{basic_block_pallas.4} parent=11 // pred_region
        _
      $region16: #{basic_block_pallas.4} parent=11 // pred_fallthru
        _
      // Predicated region
      $region17: #{basic_block_pallas.4} parent=11 // pred_check
        %p193 = pneg %p81
      $region18: #{basic_block_pallas.4} parent=11 // pred_check_branch
        %195 = sbr.rel (%p193) target = $region20
      $region19: #{basic_block_pallas.4} parent=11 // pred_region
        _
      $region20: #{basic_block_pallas.4} parent=11 // pred_fallthru
        _
      // Predicated region
      $region21: #{basic_block_pallas.4} parent=11 // pred_check
        %p196 = pneg %p102
      $region22: #{basic_block_pallas.4} parent=11 // pred_check_branch
        %198 = sbr.rel (%p196) target = $region24
      $region23: #{basic_block_pallas.4} parent=11 // pred_region
        _
      $region24: #{basic_block_pallas.4} parent=11 // pred_fallthru
        _
      // Predicated region
      $region25: #{basic_block_pallas.4} parent=11 // pred_check
        %p199 = pneg %p123
      $region26: #{basic_block_pallas.4} parent=11 // pred_check_branch
        %201 = sbr.rel (%p199) target = $region28
      $region27: #{basic_block_pallas.4} parent=11 // pred_region
        _
      $region28: #{basic_block_pallas.4} parent=11 // pred_fallthru
        _
    $region12: #{basic_block_pallas.4} parent=5 // pred_fallthru
      _
    %p202 = scmp.lt.s32.totalorder %s13, 2
    // Predicated region
    $region29: #{basic_block_pallas.4} parent=5 // pred_check
      %p203 = pneg %p202
    $region30: #{basic_block_pallas.4} parent=5 // pred_check_branch
      %205 = sbr.rel (%p203) target = $region32
    $region31: #{basic_block_pallas.4} parent=5 // pred_region
      // Predicated region
      $region33: #{basic_block_pallas.4} parent=31 // pred_check
        %p206 = pneg %p33
      $region34: #{basic_block_pallas.4} parent=31 // pred_check_branch
        %208 = sbr.rel (%p206) target = $region36
      $region35: #{basic_block_pallas.4} parent=31 // pred_region
        %p209 = scmp.lt.s32.totalorder %s13, 1
        %s210 = scalar_select %p209, %s13, 1
        %s211 = smul.addr %s210, 32
        %s212 = smul.addr %s211, 8
        %s213 = scalar_lea.vmem %s0, %s212
      $region36: #{basic_block_pallas.4} parent=31 // pred_fallthru
        _
    $region32: #{basic_block_pallas.4} parent=5 // pred_fallthru
      _
    %p214 = scmp.le.s32.totalorder 1, %s13
    %p215 = scmp.lt.s32.totalorder %s13, 3
    %p216 = pnand %p214, %p215
    %p217 = pneg %p216
    // Predicated region
    $region37: #{basic_block_pallas.4} parent=5 // pred_check
      _
    $region38: #{basic_block_pallas.4} parent=5 // pred_check_branch
      %219 = sbr.rel (%p216) target = $region40
    $region39: #{basic_block_pallas.4} parent=5 // pred_region
      %s220 = ssub.s32 %s13, 1
      %p221 = scmp.lt.s32.totalorder %s18, 1
      %s222 = scalar_select %p221, %s18, 1
      %s223 = smul.addr %s222, 32
      %s224 = smul.addr %s223, 8
      %s225 = scalar_lea.vmem %s0, %s224
      %p226 = pneg %p39
      %p227 = pneg %p36
      %p228 = pneg %p60
      %p229 = pneg %p57
      %p230 = pneg %p81
      %p231 = pneg %p78
      %p232 = pneg %p102
      %p233 = pneg %p99
      %p234 = pneg %p123
      %p235 = pneg %p120
      %p236 = pneg %p149
      %p237 = pneg %p146
      %p238 = scmp.lt.s32.totalorder %s18, 1
      %s239 = scalar_select %p238, %s18, 1
      %s240 = smul.addr %s239, 32
      %s241 = smul.addr %s240, 8
      %s242 = scalar_lea.vmem %s5, %s241
      %p243 = pneg %p175
      %p244 = pneg %p172
      %p245 = scmp.lt.s32.totalorder %s18, 1
      %s246 = scalar_select %p245, %s18, 1
      %s247 = smul.addr %s246, 2
      %s248 = scalar_lea.vmem %s6, %s247
      %p249 = scmp.lt.s32.totalorder %s18, 1
      %s250 = scalar_select %p249, %s18, 1
      %s251 = smul.addr %s250, 32
      %s252 = smul.addr %s251, 8
      %s253 = scalar_lea.vmem %s0, %s252
      %p254 = scmp.lt.s32.totalorder %s18, 1
      %s255 = scalar_select %p254, %s18, 1
      %s256 = smul.addr %s255, 32
      %s257 = smul.addr %s256, 8
      %s258 = scalar_lea.vmem %s5, %s257
      %p259 = scmp.lt.s32.totalorder %s18, 1
      %s260 = scalar_select %p259, %s18, 1
      %s261 = smul.addr %s260, 2
      %s262 = scalar_lea.vmem %s6, %s261
      %v264 = vld [vmem:[%s253] sm:$0xff]
      %v265 = vld [vmem:[%s253 + $0x8] sm:$0xff]
      %v266 = vld [vmem:[%s253 + $0x10] sm:$0xff]
      %v267 = vld [vmem:[%s253 + $0x18] sm:$0xff]
      %v268 = vld [vmem:[%s253 + $0x20] sm:$0xff]
      %v269 = vld [vmem:[%s253 + $0x28] sm:$0xff]
      %v270 = vld [vmem:[%s253 + $0x30] sm:$0xff]
      %v271 = vld [vmem:[%s253 + $0x38] sm:$0xff]
      %v272 = vld [vmem:[%s253 + $0x40] sm:$0xff]
      %v273 = vld [vmem:[%s253 + $0x48] sm:$0xff]
      %v274 = vld [vmem:[%s253 + $0x50] sm:$0xff]
      %v275 = vld [vmem:[%s253 + $0x58] sm:$0xff]
      %v276 = vld [vmem:[%s253 + $0x60] sm:$0xff]
      %v277 = vld [vmem:[%s253 + $0x68] sm:$0xff]
      %v278 = vld [vmem:[%s253 + $0x70] sm:$0xff]
      %v279 = vld [vmem:[%s253 + $0x78] sm:$0xff]
      %v280 = vld [vmem:[%s253 + $0x80] sm:$0xff]
      %v281 = vld [vmem:[%s253 + $0x88] sm:$0xff]
      %v282 = vld [vmem:[%s253 + $0x90] sm:$0xff]
      %v283 = vld [vmem:[%s253 + $0x98] sm:$0xff]
      %v284 = vld [vmem:[%s253 + $0xa0] sm:$0xff]
      %v285 = vld [vmem:[%s253 + $0xa8] sm:$0xff]
      %v286 = vld [vmem:[%s253 + $0xb0] sm:$0xff]
      %v287 = vld [vmem:[%s253 + $0xb8] sm:$0xff]
      %v288 = vld [vmem:[%s253 + $0xc0] sm:$0xff]
      %v289 = vld [vmem:[%s253 + $0xc8] sm:$0xff]
      %v290 = vld [vmem:[%s253 + $0xd0] sm:$0xff]
      %v291 = vld [vmem:[%s253 + $0xd8] sm:$0xff]
      %v292 = vld [vmem:[%s253 + $0xe0] sm:$0xff]
      %v293 = vld [vmem:[%s253 + $0xe8] sm:$0xff]
      %v294 = vld [vmem:[%s253 + $0xf0] sm:$0xff]
      %v295 = vld [vmem:[%s253 + $0xf8] sm:$0xff]
      %v296 = vld [vmem:[%s1] sm:$0x1]
      %v298 = vperm.slane %v296, 0
      %v300 = vmul.f32 %v264, %v298
      %v301 = vmul.f32 %v265, %v298
      %v302 = vmul.f32 %v266, %v298
      %v303 = vmul.f32 %v267, %v298
      %v304 = vmul.f32 %v268, %v298
      %v305 = vmul.f32 %v269, %v298
      %v306 = vmul.f32 %v270, %v298
      %v307 = vmul.f32 %v271, %v298
      %v308 = vmul.f32 %v272, %v298
      %v309 = vmul.f32 %v273, %v298
      %v310 = vmul.f32 %v274, %v298
      %v311 = vmul.f32 %v275, %v298
      %v312 = vmul.f32 %v276, %v298
      %v313 = vmul.f32 %v277, %v298
      %v314 = vmul.f32 %v278, %v298
      %v315 = vmul.f32 %v279, %v298
      %v316 = vmul.f32 %v280, %v298
      %v317 = vmul.f32 %v281, %v298
      %v318 = vmul.f32 %v282, %v298
      %v319 = vmul.f32 %v283, %v298
      %v320 = vmul.f32 %v284, %v298
      %v321 = vmul.f32 %v285, %v298
      %v322 = vmul.f32 %v286, %v298
      %v323 = vmul.f32 %v287, %v298
      %v324 = vmul.f32 %v288, %v298
      %v325 = vmul.f32 %v289, %v298
      %v326 = vmul.f32 %v290, %v298
      %v327 = vmul.f32 %v291, %v298
      %v328 = vmul.f32 %v292, %v298
      %v329 = vmul.f32 %v293, %v298
      %v330 = vmul.f32 %v294, %v298
      %v331 = vmul.f32 %v295, %v298
      %v332 = vld [vmem:[%s2] sm:$0x1]
      %v334 = vperm.slane %v332, 0
      %v336 = vadd.f32 %v300, %v334
      %v337 = vadd.f32 %v301, %v334
      %v338 = vadd.f32 %v302, %v334
      %v339 = vadd.f32 %v303, %v334
      %v340 = vadd.f32 %v304, %v334
      %v341 = vadd.f32 %v305, %v334
      %v342 = vadd.f32 %v306, %v334
      %v343 = vadd.f32 %v307, %v334
      %v344 = vadd.f32 %v308, %v334
      %v345 = vadd.f32 %v309, %v334
      %v346 = vadd.f32 %v310, %v334
      %v347 = vadd.f32 %v311, %v334
      %v348 = vadd.f32 %v312, %v334
      %v349 = vadd.f32 %v313, %v334
      %v350 = vadd.f32 %v314, %v334
      %v351 = vadd.f32 %v315, %v334
      %v352 = vadd.f32 %v316, %v334
      %v353 = vadd.f32 %v317, %v334
      %v354 = vadd.f32 %v318, %v334
      %v355 = vadd.f32 %v319, %v334
      %v356 = vadd.f32 %v320, %v334
      %v357 = vadd.f32 %v321, %v334
      %v358 = vadd.f32 %v322, %v334
      %v359 = vadd.f32 %v323, %v334
      %v360 = vadd.f32 %v324, %v334
      %v361 = vadd.f32 %v325, %v334
      %v362 = vadd.f32 %v326, %v334
      %v363 = vadd.f32 %v327, %v334
      %v364 = vadd.f32 %v328, %v334
      %v365 = vadd.f32 %v329, %v334
      %v366 = vadd.f32 %v330, %v334
      %v367 = vadd.f32 %v331, %v334
      %v368 = vmax.f32 %v336, 0.0
      %v369 = vmax.f32 %v337, 0.0
      %v370 = vmax.f32 %v338, 0.0
      %v371 = vmax.f32 %v339, 0.0
      %v372 = vmax.f32 %v340, 0.0
      %v373 = vmax.f32 %v341, 0.0
      %v374 = vmax.f32 %v342, 0.0
      %v375 = vmax.f32 %v343, 0.0
      %v376 = vmax.f32 %v344, 0.0
      %v377 = vmax.f32 %v345, 0.0
      %v378 = vmax.f32 %v346, 0.0
      %v379 = vmax.f32 %v347, 0.0
      %v380 = vmax.f32 %v348, 0.0
      %v381 = vmax.f32 %v349, 0.0
      %v382 = vmax.f32 %v350, 0.0
      %v383 = vmax.f32 %v351, 0.0
      %v384 = vmax.f32 %v352, 0.0
      %v385 = vmax.f32 %v353, 0.0
      %v386 = vmax.f32 %v354, 0.0
      %v387 = vmax.f32 %v355, 0.0
      %v388 = vmax.f32 %v356, 0.0
      %v389 = vmax.f32 %v357, 0.0
      %v390 = vmax.f32 %v358, 0.0
      %v391 = vmax.f32 %v359, 0.0
      %v392 = vmax.f32 %v360, 0.0
      %v393 = vmax.f32 %v361, 0.0
      %v394 = vmax.f32 %v362, 0.0
      %v395 = vmax.f32 %v363, 0.0
      %v396 = vmax.f32 %v364, 0.0
      %v397 = vmax.f32 %v365, 0.0
      %v398 = vmax.f32 %v366, 0.0
      %v399 = vmax.f32 %v367, 0.0
      %v400 = vld [vmem:[%s3] sm:$0xf]
      %v401 = vld [vmem:[%s3 + $0x4] sm:$0xf]
      %v402 = vld [vmem:[%s3 + $0x8] sm:$0xf]
      %v403 = vld [vmem:[%s3 + $0xc] sm:$0xf]
      %v404 = vld [vmem:[%s3 + $0x10] sm:$0xf]
      %v405 = vld [vmem:[%s3 + $0x14] sm:$0xf]
      %v406 = vld [vmem:[%s3 + $0x18] sm:$0xf]
      %v407 = vld [vmem:[%s3 + $0x1c] sm:$0xf]
      %v408 = vld [vmem:[%s3 + $0x20] sm:$0xf]
      %v409 = vld [vmem:[%s3 + $0x24] sm:$0xf]
      %v410 = vld [vmem:[%s3 + $0x28] sm:$0xf]
      %v411 = vld [vmem:[%s3 + $0x2c] sm:$0xf]
      %v412 = vld [vmem:[%s3 + $0x30] sm:$0xf]
      %v413 = vld [vmem:[%s3 + $0x34] sm:$0xf]
      %v414 = vld [vmem:[%s3 + $0x38] sm:$0xf]
      %v415 = vld [vmem:[%s3 + $0x3c] sm:$0xf]
      %v416 = vld [vmem:[%s3 + $0x40] sm:$0xf]
      %v417 = vld [vmem:[%s3 + $0x44] sm:$0xf]
      %v418 = vld [vmem:[%s3 + $0x48] sm:$0xf]
      %v419 = vld [vmem:[%s3 + $0x4c] sm:$0xf]
      %v420 = vld [vmem:[%s3 + $0x50] sm:$0xf]
      %v421 = vld [vmem:[%s3 + $0x54] sm:$0xf]
      %v422 = vld [vmem:[%s3 + $0x58] sm:$0xf]
      %v423 = vld [vmem:[%s3 + $0x5c] sm:$0xf]
      %v424 = vld [vmem:[%s3 + $0x60] sm:$0xf]
      %v425 = vld [vmem:[%s3 + $0x64] sm:$0xf]
      %v426 = vld [vmem:[%s3 + $0x68] sm:$0xf]
      %v427 = vld [vmem:[%s3 + $0x6c] sm:$0xf]
      %v428 = vld [vmem:[%s3 + $0x70] sm:$0xf]
      %v429 = vld [vmem:[%s3 + $0x74] sm:$0xf]
      %v430 = vld [vmem:[%s3 + $0x78] sm:$0xf]
      %v431 = vld [vmem:[%s3 + $0x7c] sm:$0xf]
      %v432 = vld [vmem:[%s3 + $0x80] sm:$0xf]
      %v433 = vld [vmem:[%s3 + $0x84] sm:$0xf]
      %v434 = vld [vmem:[%s3 + $0x88] sm:$0xf]
      %v435 = vld [vmem:[%s3 + $0x8c] sm:$0xf]
      %v436 = vld [vmem:[%s3 + $0x90] sm:$0xf]
      %v437 = vld [vmem:[%s3 + $0x94] sm:$0xf]
      %v438 = vld [vmem:[%s3 + $0x98] sm:$0xf]
      %v439 = vld [vmem:[%s3 + $0x9c] sm:$0xf]
      %v440 = vld [vmem:[%s3 + $0xa0] sm:$0xf]
      %v441 = vld [vmem:[%s3 + $0xa4] sm:$0xf]
      %v442 = vld [vmem:[%s3 + $0xa8] sm:$0xf]
      %v443 = vld [vmem:[%s3 + $0xac] sm:$0xf]
      %v444 = vld [vmem:[%s3 + $0xb0] sm:$0xf]
      %v445 = vld [vmem:[%s3 + $0xb4] sm:$0xf]
      %v446 = vld [vmem:[%s3 + $0xb8] sm:$0xf]
      %v447 = vld [vmem:[%s3 + $0xbc] sm:$0xf]
      %v448 = vld [vmem:[%s3 + $0xc0] sm:$0xf]
      %v449 = vld [vmem:[%s3 + $0xc4] sm:$0xf]
      %v450 = vld [vmem:[%s3 + $0xc8] sm:$0xf]
      %v451 = vld [vmem:[%s3 + $0xcc] sm:$0xf]
      %v452 = vld [vmem:[%s3 + $0xd0] sm:$0xf]
      %v453 = vld [vmem:[%s3 + $0xd4] sm:$0xf]
      %v454 = vld [vmem:[%s3 + $0xd8] sm:$0xf]
      %v455 = vld [vmem:[%s3 + $0xdc] sm:$0xf]
      %v456 = vld [vmem:[%s3 + $0xe0] sm:$0xf]
      %v457 = vld [vmem:[%s3 + $0xe4] sm:$0xf]
      %v458 = vld [vmem:[%s3 + $0xe8] sm:$0xf]
      %v459 = vld [vmem:[%s3 + $0xec] sm:$0xf]
      %v460 = vld [vmem:[%s3 + $0xf0] sm:$0xf]
      %v461 = vld [vmem:[%s3 + $0xf4] sm:$0xf]
      %v462 = vld [vmem:[%s3 + $0xf8] sm:$0xf]
      %v463 = vld [vmem:[%s3 + $0xfc] sm:$0xf]
      %v464 = vld [vmem:[%s3 + $0x100] sm:$0xf]
      %v465 = vld [vmem:[%s3 + $0x104] sm:$0xf]
      %v466 = vld [vmem:[%s3 + $0x108] sm:$0xf]
      %v467 = vld [vmem:[%s3 + $0x10c] sm:$0xf]
      %v468 = vld [vmem:[%s3 + $0x110] sm:$0xf]
      %v469 = vld [vmem:[%s3 + $0x114] sm:$0xf]
      %v470 = vld [vmem:[%s3 + $0x118] sm:$0xf]
      %v471 = vld [vmem:[%s3 + $0x11c] sm:$0xf]
      %v472 = vld [vmem:[%s3 + $0x120] sm:$0xf]
      %v473 = vld [vmem:[%s3 + $0x124] sm:$0xf]
      %v474 = vld [vmem:[%s3 + $0x128] sm:$0xf]
      %v475 = vld [vmem:[%s3 + $0x12c] sm:$0xf]
      %v476 = vld [vmem:[%s3 + $0x130] sm:$0xf]
      %v477 = vld [vmem:[%s3 + $0x134] sm:$0xf]
      %v478 = vld [vmem:[%s3 + $0x138] sm:$0xf]
      %v479 = vld [vmem:[%s3 + $0x13c] sm:$0xf]
      %v480 = vld [vmem:[%s3 + $0x140] sm:$0xf]
      %v481 = vld [vmem:[%s3 + $0x144] sm:$0xf]
      %v482 = vld [vmem:[%s3 + $0x148] sm:$0xf]
      %v483 = vld [vmem:[%s3 + $0x14c] sm:$0xf]
      %v484 = vld [vmem:[%s3 + $0x150] sm:$0xf]
      %v485 = vld [vmem:[%s3 + $0x154] sm:$0xf]
      %v486 = vld [vmem:[%s3 + $0x158] sm:$0xf]
      %v487 = vld [vmem:[%s3 + $0x15c] sm:$0xf]
      %v488 = vld [vmem:[%s3 + $0x160] sm:$0xf]
      %v489 = vld [vmem:[%s3 + $0x164] sm:$0xf]
      %v490 = vld [vmem:[%s3 + $0x168] sm:$0xf]
      %v491 = vld [vmem:[%s3 + $0x16c] sm:$0xf]
      %v492 = vld [vmem:[%s3 + $0x170] sm:$0xf]
      %v493 = vld [vmem:[%s3 + $0x174] sm:$0xf]
      %v494 = vld [vmem:[%s3 + $0x178] sm:$0xf]
      %v495 = vld [vmem:[%s3 + $0x17c] sm:$0xf]
      %v496 = vld [vmem:[%s3 + $0x180] sm:$0xf]
      %v497 = vld [vmem:[%s3 + $0x184] sm:$0xf]
      %v498 = vld [vmem:[%s3 + $0x188] sm:$0xf]
      %v499 = vld [vmem:[%s3 + $0x18c] sm:$0xf]
      %v500 = vld [vmem:[%s3 + $0x190] sm:$0xf]
      %v501 = vld [vmem:[%s3 + $0x194] sm:$0xf]
      %v502 = vld [vmem:[%s3 + $0x198] sm:$0xf]
      %v503 = vld [vmem:[%s3 + $0x19c] sm:$0xf]
      %v504 = vld [vmem:[%s3 + $0x1a0] sm:$0xf]
      %v505 = vld [vmem:[%s3 + $0x1a4] sm:$0xf]
      %v506 = vld [vmem:[%s3 + $0x1a8] sm:$0xf]
      %v507 = vld [vmem:[%s3 + $0x1ac] sm:$0xf]
      %v508 = vld [vmem:[%s3 + $0x1b0] sm:$0xf]
      %v509 = vld [vmem:[%s3 + $0x1b4] sm:$0xf]
      %v510 = vld [vmem:[%s3 + $0x1b8] sm:$0xf]
      %v511 = vld [vmem:[%s3 + $0x1bc] sm:$0xf]
      %v512 = vld [vmem:[%s3 + $0x1c0] sm:$0xf]
      %v513 = vld [vmem:[%s3 + $0x1c4] sm:$0xf]
      %v514 = vld [vmem:[%s3 + $0x1c8] sm:$0xf]
      %v515 = vld [vmem:[%s3 + $0x1cc] sm:$0xf]
      %v516 = vld [vmem:[%s3 + $0x1d0] sm:$0xf]
      %v517 = vld [vmem:[%s3 + $0x1d4] sm:$0xf]
      %v518 = vld [vmem:[%s3 + $0x1d8] sm:$0xf]
      %v519 = vld [vmem:[%s3 + $0x1dc] sm:$0xf]
      %v520 = vld [vmem:[%s3 + $0x1e0] sm:$0xf]
      %v521 = vld [vmem:[%s3 + $0x1e4] sm:$0xf]
      %v522 = vld [vmem:[%s3 + $0x1e8] sm:$0xf]
      %v523 = vld [vmem:[%s3 + $0x1ec] sm:$0xf]
      %v524 = vld [vmem:[%s3 + $0x1f0] sm:$0xf]
      %v525 = vld [vmem:[%s3 + $0x1f4] sm:$0xf]
      %v526 = vld [vmem:[%s3 + $0x1f8] sm:$0xf]
      %v527 = vld [vmem:[%s3 + $0x1fc] sm:$0xf]
      %v528 = vld [vmem:[%s3 + $0x200] sm:$0xf]
      %v529 = vld [vmem:[%s3 + $0x204] sm:$0xf]
      %v530 = vld [vmem:[%s3 + $0x208] sm:$0xf]
      %v531 = vld [vmem:[%s3 + $0x20c] sm:$0xf]
      %v532 = vld [vmem:[%s3 + $0x210] sm:$0xf]
      %v533 = vld [vmem:[%s3 + $0x214] sm:$0xf]
      %v534 = vld [vmem:[%s3 + $0x218] sm:$0xf]
      %v535 = vld [vmem:[%s3 + $0x21c] sm:$0xf]
      %v536 = vld [vmem:[%s3 + $0x220] sm:$0xf]
      %v537 = vld [vmem:[%s3 + $0x224] sm:$0xf]
      %v538 = vld [vmem:[%s3 + $0x228] sm:$0xf]
      %v539 = vld [vmem:[%s3 + $0x22c] sm:$0xf]
      %v540 = vld [vmem:[%s3 + $0x230] sm:$0xf]
      %v541 = vld [vmem:[%s3 + $0x234] sm:$0xf]
      %v542 = vld [vmem:[%s3 + $0x238] sm:$0xf]
      %v543 = vld [vmem:[%s3 + $0x23c] sm:$0xf]
      %v544 = vld [vmem:[%s4] sm:$0x1]
      %v545 = vpack.c.bf16 %v368, %v368
      %v546 = vpack.c.bf16 %v369, %v369
      %v547 = vpack.c.bf16 %v370, %v370
      %v548 = vpack.c.bf16 %v371, %v371
      %v549 = vpack.c.bf16 %v372, %v372
      %v550 = vpack.c.bf16 %v373, %v373
      %v551 = vpack.c.bf16 %v374, %v374
      %v552 = vpack.c.bf16 %v375, %v375
      %v553 = vpack.c.bf16 %v376, %v376
      %v554 = vpack.c.bf16 %v377, %v377
      %v555 = vpack.c.bf16 %v378, %v378
      %v556 = vpack.c.bf16 %v379, %v379
      %v557 = vpack.c.bf16 %v380, %v380
      %v558 = vpack.c.bf16 %v381, %v381
      %v559 = vpack.c.bf16 %v382, %v382
      %v560 = vpack.c.bf16 %v383, %v383
      %v561 = vpack.c.bf16 %v384, %v384
      %v562 = vpack.c.bf16 %v385, %v385
      %v563 = vpack.c.bf16 %v386, %v386
      %v564 = vpack.c.bf16 %v387, %v387
      %v565 = vpack.c.bf16 %v388, %v388
      %v566 = vpack.c.bf16 %v389, %v389
      %v567 = vpack.c.bf16 %v390, %v390
      %v568 = vpack.c.bf16 %v391, %v391
      %v569 = vpack.c.bf16 %v392, %v392
      %v570 = vpack.c.bf16 %v393, %v393
      %v571 = vpack.c.bf16 %v394, %v394
      %v572 = vpack.c.bf16 %v395, %v395
      %v573 = vpack.c.bf16 %v396, %v396
      %v574 = vpack.c.bf16 %v397, %v397
      %v575 = vpack.c.bf16 %v398, %v398
      %v576 = vpack.c.bf16 %v399, %v399
      %v609 = vunpack.c.l.b16 %v545
      %v610 = vunpack.c.l.b16 %v546
      %v611 = vunpack.c.l.b16 %v547
      %v612 = vunpack.c.l.b16 %v548
      %v613 = vunpack.c.l.b16 %v549
      %v614 = vunpack.c.l.b16 %v550
      %v615 = vunpack.c.l.b16 %v551
      %v616 = vunpack.c.l.b16 %v552
      %v617 = vunpack.c.l.b16 %v553
      %v618 = vunpack.c.l.b16 %v554
      %v619 = vunpack.c.l.b16 %v555
      %v620 = vunpack.c.l.b16 %v556
      %v621 = vunpack.c.l.b16 %v557
      %v622 = vunpack.c.l.b16 %v558
      %v623 = vunpack.c.l.b16 %v559
      %v624 = vunpack.c.l.b16 %v560
      %v625 = vunpack.c.l.b16 %v561
      %v626 = vunpack.c.l.b16 %v562
      %v627 = vunpack.c.l.b16 %v563
      %v628 = vunpack.c.l.b16 %v564
      %v629 = vunpack.c.l.b16 %v565
      %v630 = vunpack.c.l.b16 %v566
      %v631 = vunpack.c.l.b16 %v567
      %v632 = vunpack.c.l.b16 %v568
      %v633 = vunpack.c.l.b16 %v569
      %v634 = vunpack.c.l.b16 %v570
      %v635 = vunpack.c.l.b16 %v571
      %v636 = vunpack.c.l.b16 %v572
      %v637 = vunpack.c.l.b16 %v573
      %v638 = vunpack.c.l.b16 %v574
      %v639 = vunpack.c.l.b16 %v575
      %v640 = vunpack.c.l.b16 %v576
      %v641 = vpack.c.b16 %v610, %v609
      %v642 = vpack.c.b16 %v612, %v611
      %v643 = vpack.c.b16 %v614, %v613
      %v644 = vpack.c.b16 %v616, %v615
      %v645 = vpack.c.b16 %v618, %v617
      %v646 = vpack.c.b16 %v620, %v619
      %v647 = vpack.c.b16 %v622, %v621
      %v648 = vpack.c.b16 %v624, %v623
      %v649 = vpack.c.b16 %v626, %v625
      %v650 = vpack.c.b16 %v628, %v627
      %v651 = vpack.c.b16 %v630, %v629
      %v652 = vpack.c.b16 %v632, %v631
      %v653 = vpack.c.b16 %v634, %v633
      %v654 = vpack.c.b16 %v636, %v635
      %v655 = vpack.c.b16 %v638, %v637
      %v656 = vpack.c.b16 %v640, %v639
      %v658 = vshrl.u32 0, 16
      %v660 = vrot.slane %v658, 7
      %v661 = vshll.u32 0, 16
      %v663 = vor.u32 %v660, %v661
      %v665 = vshrl.u32 %v641, 16
      %v667 = vrot.slane %v665, 7
      %v668 = vshll.u32 %v641, 16
      %v670 = vor.u32 %v667, %v668
      %v672 = vshrl.u32 %v642, 16
      %v674 = vrot.slane %v672, 7
      %v675 = vshll.u32 %v642, 16
      %v677 = vor.u32 %v674, %v675
      %v679 = vshrl.u32 %v643, 16
      %v681 = vrot.slane %v679, 7
      %v682 = vshll.u32 %v643, 16
      %v684 = vor.u32 %v681, %v682
      %v686 = vshrl.u32 %v644, 16
      %v688 = vrot.slane %v686, 7
      %v689 = vshll.u32 %v644, 16
      %v691 = vor.u32 %v688, %v689
      %v693 = vshrl.u32 %v645, 16
      %v695 = vrot.slane %v693, 7
      %v696 = vshll.u32 %v645, 16
      %v698 = vor.u32 %v695, %v696
      %v700 = vshrl.u32 %v646, 16
      %v702 = vrot.slane %v700, 7
      %v703 = vshll.u32 %v646, 16
      %v705 = vor.u32 %v702, %v703
      %v707 = vshrl.u32 %v647, 16
      %v709 = vrot.slane %v707, 7
      %v710 = vshll.u32 %v647, 16
      %v712 = vor.u32 %v709, %v710
      %v714 = vshrl.u32 %v648, 16
      %v716 = vrot.slane %v714, 7
      %v717 = vshll.u32 %v648, 16
      %v719 = vor.u32 %v716, %v717
      %v721 = vshrl.u32 %v649, 16
      %v723 = vrot.slane %v721, 7
      %v724 = vshll.u32 %v649, 16
      %v726 = vor.u32 %v723, %v724
      %v728 = vshrl.u32 %v650, 16
      %v730 = vrot.slane %v728, 7
      %v731 = vshll.u32 %v650, 16
      %v733 = vor.u32 %v730, %v731
      %v735 = vshrl.u32 %v651, 16
      %v737 = vrot.slane %v735, 7
      %v738 = vshll.u32 %v651, 16
      %v740 = vor.u32 %v737, %v738
      %v742 = vshrl.u32 %v652, 16
      %v744 = vrot.slane %v742, 7
      %v745 = vshll.u32 %v652, 16
      %v747 = vor.u32 %v744, %v745
      %v749 = vshrl.u32 %v653, 16
      %v751 = vrot.slane %v749, 7
      %v752 = vshll.u32 %v653, 16
      %v754 = vor.u32 %v751, %v752
      %v756 = vshrl.u32 %v654, 16
      %v758 = vrot.slane %v756, 7
      %v759 = vshll.u32 %v654, 16
      %v761 = vor.u32 %v758, %v759
      %v763 = vshrl.u32 %v655, 16
      %v765 = vrot.slane %v763, 7
      %v766 = vshll.u32 %v655, 16
      %v768 = vor.u32 %v765, %v766
      %v770 = vshrl.u32 %v656, 16
      %v772 = vrot.slane %v770, 7
      %v773 = vshll.u32 %v656, 16
      %v775 = vor.u32 %v772, %v773
      %vm810 = vcmask 1040384
      %vm811 = vsmask.f32 256
      %vm812 = vmand %vm810, %vm811
      %v813 = vsel %vm812, 0, %v663
      %v814 = vsel %vm812, 0, %v670
      %v815 = vsel %vm812, 0, %v677
      %v816 = vsel %vm812, 0, %v684
      %v817 = vsel %vm812, 0, %v691
      %v818 = vsel %vm812, 0, %v698
      %v819 = vsel %vm812, 0, %v705
      %v820 = vsel %vm812, 0, %v712
      %v821 = vsel %vm812, 0, %v719
      %v822 = vsel %vm812, 0, %v726
      %v823 = vsel %vm812, 0, %v733
      %v824 = vsel %vm812, 0, %v740
      %v825 = vsel %vm812, 0, %v747
      %v826 = vsel %vm812, 0, %v754
      %v827 = vsel %vm812, 0, %v761
      %v828 = vsel %vm812, 0, %v768
      %v829 = vsel %vm812, 0, %v775
      %v830 = vsel %vm812, %v660, 0
      %v831 = vsel %vm812, %v667, 0
      %v832 = vsel %vm812, %v674, 0
      %v833 = vsel %vm812, %v681, 0
      %v834 = vsel %vm812, %v688, 0
      %v835 = vsel %vm812, %v695, 0
      %v836 = vsel %vm812, %v702, 0
      %v837 = vsel %vm812, %v709, 0
      %v838 = vsel %vm812, %v716, 0
      %v839 = vsel %vm812, %v723, 0
      %v840 = vsel %vm812, %v730, 0
      %v841 = vsel %vm812, %v737, 0
      %v842 = vsel %vm812, %v744, 0
      %v843 = vsel %vm812, %v751, 0
      %v844 = vsel %vm812, %v758, 0
      %v845 = vsel %vm812, %v765, 0
      %v846 = vsel %vm812, %v772, 0
      %vm847 = vsmask.f32 7424
      %v849 = vshrl.u32 %v813, 16
      %v851 = vshll.u32 %v813, 16
      %v853 = vrot.slane %v851, 1
      %v854 = vor.u32 %v849, %v853
      %v856 = vshll.u32 %v830, 16
      %v858 = vrot.slane %v856, 1
      %v859 = vsel %vm847, %v854, %v858
      %v861 = vshrl.u32 %v814, 16
      %v863 = vshll.u32 %v814, 16
      %v865 = vrot.slane %v863, 1
      %v866 = vor.u32 %v861, %v865
      %v868 = vshll.u32 %v831, 16
      %v870 = vrot.slane %v868, 1
      %v871 = vsel %vm847, %v866, %v870
      %v873 = vshrl.u32 %v815, 16
      %v875 = vshll.u32 %v815, 16
      %v877 = vrot.slane %v875, 1
      %v878 = vor.u32 %v873, %v877
      %v880 = vshll.u32 %v832, 16
      %v882 = vrot.slane %v880, 1
      %v883 = vsel %vm847, %v878, %v882
      %v885 = vshrl.u32 %v816, 16
      %v887 = vshll.u32 %v816, 16
      %v889 = vrot.slane %v887, 1
      %v890 = vor.u32 %v885, %v889
      %v892 = vshll.u32 %v833, 16
      %v894 = vrot.slane %v892, 1
      %v895 = vsel %vm847, %v890, %v894
      %v897 = vshrl.u32 %v817, 16
      %v899 = vshll.u32 %v817, 16
      %v901 = vrot.slane %v899, 1
      %v902 = vor.u32 %v897, %v901
      %v904 = vshll.u32 %v834, 16
      %v906 = vrot.slane %v904, 1
      %v907 = vsel %vm847, %v902, %v906
      %v909 = vshrl.u32 %v818, 16
      %v911 = vshll.u32 %v818, 16
      %v913 = vrot.slane %v911, 1
      %v914 = vor.u32 %v909, %v913
      %v916 = vshll.u32 %v835, 16
      %v918 = vrot.slane %v916, 1
      %v919 = vsel %vm847, %v914, %v918
      %v921 = vshrl.u32 %v819, 16
      %v923 = vshll.u32 %v819, 16
      %v925 = vrot.slane %v923, 1
      %v926 = vor.u32 %v921, %v925
      %v928 = vshll.u32 %v836, 16
      %v930 = vrot.slane %v928, 1
      %v931 = vsel %vm847, %v926, %v930
      %v933 = vshrl.u32 %v820, 16
      %v935 = vshll.u32 %v820, 16
      %v937 = vrot.slane %v935, 1
      %v938 = vor.u32 %v933, %v937
      %v940 = vshll.u32 %v837, 16
      %v942 = vrot.slane %v940, 1
      %v943 = vsel %vm847, %v938, %v942
      %v945 = vshrl.u32 %v821, 16
      %v947 = vshll.u32 %v821, 16
      %v949 = vrot.slane %v947, 1
      %v950 = vor.u32 %v945, %v949
      %v952 = vshll.u32 %v838, 16
      %v954 = vrot.slane %v952, 1
      %v955 = vsel %vm847, %v950, %v954
      %v957 = vshrl.u32 %v822, 16
      %v959 = vshll.u32 %v822, 16
      %v961 = vrot.slane %v959, 1
      %v962 = vor.u32 %v957, %v961
      %v964 = vshll.u32 %v839, 16
      %v966 = vrot.slane %v964, 1
      %v967 = vsel %vm847, %v962, %v966
      %v969 = vshrl.u32 %v823, 16
      %v971 = vshll.u32 %v823, 16
      %v973 = vrot.slane %v971, 1
      %v974 = vor.u32 %v969, %v973
      %v976 = vshll.u32 %v840, 16
      %v978 = vrot.slane %v976, 1
      %v979 = vsel %vm847, %v974, %v978
      %v981 = vshrl.u32 %v824, 16
      %v983 = vshll.u32 %v824, 16
      %v985 = vrot.slane %v983, 1
      %v986 = vor.u32 %v981, %v985
      %v988 = vshll.u32 %v841, 16
      %v990 = vrot.slane %v988, 1
      %v991 = vsel %vm847, %v986, %v990
      %v993 = vshrl.u32 %v825, 16
      %v995 = vshll.u32 %v825, 16
      %v997 = vrot.slane %v995, 1
      %v998 = vor.u32 %v993, %v997
      %v1000 = vshll.u32 %v842, 16
      %v1002 = vrot.slane %v1000, 1
      %v1003 = vsel %vm847, %v998, %v1002
      %v1005 = vshrl.u32 %v826, 16
      %v1007 = vshll.u32 %v826, 16
      %v1009 = vrot.slane %v1007, 1
      %v1010 = vor.u32 %v1005, %v1009
      %v1012 = vshll.u32 %v843, 16
      %v1014 = vrot.slane %v1012, 1
      %v1015 = vsel %vm847, %v1010, %v1014
      %v1017 = vshrl.u32 %v827, 16
      %v1019 = vshll.u32 %v827, 16
      %v1021 = vrot.slane %v1019, 1
      %v1022 = vor.u32 %v1017, %v1021
      %v1024 = vshll.u32 %v844, 16
      %v1026 = vrot.slane %v1024, 1
      %v1027 = vsel %vm847, %v1022, %v1026
      %v1029 = vshrl.u32 %v828, 16
      %v1031 = vshll.u32 %v828, 16
      %v1033 = vrot.slane %v1031, 1
      %v1034 = vor.u32 %v1029, %v1033
      %v1036 = vshll.u32 %v845, 16
      %v1038 = vrot.slane %v1036, 1
      %v1039 = vsel %vm847, %v1034, %v1038
      %vm1088 = vcmask 1046528
      %v1089 = vrot.slane %v813, 1
      %v1090 = vrot.slane %v830, 1
      %v1091 = vsel %vm1088, %v1089, %v1090
      %v1092 = vrot.slane %v814, 1
      %v1093 = vrot.slane %v831, 1
      %v1094 = vsel %vm1088, %v1092, %v1093
      %v1095 = vrot.slane %v815, 1
      %v1096 = vrot.slane %v832, 1
      %v1097 = vsel %vm1088, %v1095, %v1096
      %v1098 = vrot.slane %v816, 1
      %v1099 = vrot.slane %v833, 1
      %v1100 = vsel %vm1088, %v1098, %v1099
      %v1101 = vrot.slane %v817, 1
      %v1102 = vrot.slane %v834, 1
      %v1103 = vsel %vm1088, %v1101, %v1102
      %v1104 = vrot.slane %v818, 1
      %v1105 = vrot.slane %v835, 1
      %v1106 = vsel %vm1088, %v1104, %v1105
      %v1107 = vrot.slane %v819, 1
      %v1108 = vrot.slane %v836, 1
      %v1109 = vsel %vm1088, %v1107, %v1108
      %v1110 = vrot.slane %v820, 1
      %v1111 = vrot.slane %v837, 1
      %v1112 = vsel %vm1088, %v1110, %v1111
      %v1113 = vrot.slane %v821, 1
      %v1114 = vrot.slane %v838, 1
      %v1115 = vsel %vm1088, %v1113, %v1114
      %v1116 = vrot.slane %v822, 1
      %v1117 = vrot.slane %v839, 1
      %v1118 = vsel %vm1088, %v1116, %v1117
      %v1119 = vrot.slane %v823, 1
      %v1120 = vrot.slane %v840, 1
      %v1121 = vsel %vm1088, %v1119, %v1120
      %v1122 = vrot.slane %v824, 1
      %v1123 = vrot.slane %v841, 1
      %v1124 = vsel %vm1088, %v1122, %v1123
      %v1125 = vrot.slane %v825, 1
      %v1126 = vrot.slane %v842, 1
      %v1127 = vsel %vm1088, %v1125, %v1126
      %v1128 = vrot.slane %v826, 1
      %v1129 = vrot.slane %v843, 1
      %v1130 = vsel %vm1088, %v1128, %v1129
      %v1131 = vrot.slane %v827, 1
      %v1132 = vrot.slane %v844, 1
      %v1133 = vsel %vm1088, %v1131, %v1132
      %v1134 = vrot.slane %v828, 1
      %v1135 = vrot.slane %v845, 1
      %v1136 = vsel %vm1088, %v1134, %v1135
      %v1154 = vshrl.u32 %v829, 16
      %v1156 = vshll.u32 %v829, 16
      %v1158 = vrot.slane %v1156, 1
      %v1159 = vor.u32 %v1154, %v1158
      %v1161 = vshll.u32 %v846, 16
      %v1163 = vrot.slane %v1161, 1
      %v1164 = vsel %vm847, %v1159, %v1163
      %v1168 = vrot.slane %v829, 1
      %v1169 = vrot.slane %v846, 1
      %v1170 = vsel %vm1088, %v1168, %v1169
      %v1173 = vperm.slane %v544, 0
      %v1319 = vunpack.c.l.b16 %v400
      %v1320 = vunpack.c.l.b16 %v401
      %v1321 = vunpack.c.l.b16 %v402
      %v1322 = vunpack.c.l.b16 %v403
      %v1323 = vunpack.c.l.b16 %v404
      %v1324 = vunpack.c.l.b16 %v405
      %v1325 = vunpack.c.l.b16 %v406
      %v1326 = vunpack.c.l.b16 %v407
      %v1327 = vunpack.c.l.b16 %v408
      %v1328 = vunpack.c.l.b16 %v409
      %v1329 = vunpack.c.l.b16 %v410
      %v1330 = vunpack.c.l.b16 %v411
      %v1331 = vunpack.c.l.b16 %v412
      %v1332 = vunpack.c.l.b16 %v413
      %v1333 = vunpack.c.l.b16 %v414
      %v1334 = vunpack.c.l.b16 %v415
      %v1335 = vunpack.c.l.b16 %v416
      %v1336 = vunpack.c.l.b16 %v417
      %v1337 = vunpack.c.l.b16 %v418
      %v1338 = vunpack.c.l.b16 %v419
      %v1339 = vunpack.c.l.b16 %v420
      %v1340 = vunpack.c.l.b16 %v421
      %v1341 = vunpack.c.l.b16 %v422
      %v1342 = vunpack.c.l.b16 %v423
      %v1343 = vunpack.c.l.b16 %v424
      %v1344 = vunpack.c.l.b16 %v425
      %v1345 = vunpack.c.l.b16 %v426
      %v1346 = vunpack.c.l.b16 %v427
      %v1347 = vunpack.c.l.b16 %v428
      %v1348 = vunpack.c.l.b16 %v429
      %v1349 = vunpack.c.l.b16 %v430
      %v1350 = vunpack.c.l.b16 %v431
      %v1351 = vunpack.c.l.b16 %v432
      %v1352 = vunpack.c.l.b16 %v433
      %v1353 = vunpack.c.l.b16 %v434
      %v1354 = vunpack.c.l.b16 %v435
      %v1355 = vunpack.c.l.b16 %v436
      %v1356 = vunpack.c.l.b16 %v437
      %v1357 = vunpack.c.l.b16 %v438
      %v1358 = vunpack.c.l.b16 %v439
      %v1359 = vunpack.c.l.b16 %v440
      %v1360 = vunpack.c.l.b16 %v441
      %v1361 = vunpack.c.l.b16 %v442
      %v1362 = vunpack.c.l.b16 %v443
      %v1363 = vunpack.c.l.b16 %v444
      %v1364 = vunpack.c.l.b16 %v445
      %v1365 = vunpack.c.l.b16 %v446
      %v1366 = vunpack.c.l.b16 %v447
      %v1367 = vunpack.c.l.b16 %v448
      %v1368 = vunpack.c.l.b16 %v449
      %v1369 = vunpack.c.l.b16 %v450
      %v1370 = vunpack.c.l.b16 %v451
      %v1371 = vunpack.c.l.b16 %v452
      %v1372 = vunpack.c.l.b16 %v453
      %v1373 = vunpack.c.l.b16 %v454
      %v1374 = vunpack.c.l.b16 %v455
      %v1375 = vunpack.c.l.b16 %v456
      %v1376 = vunpack.c.l.b16 %v457
      %v1377 = vunpack.c.l.b16 %v458
      %v1378 = vunpack.c.l.b16 %v459
      %v1379 = vunpack.c.l.b16 %v460
      %v1380 = vunpack.c.l.b16 %v461
      %v1381 = vunpack.c.l.b16 %v462
      %v1382 = vunpack.c.l.b16 %v463
      %v1383 = vunpack.c.l.b16 %v464
      %v1384 = vunpack.c.l.b16 %v465
      %v1385 = vunpack.c.l.b16 %v466
      %v1386 = vunpack.c.l.b16 %v467
      %v1387 = vunpack.c.l.b16 %v468
      %v1388 = vunpack.c.l.b16 %v469
      %v1389 = vunpack.c.l.b16 %v470
      %v1390 = vunpack.c.l.b16 %v471
      %v1391 = vunpack.c.l.b16 %v472
      %v1392 = vunpack.c.l.b16 %v473
      %v1393 = vunpack.c.l.b16 %v474
      %v1394 = vunpack.c.l.b16 %v475
      %v1395 = vunpack.c.l.b16 %v476
      %v1396 = vunpack.c.l.b16 %v477
      %v1397 = vunpack.c.l.b16 %v478
      %v1398 = vunpack.c.l.b16 %v479
      %v1399 = vunpack.c.l.b16 %v480
      %v1400 = vunpack.c.l.b16 %v481
      %v1401 = vunpack.c.l.b16 %v482
      %v1402 = vunpack.c.l.b16 %v483
      %v1403 = vunpack.c.l.b16 %v484
      %v1404 = vunpack.c.l.b16 %v485
      %v1405 = vunpack.c.l.b16 %v486
      %v1406 = vunpack.c.l.b16 %v487
      %v1407 = vunpack.c.l.b16 %v488
      %v1408 = vunpack.c.l.b16 %v489
      %v1409 = vunpack.c.l.b16 %v490
      %v1410 = vunpack.c.l.b16 %v491
      %v1411 = vunpack.c.l.b16 %v492
      %v1412 = vunpack.c.l.b16 %v493
      %v1413 = vunpack.c.l.b16 %v494
      %v1414 = vunpack.c.l.b16 %v495
      %v1415 = vunpack.c.l.b16 %v496
      %v1416 = vunpack.c.l.b16 %v497
      %v1417 = vunpack.c.l.b16 %v498
      %v1418 = vunpack.c.l.b16 %v499
      %v1419 = vunpack.c.l.b16 %v500
      %v1420 = vunpack.c.l.b16 %v501
      %v1421 = vunpack.c.l.b16 %v502
      %v1422 = vunpack.c.l.b16 %v503
      %v1423 = vunpack.c.l.b16 %v504
      %v1424 = vunpack.c.l.b16 %v505
      %v1425 = vunpack.c.l.b16 %v506
      %v1426 = vunpack.c.l.b16 %v507
      %v1427 = vunpack.c.l.b16 %v508
      %v1428 = vunpack.c.l.b16 %v509
      %v1429 = vunpack.c.l.b16 %v510
      %v1430 = vunpack.c.l.b16 %v511
      %v1431 = vunpack.c.l.b16 %v512
      %v1432 = vunpack.c.l.b16 %v513
      %v1433 = vunpack.c.l.b16 %v514
      %v1434 = vunpack.c.l.b16 %v515
      %v1435 = vunpack.c.l.b16 %v516
      %v1436 = vunpack.c.l.b16 %v517
      %v1437 = vunpack.c.l.b16 %v518
      %v1438 = vunpack.c.l.b16 %v519
      %v1439 = vunpack.c.l.b16 %v520
      %v1440 = vunpack.c.l.b16 %v521
      %v1441 = vunpack.c.l.b16 %v522
      %v1442 = vunpack.c.l.b16 %v523
      %v1443 = vunpack.c.l.b16 %v524
      %v1444 = vunpack.c.l.b16 %v525
      %v1445 = vunpack.c.l.b16 %v526
      %v1446 = vunpack.c.l.b16 %v527
      %v1447 = vunpack.c.l.b16 %v528
      %v1448 = vunpack.c.l.b16 %v529
      %v1449 = vunpack.c.l.b16 %v530
      %v1450 = vunpack.c.l.b16 %v531
      %v1451 = vunpack.c.l.b16 %v532
      %v1452 = vunpack.c.l.b16 %v533
      %v1453 = vunpack.c.l.b16 %v534
      %v1454 = vunpack.c.l.b16 %v535
      %v1455 = vunpack.c.l.b16 %v536
      %v1456 = vunpack.c.l.b16 %v537
      %v1457 = vunpack.c.l.b16 %v538
      %v1458 = vunpack.c.l.b16 %v539
      %v1459 = vunpack.c.l.b16 %v540
      %v1460 = vunpack.c.l.b16 %v541
      %v1461 = vunpack.c.l.b16 %v542
      %v1462 = vunpack.c.l.b16 %v543
      %v1463 = vpack.c.b16 %v1320, %v1319
      %v1464 = vpack.c.b16 %v1322, %v1321
      %v1465 = vpack.c.b16 %v1324, %v1323
      %v1466 = vpack.c.b16 %v1326, %v1325
      %v1467 = vpack.c.b16 %v1328, %v1327
      %v1468 = vpack.c.b16 %v1330, %v1329
      %v1469 = vpack.c.b16 %v1332, %v1331
      %v1470 = vpack.c.b16 %v1334, %v1333
      %v1471 = vpack.c.b16 %v1336, %v1335
      %v1472 = vpack.c.b16 %v1338, %v1337
      %v1473 = vpack.c.b16 %v1340, %v1339
      %v1474 = vpack.c.b16 %v1342, %v1341
      %v1475 = vpack.c.b16 %v1344, %v1343
      %v1476 = vpack.c.b16 %v1346, %v1345
      %v1477 = vpack.c.b16 %v1348, %v1347
      %v1478 = vpack.c.b16 %v1350, %v1349
      %v1479 = vpack.c.b16 %v1352, %v1351
      %v1480 = vpack.c.b16 %v1354, %v1353
      %v1481 = vpack.c.b16 %v1356, %v1355
      %v1482 = vpack.c.b16 %v1358, %v1357
      %v1483 = vpack.c.b16 %v1360, %v1359
      %v1484 = vpack.c.b16 %v1362, %v1361
      %v1485 = vpack.c.b16 %v1364, %v1363
      %v1486 = vpack.c.b16 %v1366, %v1365
      %v1487 = vpack.c.b16 %v1368, %v1367
      %v1488 = vpack.c.b16 %v1370, %v1369
      %v1489 = vpack.c.b16 %v1372, %v1371
      %v1490 = vpack.c.b16 %v1374, %v1373
      %v1491 = vpack.c.b16 %v1376, %v1375
      %v1492 = vpack.c.b16 %v1378, %v1377
      %v1493 = vpack.c.b16 %v1380, %v1379
      %v1494 = vpack.c.b16 %v1382, %v1381
      %v1495 = vpack.c.b16 %v1384, %v1383
      %v1496 = vpack.c.b16 %v1386, %v1385
      %v1497 = vpack.c.b16 %v1388, %v1387
      %v1498 = vpack.c.b16 %v1390, %v1389
      %v1499 = vpack.c.b16 %v1392, %v1391
      %v1500 = vpack.c.b16 %v1394, %v1393
      %v1501 = vpack.c.b16 %v1396, %v1395
      %v1502 = vpack.c.b16 %v1398, %v1397
      %v1503 = vpack.c.b16 %v1400, %v1399
      %v1504 = vpack.c.b16 %v1402, %v1401
      %v1505 = vpack.c.b16 %v1404, %v1403
      %v1506 = vpack.c.b16 %v1406, %v1405
      %v1507 = vpack.c.b16 %v1408, %v1407
      %v1508 = vpack.c.b16 %v1410, %v1409
      %v1509 = vpack.c.b16 %v1412, %v1411
      %v1510 = vpack.c.b16 %v1414, %v1413
      %v1511 = vpack.c.b16 %v1416, %v1415
      %v1512 = vpack.c.b16 %v1418, %v1417
      %v1513 = vpack.c.b16 %v1420, %v1419
      %v1514 = vpack.c.b16 %v1422, %v1421
      %v1515 = vpack.c.b16 %v1424, %v1423
      %v1516 = vpack.c.b16 %v1426, %v1425
      %v1517 = vpack.c.b16 %v1428, %v1427
      %v1518 = vpack.c.b16 %v1430, %v1429
      %v1519 = vpack.c.b16 %v1432, %v1431
      %v1520 = vpack.c.b16 %v1434, %v1433
      %v1521 = vpack.c.b16 %v1436, %v1435
      %v1522 = vpack.c.b16 %v1438, %v1437
      %v1523 = vpack.c.b16 %v1440, %v1439
      %v1524 = vpack.c.b16 %v1442, %v1441
      %v1525 = vpack.c.b16 %v1444, %v1443
      %v1526 = vpack.c.b16 %v1446, %v1445
      %v1527 = vpack.c.b16 %v1448, %v1447
      %v1528 = vpack.c.b16 %v1450, %v1449
      %v1529 = vpack.c.b16 %v1452, %v1451
      %v1530 = vpack.c.b16 %v1454, %v1453
      %v1531 = vpack.c.b16 %v1456, %v1455
      %v1532 = vpack.c.b16 %v1458, %v1457
      %v1533 = vpack.c.b16 %v1460, %v1459
      %v1534 = vpack.c.b16 %v1462, %v1461
      %1607 = vmatpush.bf16.msra.mxu0 %v1470
      %1608 = vmatpush.bf16.msra.mxu0 %v1469
      %1609 = vmatpush.bf16.msra.mxu0 %v1468
      %1610 = vmatpush.bf16.msra.mxu0 %v1467
      %1611 = vmatpush.bf16.msra.mxu0 %v1466
      %1612 = vmatpush.bf16.msra.mxu0 %v1465
      %1613 = vmatpush.bf16.msra.mxu0 %v1464
      %1614 = vmatpush.bf16.msra.mxu0 %v1463
      %1615 = vmatmul.bf16.gmra.mxu0 %v813
      %v1616 = vpop.f32.mrf.mxu0
      %v1617 = vadd.f32 %v1173, %v1616
      %v1618 = vpop.f32.mrf.mxu0
      %v1619 = vadd.f32 %v1173, %v1618
      %1620 = vmatmul.bf16.gmra.mxu0 %v814
      %v1621 = vpop.f32.mrf.mxu0
      %v1622 = vadd.f32 %v1173, %v1621
      %v1623 = vpop.f32.mrf.mxu0
      %v1624 = vadd.f32 %v1173, %v1623
      %1625 = vmatmul.bf16.gmra.mxu0 %v815
      %v1626 = vpop.f32.mrf.mxu0
      %v1627 = vadd.f32 %v1173, %v1626
      %v1628 = vpop.f32.mrf.mxu0
      %v1629 = vadd.f32 %v1173, %v1628
      %1630 = vmatmul.bf16.gmra.mxu0 %v816
      %v1631 = vpop.f32.mrf.mxu0
      %v1632 = vadd.f32 %v1173, %v1631
      %v1633 = vpop.f32.mrf.mxu0
      %v1634 = vadd.f32 %v1173, %v1633
      %1635 = vmatmul.bf16.gmra.mxu0 %v817
      %v1636 = vpop.f32.mrf.mxu0
      %v1637 = vadd.f32 %v1173, %v1636
      %v1638 = vpop.f32.mrf.mxu0
      %v1639 = vadd.f32 %v1173, %v1638
      %1640 = vmatmul.bf16.gmra.mxu0 %v818
      %v1641 = vpop.f32.mrf.mxu0
      %v1642 = vadd.f32 %v1173, %v1641
      %v1643 = vpop.f32.mrf.mxu0
      %v1644 = vadd.f32 %v1173, %v1643
      %1645 = vmatmul.bf16.gmra.mxu0 %v819
      %v1646 = vpop.f32.mrf.mxu0
      %v1647 = vadd.f32 %v1173, %v1646
      %v1648 = vpop.f32.mrf.mxu0
      %v1649 = vadd.f32 %v1173, %v1648
      %1650 = vmatmul.bf16.gmra.mxu0 %v820
      %v1651 = vpop.f32.mrf.mxu0
      %v1652 = vadd.f32 %v1173, %v1651
      %v1653 = vpop.f32.mrf.mxu0
      %v1654 = vadd.f32 %v1173, %v1653
      %1655 = vmatmul.bf16.gmra.mxu0 %v821
      %v1656 = vpop.f32.mrf.mxu0
      %v1657 = vadd.f32 %v1173, %v1656
      %v1658 = vpop.f32.mrf.mxu0
      %v1659 = vadd.f32 %v1173, %v1658
      %1660 = vmatmul.bf16.gmra.mxu0 %v822
      %v1661 = vpop.f32.mrf.mxu0
      %v1662 = vadd.f32 %v1173, %v1661
      %v1663 = vpop.f32.mrf.mxu0
      %v1664 = vadd.f32 %v1173, %v1663
      %1665 = vmatmul.bf16.gmra.mxu0 %v823
      %v1666 = vpop.f32.mrf.mxu0
      %v1667 = vadd.f32 %v1173, %v1666
      %v1668 = vpop.f32.mrf.mxu0
      %v1669 = vadd.f32 %v1173, %v1668
      %1670 = vmatmul.bf16.gmra.mxu0 %v824
      %v1671 = vpop.f32.mrf.mxu0
      %v1672 = vadd.f32 %v1173, %v1671
      %v1673 = vpop.f32.mrf.mxu0
      %v1674 = vadd.f32 %v1173, %v1673
      %1675 = vmatmul.bf16.gmra.mxu0 %v825
      %v1676 = vpop.f32.mrf.mxu0
      %v1677 = vadd.f32 %v1173, %v1676
      %v1678 = vpop.f32.mrf.mxu0
      %v1679 = vadd.f32 %v1173, %v1678
      %1680 = vmatmul.bf16.gmra.mxu0 %v826
      %v1681 = vpop.f32.mrf.mxu0
      %v1682 = vadd.f32 %v1173, %v1681
      %v1683 = vpop.f32.mrf.mxu0
      %v1684 = vadd.f32 %v1173, %v1683
      %1685 = vmatmul.bf16.gmra.mxu0 %v827
      %v1686 = vpop.f32.mrf.mxu0
      %v1687 = vadd.f32 %v1173, %v1686
      %v1688 = vpop.f32.mrf.mxu0
      %v1689 = vadd.f32 %v1173, %v1688
      %1690 = vmatmul.bf16.gmra.mxu0 %v828
      %v1691 = vpop.f32.mrf.mxu0
      %v1692 = vadd.f32 %v1173, %v1691
      %v1693 = vpop.f32.mrf.mxu0
      %v1694 = vadd.f32 %v1173, %v1693
      %1695 = vdwg.mxu0
      %1696 = vmatpush.bf16.msra.mxu0 %v1478
      %1697 = vmatpush.bf16.msra.mxu0 %v1477
      %1698 = vmatpush.bf16.msra.mxu0 %v1476
      %1699 = vmatpush.bf16.msra.mxu0 %v1475
      %1700 = vmatpush.bf16.msra.mxu0 %v1474
      %1701 = vmatpush.bf16.msra.mxu0 %v1473
      %1702 = vmatpush.bf16.msra.mxu0 %v1472
      %1703 = vmatpush.bf16.msra.mxu0 %v1471
      %1704 = vmatmul.bf16.gmra.mxu0 %v859
      %v1705 = vpop.f32.mrf.mxu0
      %v1706 = vadd.f32 %v1617, %v1705
      %v1707 = vpop.f32.mrf.mxu0
      %v1708 = vadd.f32 %v1619, %v1707
      %1709 = vmatmul.bf16.gmra.mxu0 %v871
      %v1710 = vpop.f32.mrf.mxu0
      %v1711 = vadd.f32 %v1622, %v1710
      %v1712 = vpop.f32.mrf.mxu0
      %v1713 = vadd.f32 %v1624, %v1712
      %1714 = vmatmul.bf16.gmra.mxu0 %v883
      %v1715 = vpop.f32.mrf.mxu0
      %v1716 = vadd.f32 %v1627, %v1715
      %v1717 = vpop.f32.mrf.mxu0
      %v1718 = vadd.f32 %v1629, %v1717
      %1719 = vmatmul.bf16.gmra.mxu0 %v895
      %v1720 = vpop.f32.mrf.mxu0
      %v1721 = vadd.f32 %v1632, %v1720
      %v1722 = vpop.f32.mrf.mxu0
      %v1723 = vadd.f32 %v1634, %v1722
      %1724 = vmatmul.bf16.gmra.mxu0 %v907
      %v1725 = vpop.f32.mrf.mxu0
      %v1726 = vadd.f32 %v1637, %v1725
      %v1727 = vpop.f32.mrf.mxu0
      %v1728 = vadd.f32 %v1639, %v1727
      %1729 = vmatmul.bf16.gmra.mxu0 %v919
      %v1730 = vpop.f32.mrf.mxu0
      %v1731 = vadd.f32 %v1642, %v1730
      %v1732 = vpop.f32.mrf.mxu0
      %v1733 = vadd.f32 %v1644, %v1732
      %1734 = vmatmul.bf16.gmra.mxu0 %v931
      %v1735 = vpop.f32.mrf.mxu0
      %v1736 = vadd.f32 %v1647, %v1735
      %v1737 = vpop.f32.mrf.mxu0
      %v1738 = vadd.f32 %v1649, %v1737
      %1739 = vmatmul.bf16.gmra.mxu0 %v943
      %v1740 = vpop.f32.mrf.mxu0
      %v1741 = vadd.f32 %v1652, %v1740
      %v1742 = vpop.f32.mrf.mxu0
      %v1743 = vadd.f32 %v1654, %v1742
      %1744 = vmatmul.bf16.gmra.mxu0 %v955
      %v1745 = vpop.f32.mrf.mxu0
      %v1746 = vadd.f32 %v1657, %v1745
      %v1747 = vpop.f32.mrf.mxu0
      %v1748 = vadd.f32 %v1659, %v1747
      %1749 = vmatmul.bf16.gmra.mxu0 %v967
      %v1750 = vpop.f32.mrf.mxu0
      %v1751 = vadd.f32 %v1662, %v1750
      %v1752 = vpop.f32.mrf.mxu0
      %v1753 = vadd.f32 %v1664, %v1752
      %1754 = vmatmul.bf16.gmra.mxu0 %v979
      %v1755 = vpop.f32.mrf.mxu0
      %v1756 = vadd.f32 %v1667, %v1755
      %v1757 = vpop.f32.mrf.mxu0
      %v1758 = vadd.f32 %v1669, %v1757
      %1759 = vmatmul.bf16.gmra.mxu0 %v991
      %v1760 = vpop.f32.mrf.mxu0
      %v1761 = vadd.f32 %v1672, %v1760
      %v1762 = vpop.f32.mrf.mxu0
      %v1763 = vadd.f32 %v1674, %v1762
      %1764 = vmatmul.bf16.gmra.mxu0 %v1003
      %v1765 = vpop.f32.mrf.mxu0
      %v1766 = vadd.f32 %v1677, %v1765
      %v1767 = vpop.f32.mrf.mxu0
      %v1768 = vadd.f32 %v1679, %v1767
      %1769 = vmatmul.bf16.gmra.mxu0 %v1015
      %v1770 = vpop.f32.mrf.mxu0
      %v1771 = vadd.f32 %v1682, %v1770
      %v1772 = vpop.f32.mrf.mxu0
      %v1773 = vadd.f32 %v1684, %v1772
      %1774 = vmatmul.bf16.gmra.mxu0 %v1027
      %v1775 = vpop.f32.mrf.mxu0
      %v1776 = vadd.f32 %v1687, %v1775
      %v1777 = vpop.f32.mrf.mxu0
      %v1778 = vadd.f32 %v1689, %v1777
      %1779 = vmatmul.bf16.gmra.mxu0 %v1039
      %v1780 = vpop.f32.mrf.mxu0
      %v1781 = vadd.f32 %v1692, %v1780
      %v1782 = vpop.f32.mrf.mxu0
      %v1783 = vadd.f32 %v1694, %v1782
      %1784 = vdwg.mxu0
      %1785 = vmatpush.bf16.msra.mxu0 %v1486
      %1786 = vmatpush.bf16.msra.mxu0 %v1485
      %1787 = vmatpush.bf16.msra.mxu0 %v1484
      %1788 = vmatpush.bf16.msra.mxu0 %v1483
      %1789 = vmatpush.bf16.msra.mxu0 %v1482
      %1790 = vmatpush.bf16.msra.mxu0 %v1481
      %1791 = vmatpush.bf16.msra.mxu0 %v1480
      %1792 = vmatpush.bf16.msra.mxu0 %v1479
      %1793 = vmatmul.bf16.gmra.mxu0 %v1091
      %v1794 = vpop.f32.mrf.mxu0
      %v1795 = vadd.f32 %v1706, %v1794
      %v1796 = vpop.f32.mrf.mxu0
      %v1797 = vadd.f32 %v1708, %v1796
      %1798 = vmatmul.bf16.gmra.mxu0 %v1094
      %v1799 = vpop.f32.mrf.mxu0
      %v1800 = vadd.f32 %v1711, %v1799
      %v1801 = vpop.f32.mrf.mxu0
      %v1802 = vadd.f32 %v1713, %v1801
      %1803 = vmatmul.bf16.gmra.mxu0 %v1097
      %v1804 = vpop.f32.mrf.mxu0
      %v1805 = vadd.f32 %v1716, %v1804
      %v1806 = vpop.f32.mrf.mxu0
      %v1807 = vadd.f32 %v1718, %v1806
      %1808 = vmatmul.bf16.gmra.mxu0 %v1100
      %v1809 = vpop.f32.mrf.mxu0
      %v1810 = vadd.f32 %v1721, %v1809
      %v1811 = vpop.f32.mrf.mxu0
      %v1812 = vadd.f32 %v1723, %v1811
      %1813 = vmatmul.bf16.gmra.mxu0 %v1103
      %v1814 = vpop.f32.mrf.mxu0
      %v1815 = vadd.f32 %v1726, %v1814
      %v1816 = vpop.f32.mrf.mxu0
      %v1817 = vadd.f32 %v1728, %v1816
      %1818 = vmatmul.bf16.gmra.mxu0 %v1106
      %v1819 = vpop.f32.mrf.mxu0
      %v1820 = vadd.f32 %v1731, %v1819
      %v1821 = vpop.f32.mrf.mxu0
      %v1822 = vadd.f32 %v1733, %v1821
      %1823 = vmatmul.bf16.gmra.mxu0 %v1109
      %v1824 = vpop.f32.mrf.mxu0
      %v1825 = vadd.f32 %v1736, %v1824
      %v1826 = vpop.f32.mrf.mxu0
      %v1827 = vadd.f32 %v1738, %v1826
      %1828 = vmatmul.bf16.gmra.mxu0 %v1112
      %v1829 = vpop.f32.mrf.mxu0
      %v1830 = vadd.f32 %v1741, %v1829
      %v1831 = vpop.f32.mrf.mxu0
      %v1832 = vadd.f32 %v1743, %v1831
      %1833 = vmatmul.bf16.gmra.mxu0 %v1115
      %v1834 = vpop.f32.mrf.mxu0
      %v1835 = vadd.f32 %v1746, %v1834
      %v1836 = vpop.f32.mrf.mxu0
      %v1837 = vadd.f32 %v1748, %v1836
      %1838 = vmatmul.bf16.gmra.mxu0 %v1118
      %v1839 = vpop.f32.mrf.mxu0
      %v1840 = vadd.f32 %v1751, %v1839
      %v1841 = vpop.f32.mrf.mxu0
      %v1842 = vadd.f32 %v1753, %v1841
      %1843 = vmatmul.bf16.gmra.mxu0 %v1121
      %v1844 = vpop.f32.mrf.mxu0
      %v1845 = vadd.f32 %v1756, %v1844
      %v1846 = vpop.f32.mrf.mxu0
      %v1847 = vadd.f32 %v1758, %v1846
      %1848 = vmatmul.bf16.gmra.mxu0 %v1124
      %v1849 = vpop.f32.mrf.mxu0
      %v1850 = vadd.f32 %v1761, %v1849
      %v1851 = vpop.f32.mrf.mxu0
      %v1852 = vadd.f32 %v1763, %v1851
      %1853 = vmatmul.bf16.gmra.mxu0 %v1127
      %v1854 = vpop.f32.mrf.mxu0
      %v1855 = vadd.f32 %v1766, %v1854
      %v1856 = vpop.f32.mrf.mxu0
      %v1857 = vadd.f32 %v1768, %v1856
      %1858 = vmatmul.bf16.gmra.mxu0 %v1130
      %v1859 = vpop.f32.mrf.mxu0
      %v1860 = vadd.f32 %v1771, %v1859
      %v1861 = vpop.f32.mrf.mxu0
      %v1862 = vadd.f32 %v1773, %v1861
      %1863 = vmatmul.bf16.gmra.mxu0 %v1133
      %v1864 = vpop.f32.mrf.mxu0
      %v1865 = vadd.f32 %v1776, %v1864
      %v1866 = vpop.f32.mrf.mxu0
      %v1867 = vadd.f32 %v1778, %v1866
      %1868 = vmatmul.bf16.gmra.mxu0 %v1136
      %v1869 = vpop.f32.mrf.mxu0
      %v1870 = vadd.f32 %v1781, %v1869
      %v1871 = vpop.f32.mrf.mxu0
      %v1872 = vadd.f32 %v1783, %v1871
      %1873 = vdwg.mxu0
      %1874 = vmatpush.bf16.msra.mxu0 %v1494
      %1875 = vmatpush.bf16.msra.mxu0 %v1493
      %1876 = vmatpush.bf16.msra.mxu0 %v1492
      %1877 = vmatpush.bf16.msra.mxu0 %v1491
      %1878 = vmatpush.bf16.msra.mxu0 %v1490
      %1879 = vmatpush.bf16.msra.mxu0 %v1489
      %1880 = vmatpush.bf16.msra.mxu0 %v1488
      %1881 = vmatpush.bf16.msra.mxu0 %v1487
      %1882 = vmatmul.bf16.gmra.mxu0 %v814
      %v1883 = vpop.f32.mrf.mxu0
      %v1884 = vadd.f32 %v1795, %v1883
      %v1885 = vpop.f32.mrf.mxu0
      %v1886 = vadd.f32 %v1797, %v1885
      %1887 = vmatmul.bf16.gmra.mxu0 %v815
      %v1888 = vpop.f32.mrf.mxu0
      %v1889 = vadd.f32 %v1800, %v1888
      %v1890 = vpop.f32.mrf.mxu0
      %v1891 = vadd.f32 %v1802, %v1890
      %1892 = vmatmul.bf16.gmra.mxu0 %v816
      %v1893 = vpop.f32.mrf.mxu0
      %v1894 = vadd.f32 %v1805, %v1893
      %v1895 = vpop.f32.mrf.mxu0
      %v1896 = vadd.f32 %v1807, %v1895
      %1897 = vmatmul.bf16.gmra.mxu0 %v817
      %v1898 = vpop.f32.mrf.mxu0
      %v1899 = vadd.f32 %v1810, %v1898
      %v1900 = vpop.f32.mrf.mxu0
      %v1901 = vadd.f32 %v1812, %v1900
      %1902 = vmatmul.bf16.gmra.mxu0 %v818
      %v1903 = vpop.f32.mrf.mxu0
      %v1904 = vadd.f32 %v1815, %v1903
      %v1905 = vpop.f32.mrf.mxu0
      %v1906 = vadd.f32 %v1817, %v1905
      %1907 = vmatmul.bf16.gmra.mxu0 %v819
      %v1908 = vpop.f32.mrf.mxu0
      %v1909 = vadd.f32 %v1820, %v1908
      %v1910 = vpop.f32.mrf.mxu0
      %v1911 = vadd.f32 %v1822, %v1910
      %1912 = vmatmul.bf16.gmra.mxu0 %v820
      %v1913 = vpop.f32.mrf.mxu0
      %v1914 = vadd.f32 %v1825, %v1913
      %v1915 = vpop.f32.mrf.mxu0
      %v1916 = vadd.f32 %v1827, %v1915
      %1917 = vmatmul.bf16.gmra.mxu0 %v821
      %v1918 = vpop.f32.mrf.mxu0
      %v1919 = vadd.f32 %v1830, %v1918
      %v1920 = vpop.f32.mrf.mxu0
      %v1921 = vadd.f32 %v1832, %v1920
      %1922 = vmatmul.bf16.gmra.mxu0 %v822
      %v1923 = vpop.f32.mrf.mxu0
      %v1924 = vadd.f32 %v1835, %v1923
      %v1925 = vpop.f32.mrf.mxu0
      %v1926 = vadd.f32 %v1837, %v1925
      %1927 = vmatmul.bf16.gmra.mxu0 %v823
      %v1928 = vpop.f32.mrf.mxu0
      %v1929 = vadd.f32 %v1840, %v1928
      %v1930 = vpop.f32.mrf.mxu0
      %v1931 = vadd.f32 %v1842, %v1930
      %1932 = vmatmul.bf16.gmra.mxu0 %v824
      %v1933 = vpop.f32.mrf.mxu0
      %v1934 = vadd.f32 %v1845, %v1933
      %v1935 = vpop.f32.mrf.mxu0
      %v1936 = vadd.f32 %v1847, %v1935
      %1937 = vmatmul.bf16.gmra.mxu0 %v825
      %v1938 = vpop.f32.mrf.mxu0
      %v1939 = vadd.f32 %v1850, %v1938
      %v1940 = vpop.f32.mrf.mxu0
      %v1941 = vadd.f32 %v1852, %v1940
      %1942 = vmatmul.bf16.gmra.mxu0 %v826
      %v1943 = vpop.f32.mrf.mxu0
      %v1944 = vadd.f32 %v1855, %v1943
      %v1945 = vpop.f32.mrf.mxu0
      %v1946 = vadd.f32 %v1857, %v1945
      %1947 = vmatmul.bf16.gmra.mxu0 %v827
      %v1948 = vpop.f32.mrf.mxu0
      %v1949 = vadd.f32 %v1860, %v1948
      %v1950 = vpop.f32.mrf.mxu0
      %v1951 = vadd.f32 %v1862, %v1950
      %1952 = vmatmul.bf16.gmra.mxu0 %v828
      %v1953 = vpop.f32.mrf.mxu0
      %v1954 = vadd.f32 %v1865, %v1953
      %v1955 = vpop.f32.mrf.mxu0
      %v1956 = vadd.f32 %v1867, %v1955
      %1957 = vmatmul.bf16.gmra.mxu0 %v829
      %v1958 = vpop.f32.mrf.mxu0
      %v1959 = vadd.f32 %v1870, %v1958
      %v1960 = vpop.f32.mrf.mxu0
      %v1961 = vadd.f32 %v1872, %v1960
      %1962 = vdwg.mxu0
      %1963 = vmatpush.bf16.msra.mxu0 %v1502
      %1964 = vmatpush.bf16.msra.mxu0 %v1501
      %1965 = vmatpush.bf16.msra.mxu0 %v1500
      %1966 = vmatpush.bf16.msra.mxu0 %v1499
      %1967 = vmatpush.bf16.msra.mxu0 %v1498
      %1968 = vmatpush.bf16.msra.mxu0 %v1497
      %1969 = vmatpush.bf16.msra.mxu0 %v1496
      %1970 = vmatpush.bf16.msra.mxu0 %v1495
      %1971 = vmatmul.bf16.gmra.mxu0 %v871
      %v1972 = vpop.f32.mrf.mxu0
      %v1973 = vadd.f32 %v1884, %v1972
      %v1974 = vpop.f32.mrf.mxu0
      %v1975 = vadd.f32 %v1886, %v1974
      %1976 = vmatmul.bf16.gmra.mxu0 %v883
      %v1977 = vpop.f32.mrf.mxu0
      %v1978 = vadd.f32 %v1889, %v1977
      %v1979 = vpop.f32.mrf.mxu0
      %v1980 = vadd.f32 %v1891, %v1979
      %1981 = vmatmul.bf16.gmra.mxu0 %v895
      %v1982 = vpop.f32.mrf.mxu0
      %v1983 = vadd.f32 %v1894, %v1982
      %v1984 = vpop.f32.mrf.mxu0
      %v1985 = vadd.f32 %v1896, %v1984
      %1986 = vmatmul.bf16.gmra.mxu0 %v907
      %v1987 = vpop.f32.mrf.mxu0
      %v1988 = vadd.f32 %v1899, %v1987
      %v1989 = vpop.f32.mrf.mxu0
      %v1990 = vadd.f32 %v1901, %v1989
      %1991 = vmatmul.bf16.gmra.mxu0 %v919
      %v1992 = vpop.f32.mrf.mxu0
      %v1993 = vadd.f32 %v1904, %v1992
      %v1994 = vpop.f32.mrf.mxu0
      %v1995 = vadd.f32 %v1906, %v1994
      %1996 = vmatmul.bf16.gmra.mxu0 %v931
      %v1997 = vpop.f32.mrf.mxu0
      %v1998 = vadd.f32 %v1909, %v1997
      %v1999 = vpop.f32.mrf.mxu0
      %v2000 = vadd.f32 %v1911, %v1999
      %2001 = vmatmul.bf16.gmra.mxu0 %v943
      %v2002 = vpop.f32.mrf.mxu0
      %v2003 = vadd.f32 %v1914, %v2002
      %v2004 = vpop.f32.mrf.mxu0
      %v2005 = vadd.f32 %v1916, %v2004
      %2006 = vmatmul.bf16.gmra.mxu0 %v955
      %v2007 = vpop.f32.mrf.mxu0
      %v2008 = vadd.f32 %v1919, %v2007
      %v2009 = vpop.f32.mrf.mxu0
      %v2010 = vadd.f32 %v1921, %v2009
      %2011 = vmatmul.bf16.gmra.mxu0 %v967
      %v2012 = vpop.f32.mrf.mxu0
      %v2013 = vadd.f32 %v1924, %v2012
      %v2014 = vpop.f32.mrf.mxu0
      %v2015 = vadd.f32 %v1926, %v2014
      %2016 = vmatmul.bf16.gmra.mxu0 %v979
      %v2017 = vpop.f32.mrf.mxu0
      %v2018 = vadd.f32 %v1929, %v2017
      %v2019 = vpop.f32.mrf.mxu0
      %v2020 = vadd.f32 %v1931, %v2019
      %2021 = vmatmul.bf16.gmra.mxu0 %v991
      %v2022 = vpop.f32.mrf.mxu0
      %v2023 = vadd.f32 %v1934, %v2022
      %v2024 = vpop.f32.mrf.mxu0
      %v2025 = vadd.f32 %v1936, %v2024
      %2026 = vmatmul.bf16.gmra.mxu0 %v1003
      %v2027 = vpop.f32.mrf.mxu0
      %v2028 = vadd.f32 %v1939, %v2027
      %v2029 = vpop.f32.mrf.mxu0
      %v2030 = vadd.f32 %v1941, %v2029
      %2031 = vmatmul.bf16.gmra.mxu0 %v1015
      %v2032 = vpop.f32.mrf.mxu0
      %v2033 = vadd.f32 %v1944, %v2032
      %v2034 = vpop.f32.mrf.mxu0
      %v2035 = vadd.f32 %v1946, %v2034
      %2036 = vmatmul.bf16.gmra.mxu0 %v1027
      %v2037 = vpop.f32.mrf.mxu0
      %v2038 = vadd.f32 %v1949, %v2037
      %v2039 = vpop.f32.mrf.mxu0
      %v2040 = vadd.f32 %v1951, %v2039
      %2041 = vmatmul.bf16.gmra.mxu0 %v1039
      %v2042 = vpop.f32.mrf.mxu0
      %v2043 = vadd.f32 %v1954, %v2042
      %v2044 = vpop.f32.mrf.mxu0
      %v2045 = vadd.f32 %v1956, %v2044
      %2046 = vmatmul.bf16.gmra.mxu0 %v1164
      %v2047 = vpop.f32.mrf.mxu0
      %v2048 = vadd.f32 %v1959, %v2047
      %v2049 = vpop.f32.mrf.mxu0
      %v2050 = vadd.f32 %v1961, %v2049
      %2051 = vdwg.mxu0
      %2052 = vmatpush.bf16.msra.mxu0 %v1510
      %2053 = vmatpush.bf16.msra.mxu0 %v1509
      %2054 = vmatpush.bf16.msra.mxu0 %v1508
      %2055 = vmatpush.bf16.msra.mxu0 %v1507
      %2056 = vmatpush.bf16.msra.mxu0 %v1506
      %2057 = vmatpush.bf16.msra.mxu0 %v1505
      %2058 = vmatpush.bf16.msra.mxu0 %v1504
      %2059 = vmatpush.bf16.msra.mxu0 %v1503
      %2060 = vmatmul.bf16.gmra.mxu0 %v1094
      %v2061 = vpop.f32.mrf.mxu0
      %v2062 = vadd.f32 %v1973, %v2061
      %v2063 = vpop.f32.mrf.mxu0
      %v2064 = vadd.f32 %v1975, %v2063
      %2065 = vmatmul.bf16.gmra.mxu0 %v1097
      %v2066 = vpop.f32.mrf.mxu0
      %v2067 = vadd.f32 %v1978, %v2066
      %v2068 = vpop.f32.mrf.mxu0
      %v2069 = vadd.f32 %v1980, %v2068
      %2070 = vmatmul.bf16.gmra.mxu0 %v1100
      %v2071 = vpop.f32.mrf.mxu0
      %v2072 = vadd.f32 %v1983, %v2071
      %v2073 = vpop.f32.mrf.mxu0
      %v2074 = vadd.f32 %v1985, %v2073
      %2075 = vmatmul.bf16.gmra.mxu0 %v1103
      %v2076 = vpop.f32.mrf.mxu0
      %v2077 = vadd.f32 %v1988, %v2076
      %v2078 = vpop.f32.mrf.mxu0
      %v2079 = vadd.f32 %v1990, %v2078
      %2080 = vmatmul.bf16.gmra.mxu0 %v1106
      %v2081 = vpop.f32.mrf.mxu0
      %v2082 = vadd.f32 %v1993, %v2081
      %v2083 = vpop.f32.mrf.mxu0
      %v2084 = vadd.f32 %v1995, %v2083
      %2085 = vmatmul.bf16.gmra.mxu0 %v1109
      %v2086 = vpop.f32.mrf.mxu0
      %v2087 = vadd.f32 %v1998, %v2086
      %v2088 = vpop.f32.mrf.mxu0
      %v2089 = vadd.f32 %v2000, %v2088
      %2090 = vmatmul.bf16.gmra.mxu0 %v1112
      %v2091 = vpop.f32.mrf.mxu0
      %v2092 = vadd.f32 %v2003, %v2091
      %v2093 = vpop.f32.mrf.mxu0
      %v2094 = vadd.f32 %v2005, %v2093
      %2095 = vmatmul.bf16.gmra.mxu0 %v1115
      %v2096 = vpop.f32.mrf.mxu0
      %v2097 = vadd.f32 %v2008, %v2096
      %v2098 = vpop.f32.mrf.mxu0
      %v2099 = vadd.f32 %v2010, %v2098
      %2100 = vmatmul.bf16.gmra.mxu0 %v1118
      %v2101 = vpop.f32.mrf.mxu0
      %v2102 = vadd.f32 %v2013, %v2101
      %v2103 = vpop.f32.mrf.mxu0
      %v2104 = vadd.f32 %v2015, %v2103
      %2105 = vmatmul.bf16.gmra.mxu0 %v1121
      %v2106 = vpop.f32.mrf.mxu0
      %v2107 = vadd.f32 %v2018, %v2106
      %v2108 = vpop.f32.mrf.mxu0
      %v2109 = vadd.f32 %v2020, %v2108
      %2110 = vmatmul.bf16.gmra.mxu0 %v1124
      %v2111 = vpop.f32.mrf.mxu0
      %v2112 = vadd.f32 %v2023, %v2111
      %v2113 = vpop.f32.mrf.mxu0
      %v2114 = vadd.f32 %v2025, %v2113
      %2115 = vmatmul.bf16.gmra.mxu0 %v1127
      %v2116 = vpop.f32.mrf.mxu0
      %v2117 = vadd.f32 %v2028, %v2116
      %v2118 = vpop.f32.mrf.mxu0
      %v2119 = vadd.f32 %v2030, %v2118
      %2120 = vmatmul.bf16.gmra.mxu0 %v1130
      %v2121 = vpop.f32.mrf.mxu0
      %v2122 = vadd.f32 %v2033, %v2121
      %v2123 = vpop.f32.mrf.mxu0
      %v2124 = vadd.f32 %v2035, %v2123
      %2125 = vmatmul.bf16.gmra.mxu0 %v1133
      %v2126 = vpop.f32.mrf.mxu0
      %v2127 = vadd.f32 %v2038, %v2126
      %v2128 = vpop.f32.mrf.mxu0
      %v2129 = vadd.f32 %v2040, %v2128
      %2130 = vmatmul.bf16.gmra.mxu0 %v1136
      %v2131 = vpop.f32.mrf.mxu0
      %v2132 = vadd.f32 %v2043, %v2131
      %v2133 = vpop.f32.mrf.mxu0
      %v2134 = vadd.f32 %v2045, %v2133
      %2135 = vmatmul.bf16.gmra.mxu0 %v1170
      %v2136 = vpop.f32.mrf.mxu0
      %v2137 = vadd.f32 %v2048, %v2136
      %v2138 = vpop.f32.mrf.mxu0
      %v2139 = vadd.f32 %v2050, %v2138
      %2140 = vdwg.mxu0
      %2141 = vmatpush.bf16.msra.mxu0 %v1518
      %2142 = vmatpush.bf16.msra.mxu0 %v1517
      %2143 = vmatpush.bf16.msra.mxu0 %v1516
      %2144 = vmatpush.bf16.msra.mxu0 %v1515
      %2145 = vmatpush.bf16.msra.mxu0 %v1514
      %2146 = vmatpush.bf16.msra.mxu0 %v1513
      %2147 = vmatpush.bf16.msra.mxu0 %v1512
      %2148 = vmatpush.bf16.msra.mxu0 %v1511
      %2149 = vmatmul.bf16.gmra.mxu0 %v815
      %v2150 = vpop.f32.mrf.mxu0
      %v2151 = vadd.f32 %v2062, %v2150
      %v2152 = vpop.f32.mrf.mxu0
      %v2153 = vadd.f32 %v2064, %v2152
      %2154 = vmatmul.bf16.gmra.mxu0 %v816
      %v2155 = vpop.f32.mrf.mxu0
      %v2156 = vadd.f32 %v2067, %v2155
      %v2157 = vpop.f32.mrf.mxu0
      %v2158 = vadd.f32 %v2069, %v2157
      %2159 = vmatmul.bf16.gmra.mxu0 %v817
      %v2160 = vpop.f32.mrf.mxu0
      %v2161 = vadd.f32 %v2072, %v2160
      %v2162 = vpop.f32.mrf.mxu0
      %v2163 = vadd.f32 %v2074, %v2162
      %2164 = vmatmul.bf16.gmra.mxu0 %v818
      %v2165 = vpop.f32.mrf.mxu0
      %v2166 = vadd.f32 %v2077, %v2165
      %v2167 = vpop.f32.mrf.mxu0
      %v2168 = vadd.f32 %v2079, %v2167
      %2169 = vmatmul.bf16.gmra.mxu0 %v819
      %v2170 = vpop.f32.mrf.mxu0
      %v2171 = vadd.f32 %v2082, %v2170
      %v2172 = vpop.f32.mrf.mxu0
      %v2173 = vadd.f32 %v2084, %v2172
      %2174 = vmatmul.bf16.gmra.mxu0 %v820
      %v2175 = vpop.f32.mrf.mxu0
      %v2176 = vadd.f32 %v2087, %v2175
      %v2177 = vpop.f32.mrf.mxu0
      %v2178 = vadd.f32 %v2089, %v2177
      %2179 = vmatmul.bf16.gmra.mxu0 %v821
      %v2180 = vpop.f32.mrf.mxu0
      %v2181 = vadd.f32 %v2092, %v2180
      %v2182 = vpop.f32.mrf.mxu0
      %v2183 = vadd.f32 %v2094, %v2182
      %2184 = vmatmul.bf16.gmra.mxu0 %v822
      %v2185 = vpop.f32.mrf.mxu0
      %v2186 = vadd.f32 %v2097, %v2185
      %v2187 = vpop.f32.mrf.mxu0
      %v2188 = vadd.f32 %v2099, %v2187
      %2189 = vmatmul.bf16.gmra.mxu0 %v823
      %v2190 = vpop.f32.mrf.mxu0
      %v2191 = vadd.f32 %v2102, %v2190
      %v2192 = vpop.f32.mrf.mxu0
      %v2193 = vadd.f32 %v2104, %v2192
      %2194 = vmatmul.bf16.gmra.mxu0 %v824
      %v2195 = vpop.f32.mrf.mxu0
      %v2196 = vadd.f32 %v2107, %v2195
      %v2197 = vpop.f32.mrf.mxu0
      %v2198 = vadd.f32 %v2109, %v2197
      %2199 = vmatmul.bf16.gmra.mxu0 %v825
      %v2200 = vpop.f32.mrf.mxu0
      %v2201 = vadd.f32 %v2112, %v2200
      %v2202 = vpop.f32.mrf.mxu0
      %v2203 = vadd.f32 %v2114, %v2202
      %2204 = vmatmul.bf16.gmra.mxu0 %v826
      %v2205 = vpop.f32.mrf.mxu0
      %v2206 = vadd.f32 %v2117, %v2205
      %v2207 = vpop.f32.mrf.mxu0
      %v2208 = vadd.f32 %v2119, %v2207
      %2209 = vmatmul.bf16.gmra.mxu0 %v827
      %v2210 = vpop.f32.mrf.mxu0
      %v2211 = vadd.f32 %v2122, %v2210
      %v2212 = vpop.f32.mrf.mxu0
      %v2213 = vadd.f32 %v2124, %v2212
      %2214 = vmatmul.bf16.gmra.mxu0 %v828
      %v2215 = vpop.f32.mrf.mxu0
      %v2216 = vadd.f32 %v2127, %v2215
      %v2217 = vpop.f32.mrf.mxu0
      %v2218 = vadd.f32 %v2129, %v2217
      %2219 = vmatmul.bf16.gmra.mxu0 %v829
      %v2220 = vpop.f32.mrf.mxu0
      %v2221 = vadd.f32 %v2132, %v2220
      %v2222 = vpop.f32.mrf.mxu0
      %v2223 = vadd.f32 %v2134, %v2222
      %2224 = vmatmul.bf16.gmra.mxu0 %v813
      %v2225 = vpop.f32.mrf.mxu0
      %v2226 = vadd.f32 %v2137, %v2225
      %v2227 = vpop.f32.mrf.mxu0
      %v2228 = vadd.f32 %v2139, %v2227
      %2229 = vdwg.mxu0
      %2230 = vmatpush.bf16.msra.mxu0 %v1526
      %2231 = vmatpush.bf16.msra.mxu0 %v1525
      %2232 = vmatpush.bf16.msra.mxu0 %v1524
      %2233 = vmatpush.bf16.msra.mxu0 %v1523
      %2234 = vmatpush.bf16.msra.mxu0 %v1522
      %2235 = vmatpush.bf16.msra.mxu0 %v1521
      %2236 = vmatpush.bf16.msra.mxu0 %v1520
      %2237 = vmatpush.bf16.msra.mxu0 %v1519
      %2238 = vmatmul.bf16.gmra.mxu0 %v883
      %v2239 = vpop.f32.mrf.mxu0
      %v2240 = vadd.f32 %v2151, %v2239
      %v2241 = vpop.f32.mrf.mxu0
      %v2242 = vadd.f32 %v2153, %v2241
      %2243 = vmatmul.bf16.gmra.mxu0 %v895
      %v2244 = vpop.f32.mrf.mxu0
      %v2245 = vadd.f32 %v2156, %v2244
      %v2246 = vpop.f32.mrf.mxu0
      %v2247 = vadd.f32 %v2158, %v2246
      %2248 = vmatmul.bf16.gmra.mxu0 %v907
      %v2249 = vpop.f32.mrf.mxu0
      %v2250 = vadd.f32 %v2161, %v2249
      %v2251 = vpop.f32.mrf.mxu0
      %v2252 = vadd.f32 %v2163, %v2251
      %2253 = vmatmul.bf16.gmra.mxu0 %v919
      %v2254 = vpop.f32.mrf.mxu0
      %v2255 = vadd.f32 %v2166, %v2254
      %v2256 = vpop.f32.mrf.mxu0
      %v2257 = vadd.f32 %v2168, %v2256
      %2258 = vmatmul.bf16.gmra.mxu0 %v931
      %v2259 = vpop.f32.mrf.mxu0
      %v2260 = vadd.f32 %v2171, %v2259
      %v2261 = vpop.f32.mrf.mxu0
      %v2262 = vadd.f32 %v2173, %v2261
      %2263 = vmatmul.bf16.gmra.mxu0 %v943
      %v2264 = vpop.f32.mrf.mxu0
      %v2265 = vadd.f32 %v2176, %v2264
      %v2266 = vpop.f32.mrf.mxu0
      %v2267 = vadd.f32 %v2178, %v2266
      %2268 = vmatmul.bf16.gmra.mxu0 %v955
      %v2269 = vpop.f32.mrf.mxu0
      %v2270 = vadd.f32 %v2181, %v2269
      %v2271 = vpop.f32.mrf.mxu0
      %v2272 = vadd.f32 %v2183, %v2271
      %2273 = vmatmul.bf16.gmra.mxu0 %v967
      %v2274 = vpop.f32.mrf.mxu0
      %v2275 = vadd.f32 %v2186, %v2274
      %v2276 = vpop.f32.mrf.mxu0
      %v2277 = vadd.f32 %v2188, %v2276
      %2278 = vmatmul.bf16.gmra.mxu0 %v979
      %v2279 = vpop.f32.mrf.mxu0
      %v2280 = vadd.f32 %v2191, %v2279
      %v2281 = vpop.f32.mrf.mxu0
      %v2282 = vadd.f32 %v2193, %v2281
      %2283 = vmatmul.bf16.gmra.mxu0 %v991
      %v2284 = vpop.f32.mrf.mxu0
      %v2285 = vadd.f32 %v2196, %v2284
      %v2286 = vpop.f32.mrf.mxu0
      %v2287 = vadd.f32 %v2198, %v2286
      %2288 = vmatmul.bf16.gmra.mxu0 %v1003
      %v2289 = vpop.f32.mrf.mxu0
      %v2290 = vadd.f32 %v2201, %v2289
      %v2291 = vpop.f32.mrf.mxu0
      %v2292 = vadd.f32 %v2203, %v2291
      %2293 = vmatmul.bf16.gmra.mxu0 %v1015
      %v2294 = vpop.f32.mrf.mxu0
      %v2295 = vadd.f32 %v2206, %v2294
      %v2296 = vpop.f32.mrf.mxu0
      %v2297 = vadd.f32 %v2208, %v2296
      %2298 = vmatmul.bf16.gmra.mxu0 %v1027
      %v2299 = vpop.f32.mrf.mxu0
      %v2300 = vadd.f32 %v2211, %v2299
      %v2301 = vpop.f32.mrf.mxu0
      %v2302 = vadd.f32 %v2213, %v2301
      %2303 = vmatmul.bf16.gmra.mxu0 %v1039
      %v2304 = vpop.f32.mrf.mxu0
      %v2305 = vadd.f32 %v2216, %v2304
      %v2306 = vpop.f32.mrf.mxu0
      %v2307 = vadd.f32 %v2218, %v2306
      %2308 = vmatmul.bf16.gmra.mxu0 %v1164
      %v2309 = vpop.f32.mrf.mxu0
      %v2310 = vadd.f32 %v2221, %v2309
      %v2311 = vpop.f32.mrf.mxu0
      %v2312 = vadd.f32 %v2223, %v2311
      %2313 = vmatmul.bf16.gmra.mxu0 %v859
      %v2314 = vpop.f32.mrf.mxu0
      %v2315 = vadd.f32 %v2226, %v2314
      %v2316 = vpop.f32.mrf.mxu0
      %v2317 = vadd.f32 %v2228, %v2316
      %2318 = vdwg.mxu0
      %2319 = vmatpush.bf16.msra.mxu0 %v1534
      %2320 = vmatpush.bf16.msra.mxu0 %v1533
      %2321 = vmatpush.bf16.msra.mxu0 %v1532
      %2322 = vmatpush.bf16.msra.mxu0 %v1531
      %2323 = vmatpush.bf16.msra.mxu0 %v1530
      %2324 = vmatpush.bf16.msra.mxu0 %v1529
      %2325 = vmatpush.bf16.msra.mxu0 %v1528
      %2326 = vmatpush.bf16.msra.mxu0 %v1527
      %2327 = vmatmul.bf16.gmra.mxu0 %v1097
      %v2328 = vpop.f32.mrf.mxu0
      %v2329 = vadd.f32 %v2240, %v2328
      %v2330 = vpop.f32.mrf.mxu0
      %v2331 = vadd.f32 %v2242, %v2330
      %2332 = vmatmul.bf16.gmra.mxu0 %v1100
      %v2333 = vpop.f32.mrf.mxu0
      %v2334 = vadd.f32 %v2245, %v2333
      %v2335 = vpop.f32.mrf.mxu0
      %v2336 = vadd.f32 %v2247, %v2335
      %2337 = vmatmul.bf16.gmra.mxu0 %v1103
      %v2338 = vpop.f32.mrf.mxu0
      %v2339 = vadd.f32 %v2250, %v2338
      %v2340 = vpop.f32.mrf.mxu0
      %v2341 = vadd.f32 %v2252, %v2340
      %2342 = vmatmul.bf16.gmra.mxu0 %v1106
      %v2343 = vpop.f32.mrf.mxu0
      %v2344 = vadd.f32 %v2255, %v2343
      %v2345 = vpop.f32.mrf.mxu0
      %v2346 = vadd.f32 %v2257, %v2345
      %2347 = vmatmul.bf16.gmra.mxu0 %v1109
      %v2348 = vpop.f32.mrf.mxu0
      %v2349 = vadd.f32 %v2260, %v2348
      %v2350 = vpop.f32.mrf.mxu0
      %v2351 = vadd.f32 %v2262, %v2350
      %2352 = vmatmul.bf16.gmra.mxu0 %v1112
      %v2353 = vpop.f32.mrf.mxu0
      %v2354 = vadd.f32 %v2265, %v2353
      %v2355 = vpop.f32.mrf.mxu0
      %v2356 = vadd.f32 %v2267, %v2355
      %2357 = vmatmul.bf16.gmra.mxu0 %v1115
      %v2358 = vpop.f32.mrf.mxu0
      %v2359 = vadd.f32 %v2270, %v2358
      %v2360 = vpop.f32.mrf.mxu0
      %v2361 = vadd.f32 %v2272, %v2360
      %2362 = vmatmul.bf16.gmra.mxu0 %v1118
      %v2363 = vpop.f32.mrf.mxu0
      %v2364 = vadd.f32 %v2275, %v2363
      %v2365 = vpop.f32.mrf.mxu0
      %v2366 = vadd.f32 %v2277, %v2365
      %2367 = vmatmul.bf16.gmra.mxu0 %v1121
      %v2368 = vpop.f32.mrf.mxu0
      %v2369 = vadd.f32 %v2280, %v2368
      %v2370 = vpop.f32.mrf.mxu0
      %v2371 = vadd.f32 %v2282, %v2370
      %2372 = vmatmul.bf16.gmra.mxu0 %v1124
      %v2373 = vpop.f32.mrf.mxu0
      %v2374 = vadd.f32 %v2285, %v2373
      %v2375 = vpop.f32.mrf.mxu0
      %v2376 = vadd.f32 %v2287, %v2375
      %2377 = vmatmul.bf16.gmra.mxu0 %v1127
      %v2378 = vpop.f32.mrf.mxu0
      %v2379 = vadd.f32 %v2290, %v2378
      %v2380 = vpop.f32.mrf.mxu0
      %v2381 = vadd.f32 %v2292, %v2380
      %2382 = vmatmul.bf16.gmra.mxu0 %v1130
      %v2383 = vpop.f32.mrf.mxu0
      %v2384 = vadd.f32 %v2295, %v2383
      %v2385 = vpop.f32.mrf.mxu0
      %v2386 = vadd.f32 %v2297, %v2385
      %2387 = vmatmul.bf16.gmra.mxu0 %v1133
      %v2388 = vpop.f32.mrf.mxu0
      %v2389 = vadd.f32 %v2300, %v2388
      %v2390 = vpop.f32.mrf.mxu0
      %v2391 = vadd.f32 %v2302, %v2390
      %2392 = vmatmul.bf16.gmra.mxu0 %v1136
      %v2393 = vpop.f32.mrf.mxu0
      %v2394 = vadd.f32 %v2305, %v2393
      %v2395 = vpop.f32.mrf.mxu0
      %v2396 = vadd.f32 %v2307, %v2395
      %2397 = vmatmul.bf16.gmra.mxu0 %v1170
      %v2398 = vpop.f32.mrf.mxu0
      %v2399 = vadd.f32 %v2310, %v2398
      %v2400 = vpop.f32.mrf.mxu0
      %v2401 = vadd.f32 %v2312, %v2400
      %2402 = vmatmul.bf16.gmra.mxu0 %v1091
      %v2403 = vpop.f32.mrf.mxu0
      %v2404 = vadd.f32 %v2315, %v2403
      %v2405 = vpop.f32.mrf.mxu0
      %v2406 = vadd.f32 %v2317, %v2405
      %2407 = vdwg.mxu0
      %2408 = vst [vmem:[%s258] sm:$0xff] %v2329
      %2409 = vst [vmem:[%s258 + $0x8] sm:$0xff] %v2331
      %2410 = vst [vmem:[%s258 + $0x10] sm:$0xff] %v2334
      %2411 = vst [vmem:[%s258 + $0x18] sm:$0xff] %v2336
      %2412 = vst [vmem:[%s258 + $0x20] sm:$0xff] %v2339
      %2413 = vst [vmem:[%s258 + $0x28] sm:$0xff] %v2341
      %2414 = vst [vmem:[%s258 + $0x30] sm:$0xff] %v2344
      %2415 = vst [vmem:[%s258 + $0x38] sm:$0xff] %v2346
      %2416 = vst [vmem:[%s258 + $0x40] sm:$0xff] %v2349
      %2417 = vst [vmem:[%s258 + $0x48] sm:$0xff] %v2351
      %2418 = vst [vmem:[%s258 + $0x50] sm:$0xff] %v2354
      %2419 = vst [vmem:[%s258 + $0x58] sm:$0xff] %v2356
      %2420 = vst [vmem:[%s258 + $0x60] sm:$0xff] %v2359
      %2421 = vst [vmem:[%s258 + $0x68] sm:$0xff] %v2361
      %2422 = vst [vmem:[%s258 + $0x70] sm:$0xff] %v2364
      %2423 = vst [vmem:[%s258 + $0x78] sm:$0xff] %v2366
      %2424 = vst [vmem:[%s258 + $0x80] sm:$0xff] %v2369
      %2425 = vst [vmem:[%s258 + $0x88] sm:$0xff] %v2371
      %2426 = vst [vmem:[%s258 + $0x90] sm:$0xff] %v2374
      %2427 = vst [vmem:[%s258 + $0x98] sm:$0xff] %v2376
      %2428 = vst [vmem:[%s258 + $0xa0] sm:$0xff] %v2379
      %2429 = vst [vmem:[%s258 + $0xa8] sm:$0xff] %v2381
      %2430 = vst [vmem:[%s258 + $0xb0] sm:$0xff] %v2384
      %2431 = vst [vmem:[%s258 + $0xb8] sm:$0xff] %v2386
      %2432 = vst [vmem:[%s258 + $0xc0] sm:$0xff] %v2389
      %2433 = vst [vmem:[%s258 + $0xc8] sm:$0xff] %v2391
      %2434 = vst [vmem:[%s258 + $0xd0] sm:$0xff] %v2394
      %2435 = vst [vmem:[%s258 + $0xd8] sm:$0xff] %v2396
      %2436 = vst [vmem:[%s258 + $0xe0] sm:$0xff] %v2399
      %2437 = vst [vmem:[%s258 + $0xe8] sm:$0xff] %v2401
      %2438 = vst [vmem:[%s258 + $0xf0] sm:$0xff] %v2404
      %2439 = vst [vmem:[%s258 + $0xf8] sm:$0xff] %v2406
      %v2440 = vadd.f32 %v2329, %v2331
      %v2441 = vadd.f32 %v2440, %v2334
      %v2442 = vadd.f32 %v2441, %v2336
      %v2443 = vadd.f32 %v2442, %v2339
      %v2444 = vadd.f32 %v2443, %v2341
      %v2445 = vadd.f32 %v2444, %v2344
      %v2446 = vadd.f32 %v2445, %v2346
      %v2447 = vadd.f32 %v2446, %v2349
      %v2448 = vadd.f32 %v2447, %v2351
      %v2449 = vadd.f32 %v2448, %v2354
      %v2450 = vadd.f32 %v2449, %v2356
      %v2451 = vadd.f32 %v2450, %v2359
      %v2452 = vadd.f32 %v2451, %v2361
      %v2453 = vadd.f32 %v2452, %v2364
      %v2454 = vadd.f32 %v2453, %v2366
      %v2455 = vadd.f32 %v2454, %v2369
      %v2456 = vadd.f32 %v2455, %v2371
      %v2457 = vadd.f32 %v2456, %v2374
      %v2458 = vadd.f32 %v2457, %v2376
      %v2459 = vadd.f32 %v2458, %v2379
      %v2460 = vadd.f32 %v2459, %v2381
      %v2461 = vadd.f32 %v2460, %v2384
      %v2462 = vadd.f32 %v2461, %v2386
      %v2463 = vadd.f32 %v2462, %v2389
      %v2464 = vadd.f32 %v2463, %v2391
      %v2465 = vadd.f32 %v2464, %v2394
      %v2466 = vadd.f32 %v2465, %v2396
      %v2467 = vadd.f32 %v2466, %v2399
      %v2468 = vadd.f32 %v2467, %v2401
      %v2469 = vadd.f32 %v2468, %v2404
      %v2470 = vadd.f32 %v2469, %v2406
      %v2471 = vrot.slane %v2470, 4
      %v2472 = vadd.f32 %v2470, %v2471
      %v2473 = vrot.slane %v2472, 2
      %v2474 = vadd.f32 %v2472, %v2473
      %v2475 = vrot.slane %v2474, 1
      %v2476 = vadd.f32 %v2474, %v2475
      %v2477 = vmul.f32 %v2329, %v2329
      %v2478 = vmul.f32 %v2331, %v2331
      %v2479 = vmul.f32 %v2334, %v2334
      %v2480 = vmul.f32 %v2336, %v2336
      %v2481 = vmul.f32 %v2339, %v2339
      %v2482 = vmul.f32 %v2341, %v2341
      %v2483 = vmul.f32 %v2344, %v2344
      %v2484 = vmul.f32 %v2346, %v2346
      %v2485 = vmul.f32 %v2349, %v2349
      %v2486 = vmul.f32 %v2351, %v2351
      %v2487 = vmul.f32 %v2354, %v2354
      %v2488 = vmul.f32 %v2356, %v2356
      %v2489 = vmul.f32 %v2359, %v2359
      %v2490 = vmul.f32 %v2361, %v2361
      %v2491 = vmul.f32 %v2364, %v2364
      %v2492 = vmul.f32 %v2366, %v2366
      %v2493 = vmul.f32 %v2369, %v2369
      %v2494 = vmul.f32 %v2371, %v2371
      %v2495 = vmul.f32 %v2374, %v2374
      %v2496 = vmul.f32 %v2376, %v2376
      %v2497 = vmul.f32 %v2379, %v2379
      %v2498 = vmul.f32 %v2381, %v2381
      %v2499 = vmul.f32 %v2384, %v2384
      %v2500 = vmul.f32 %v2386, %v2386
      %v2501 = vmul.f32 %v2389, %v2389
      %v2502 = vmul.f32 %v2391, %v2391
      %v2503 = vmul.f32 %v2394, %v2394
      %v2504 = vmul.f32 %v2396, %v2396
      %v2505 = vmul.f32 %v2399, %v2399
      %v2506 = vmul.f32 %v2401, %v2401
      %v2507 = vmul.f32 %v2404, %v2404
      %v2508 = vmul.f32 %v2406, %v2406
      %v2509 = vadd.f32 %v2477, %v2478
      %v2510 = vadd.f32 %v2509, %v2479
      %v2511 = vadd.f32 %v2510, %v2480
      %v2512 = vadd.f32 %v2511, %v2481
      %v2513 = vadd.f32 %v2512, %v2482
      %v2514 = vadd.f32 %v2513, %v2483
      %v2515 = vadd.f32 %v2514, %v2484
      %v2516 = vadd.f32 %v2515, %v2485
      %v2517 = vadd.f32 %v2516, %v2486
      %v2518 = vadd.f32 %v2517, %v2487
      %v2519 = vadd.f32 %v2518, %v2488
      %v2520 = vadd.f32 %v2519, %v2489
      %v2521 = vadd.f32 %v2520, %v2490
      %v2522 = vadd.f32 %v2521, %v2491
      %v2523 = vadd.f32 %v2522, %v2492
      %v2524 = vadd.f32 %v2523, %v2493
      %v2525 = vadd.f32 %v2524, %v2494
      %v2526 = vadd.f32 %v2525, %v2495
      %v2527 = vadd.f32 %v2526, %v2496
      %v2528 = vadd.f32 %v2527, %v2497
      %v2529 = vadd.f32 %v2528, %v2498
      %v2530 = vadd.f32 %v2529, %v2499
      %v2531 = vadd.f32 %v2530, %v2500
      %v2532 = vadd.f32 %v2531, %v2501
      %v2533 = vadd.f32 %v2532, %v2502
      %v2534 = vadd.f32 %v2533, %v2503
      %v2535 = vadd.f32 %v2534, %v2504
      %v2536 = vadd.f32 %v2535, %v2505
      %v2537 = vadd.f32 %v2536, %v2506
      %v2538 = vadd.f32 %v2537, %v2507
      %v2539 = vadd.f32 %v2538, %v2508
      %v2540 = vrot.slane %v2539, 4
      %v2541 = vadd.f32 %v2539, %v2540
      %v2542 = vrot.slane %v2541, 2
      %v2543 = vadd.f32 %v2541, %v2542
      %v2544 = vrot.slane %v2543, 1
      %v2545 = vadd.f32 %v2543, %v2544
      %vm2546 = vcmask 1040384
      %v2547 = vsel %vm2546, %v2476, %v2545
      %2548 = vst [vmem:[%s262] sm:$0x3] %v2547
      %p2549 = scmp.lt.s32.totalorder %s18, 1
      %s2550 = scalar_select %p2549, %s18, 1
      %s2551 = smul.addr %s2550, 32
      %s2552 = smul.addr %s2551, 8
      %s2553 = scalar_lea.vmem %s5, %s2552
      %p2554 = scmp.lt.s32.totalorder %s18, 1
      %s2555 = scalar_select %p2554, %s18, 1
      %s2556 = smul.addr %s2555, 2
      %s2557 = scalar_lea.vmem %s6, %s2556
      // Predicated region
      $region41: #{basic_block_pallas.4} parent=39 // pred_check
        %p2558 = pneg %p146
      $region42: #{basic_block_pallas.4} parent=39 // pred_check_branch
        %2560 = sbr.rel (%p2558) target = $region44
      $region43: #{basic_block_pallas.4} parent=39 // pred_region
        _
      $region44: #{basic_block_pallas.4} parent=39 // pred_fallthru
        _
      // Predicated region
      $region45: #{basic_block_pallas.4} parent=39 // pred_check
        %p2561 = pneg %p172
      $region46: #{basic_block_pallas.4} parent=39 // pred_check_branch
        %2563 = sbr.rel (%p2561) target = $region48
      $region47: #{basic_block_pallas.4} parent=39 // pred_region
        _
      $region48: #{basic_block_pallas.4} parent=39 // pred_fallthru
        _
    $region40: #{basic_block_pallas.4} parent=5 // pred_fallthru
      _
    %p2564 = scmp.le.s32.totalorder 2, %s13
    // Predicated region
    $region49: #{basic_block_pallas.4} parent=5 // pred_check
      %p2565 = pneg %p2564
    $region50: #{basic_block_pallas.4} parent=5 // pred_check_branch
      %2567 = sbr.rel (%p2565) target = $region52
    $region51: #{basic_block_pallas.4} parent=5 // pred_region
      %s2568 = ssub.s32 %s13, 2
      // Predicated region
      $region53: #{basic_block_pallas.4} parent=51 // pred_check
        %p2569 = pneg %p152
      $region54: #{basic_block_pallas.4} parent=51 // pred_check_branch
        %2571 = sbr.rel (%p2569) target = $region56
      $region55: #{basic_block_pallas.4} parent=51 // pred_region
        %p2572 = scmp.lt.s32.totalorder %s19, 1
        %s2573 = scalar_select %p2572, %s19, 1
        %s2574 = smul.addr %s2573, 32
        %s2575 = smul.addr %s2574, 8
        %s2576 = scalar_lea.vmem %s5, %s2575
      $region56: #{basic_block_pallas.4} parent=51 // pred_fallthru
        _
      // Predicated region
      $region57: #{basic_block_pallas.4} parent=51 // pred_check
        %p2577 = pneg %p178
      $region58: #{basic_block_pallas.4} parent=51 // pred_check_branch
        %2579 = sbr.rel (%p2577) target = $region60
      $region59: #{basic_block_pallas.4} parent=51 // pred_region
        %p2580 = scmp.lt.s32.totalorder %s19, 1
        %s2581 = scalar_select %p2580, %s19, 1
        %s2582 = smul.addr %s2581, 2
        %s2583 = scalar_lea.vmem %s6, %s2582
      $region60: #{basic_block_pallas.4} parent=51 // pred_fallthru
        _
    $region52: #{basic_block_pallas.4} parent=5 // pred_fallthru
      _
  $region6: #{basic_block_pallas.4} parent=0 // loop_footer
    %s17 = sadd.s32 1, %s13
  $region7: #{basic_block_pallas.4} parent=0 // loop_footer_branch
    %12 = sbr.rel target = $region3
  $region8: #{basic_block_pallas.4} parent=0 // loop_exit
    _

// kernel: basic_block_pallas.3
$region0: #{basic_block_pallas.3}
  #allocation0 [shape = 'u32[]', space=smem, size = 0x4, offset = 0x4, fixed_abs, tag = 'smem constant byte address 0x4 - core index']
  #allocation1 [shape = 'u32[72,128]{1,0:T(1,128)}', space=vmem, size = 0x9000, scoped, tag = 'internal scratch']
  %s0 = inlined_call_operand.vmem [shape: f32[2,16,16,128], index: 0, kind: input, shape index: {}]
  %s1 = inlined_call_operand.vmem [shape: bf16[1152,128], index: 1, kind: input, shape index: {}]
  %s2 = inlined_call_operand.vmem [shape: f32[1,1,128], index: 2, kind: input, shape index: {}]
  %s3 = inlined_call_operand.vmem [shape: f32[2,16,16,128], index: 3, kind: output, shape index: {0}]
  %s4 = inlined_call_operand.vmem [shape: f32[2,2,128], index: 4, kind: output, shape index: {1}]
  %5 = xla_tuple %s3, %s4
  %s6 = sld [smem:[#allocation0]]
  $region53: #{basic_block_pallas.3} parent=0
    _
  %s8 = ssub.s32 1, %s6
  %s9 = scalar_select 0, %s8, %s6
  loop: start=0, step=1, limit=4
  $region2: #{basic_block_pallas.3} parent=0 // loop_pre_header
    _
  $region3: #{basic_block_pallas.3} parent=0 // loop_header
    %s11 = sphi 0, %s15
    %p12 = scmp.ge.s32.totalorder %s11, 4
    %s21 = sphi 0, %s23
    %s24 = sphi 0, %s21
    %s25 = sphi 0, %s24
    %s41 = sphi 0, %s25
    %s45 = sphi 0, %s45
    %s47 = sphi 0, %s45
    %s48 = sphi 0, %s47
    %s62 = sphi 0, %s48
    %s66 = sphi 0, %s66
    %s68 = sphi 0, %s66
    %s69 = sphi 0, %s68
    %s83 = sphi 0, %s69
    %s89 = sphi 0, %s91
    %s92 = sphi 0, %s89
    %s93 = sphi 0, %s92
    %s109 = sphi 0, %s93
    %s115 = sphi 0, %s117
    %s118 = sphi 0, %s115
    %s119 = sphi 0, %s118
    %s135 = sphi 0, %s119
  $region4: #{basic_block_pallas.3} parent=0 // loop_header_branch
    %14 = sbr.rel (%p12) target = $region8
  $region5: #{basic_block_pallas.3} parent=0 // loop_body
    %s16 = ssub.s32 %s11, 1
    %s17 = ssub.s32 %s11, 2
    %s18 = sadd.s32 %s11, 1
    %s19 = ssub.s32 %s11, %s18
    %p20 = scmp.eq.s32.totalorder %s19, 0
    %s22 = sadd.s32 %s21, 1
    %s23 = scalar_select %p20, %s21, %s22
    %p26 = pneg %p20
    %p27 = scmp.eq.s32.totalorder %s11, 1
    %p28 = por %p26, %p27
    %p29 = scmp.ne.s32.totalorder %s21, %s24
    %p30 = scmp.eq.s32.totalorder %s11, 0
    %p31 = por %p29, %p30
    %p32 = scmp.ne.s32.totalorder %s21, %s24
    %p33 = scmp.eq.s32.totalorder %s16, 1
    %p34 = por %p32, %p33
    %p35 = scmp.ne.s32.totalorder %s24, %s25
    %p36 = scmp.eq.s32.totalorder %s16, 0
    %p37 = por %p35, %p36
    %p38 = scmp.ne.s32.totalorder %s24, %s25
    %p39 = scmp.eq.s32.totalorder %s17, 1
    %p40 = por %p38, %p39
    %p42 = scmp.ne.s32.totalorder %s25, %s41
    %p43 = scmp.eq.s32.totalorder %s17, 0
    %p44 = por %p42, %p43
    %s46 = sadd.s32 %s45, 1
    %p49 = scmp.eq.s32.totalorder %s11, 1
    %p50 = scmp.ne.s32.totalorder %s45, %s47
    %p51 = scmp.eq.s32.totalorder %s11, 0
    %p52 = por %p50, %p51
    %p53 = scmp.ne.s32.totalorder %s45, %s47
    %p54 = scmp.eq.s32.totalorder %s16, 1
    %p55 = por %p53, %p54
    %p56 = scmp.ne.s32.totalorder %s47, %s48
    %p57 = scmp.eq.s32.totalorder %s16, 0
    %p58 = por %p56, %p57
    %p59 = scmp.ne.s32.totalorder %s47, %s48
    %p60 = scmp.eq.s32.totalorder %s17, 1
    %p61 = por %p59, %p60
    %p63 = scmp.ne.s32.totalorder %s48, %s62
    %p64 = scmp.eq.s32.totalorder %s17, 0
    %p65 = por %p63, %p64
    %s67 = sadd.s32 %s66, 1
    %p70 = scmp.eq.s32.totalorder %s11, 1
    %p71 = scmp.ne.s32.totalorder %s66, %s68
    %p72 = scmp.eq.s32.totalorder %s11, 0
    %p73 = por %p71, %p72
    %p74 = scmp.ne.s32.totalorder %s66, %s68
    %p75 = scmp.eq.s32.totalorder %s16, 1
    %p76 = por %p74, %p75
    %p77 = scmp.ne.s32.totalorder %s68, %s69
    %p78 = scmp.eq.s32.totalorder %s16, 0
    %p79 = por %p77, %p78
    %p80 = scmp.ne.s32.totalorder %s68, %s69
    %p81 = scmp.eq.s32.totalorder %s17, 1
    %p82 = por %p80, %p81
    %p84 = scmp.ne.s32.totalorder %s69, %s83
    %p85 = scmp.eq.s32.totalorder %s17, 0
    %p86 = por %p84, %p85
    %s87 = ssub.s32 %s11, %s18
    %p88 = scmp.eq.s32.totalorder %s87, 0
    %s90 = sadd.s32 %s89, 1
    %s91 = scalar_select %p88, %s89, %s90
    %p94 = pneg %p88
    %p95 = scmp.eq.s32.totalorder %s11, 1
    %p96 = por %p94, %p95
    %p97 = scmp.ne.s32.totalorder %s89, %s92
    %p98 = scmp.eq.s32.totalorder %s11, 0
    %p99 = por %p97, %p98
    %p100 = scmp.ne.s32.totalorder %s89, %s92
    %p101 = scmp.eq.s32.totalorder %s16, 1
    %p102 = por %p100, %p101
    %p103 = scmp.ne.s32.totalorder %s92, %s93
    %p104 = scmp.eq.s32.totalorder %s16, 0
    %p105 = por %p103, %p104
    %p106 = scmp.ne.s32.totalorder %s92, %s93
    %p107 = scmp.eq.s32.totalorder %s17, 1
    %p108 = por %p106, %p107
    %p110 = scmp.ne.s32.totalorder %s93, %s109
    %p111 = scmp.eq.s32.totalorder %s17, 0
    %p112 = por %p110, %p111
    %s113 = ssub.s32 %s11, %s18
    %p114 = scmp.eq.s32.totalorder %s113, 0
    %s116 = sadd.s32 %s115, 1
    %s117 = scalar_select %p114, %s115, %s116
    %p120 = pneg %p114
    %p121 = scmp.eq.s32.totalorder %s11, 1
    %p122 = por %p120, %p121
    %p123 = scmp.ne.s32.totalorder %s115, %s118
    %p124 = scmp.eq.s32.totalorder %s11, 0
    %p125 = por %p123, %p124
    %p126 = scmp.ne.s32.totalorder %s115, %s118
    %p127 = scmp.eq.s32.totalorder %s16, 1
    %p128 = por %p126, %p127
    %p129 = scmp.ne.s32.totalorder %s118, %s119
    %p130 = scmp.eq.s32.totalorder %s16, 0
    %p131 = por %p129, %p130
    %p132 = scmp.ne.s32.totalorder %s118, %s119
    %p133 = scmp.eq.s32.totalorder %s17, 1
    %p134 = por %p132, %p133
    %p136 = scmp.ne.s32.totalorder %s119, %s135
    %p137 = scmp.eq.s32.totalorder %s17, 0
    %p138 = por %p136, %p137
    %p139 = scmp.le.s32.totalorder 1, %s11
    %p140 = scmp.lt.s32.totalorder %s11, 3
    %p141 = pnand %p139, %p140
    %p142 = pneg %p141
    // Predicated region
    $region9: #{basic_block_pallas.3} parent=5 // pred_check
      _
    $region10: #{basic_block_pallas.3} parent=5 // pred_check_branch
      %144 = sbr.rel (%p141) target = $region12
    $region11: #{basic_block_pallas.3} parent=5 // pred_region
      %s145 = ssub.s32 %s11, 1
      // Predicated region
      $region13: #{basic_block_pallas.3} parent=11 // pred_check
        %p146 = pneg %p58
      $region14: #{basic_block_pallas.3} parent=11 // pred_check_branch
        %148 = sbr.rel (%p146) target = $region16
      $region15: #{basic_block_pallas.3} parent=11 // pred_region
        _
      $region16: #{basic_block_pallas.3} parent=11 // pred_fallthru
        _
      // Predicated region
      $region17: #{basic_block_pallas.3} parent=11 // pred_check
        %p149 = pneg %p79
      $region18: #{basic_block_pallas.3} parent=11 // pred_check_branch
        %151 = sbr.rel (%p149) target = $region20
      $region19: #{basic_block_pallas.3} parent=11 // pred_region
        _
      $region20: #{basic_block_pallas.3} parent=11 // pred_fallthru
        _
    $region12: #{basic_block_pallas.3} parent=5 // pred_fallthru
      _
    %p152 = scmp.lt.s32.totalorder %s11, 2
    // Predicated region
    $region21: #{basic_block_pallas.3} parent=5 // pred_check
      %p153 = pneg %p152
    $region22: #{basic_block_pallas.3} parent=5 // pred_check_branch
      %155 = sbr.rel (%p153) target = $region24
    $region23: #{basic_block_pallas.3} parent=5 // pred_region
      // Predicated region
      $region25: #{basic_block_pallas.3} parent=23 // pred_check
        %p156 = pneg %p31
      $region26: #{basic_block_pallas.3} parent=23 // pred_check_branch
        %158 = sbr.rel (%p156) target = $region28
      $region27: #{basic_block_pallas.3} parent=23 // pred_region
        %p159 = scmp.lt.s32.totalorder %s11, 1
        %s160 = scalar_select %p159, %s11, 1
        %s161 = smul.addr %s160, 32
        %s162 = smul.addr %s161, 8
        %s163 = scalar_lea.vmem %s0, %s162
      $region28: #{basic_block_pallas.3} parent=23 // pred_fallthru
        _
    $region24: #{basic_block_pallas.3} parent=5 // pred_fallthru
      _
    %p164 = scmp.le.s32.totalorder 1, %s11
    %p165 = scmp.lt.s32.totalorder %s11, 3
    %p166 = pnand %p164, %p165
    %p167 = pneg %p166
    // Predicated region
    $region29: #{basic_block_pallas.3} parent=5 // pred_check
      _
    $region30: #{basic_block_pallas.3} parent=5 // pred_check_branch
      %169 = sbr.rel (%p166) target = $region32
    $region31: #{basic_block_pallas.3} parent=5 // pred_region
      %s170 = ssub.s32 %s11, 1
      %p171 = scmp.lt.s32.totalorder %s16, 1
      %s172 = scalar_select %p171, %s16, 1
      %s173 = smul.addr %s172, 32
      %s174 = smul.addr %s173, 8
      %s175 = scalar_lea.vmem %s0, %s174
      %p176 = pneg %p37
      %p177 = pneg %p34
      %p178 = pneg %p58
      %p179 = pneg %p55
      %p180 = pneg %p79
      %p181 = pneg %p76
      %p182 = pneg %p105
      %p183 = pneg %p102
      %p184 = scmp.lt.s32.totalorder %s16, 1
      %s185 = scalar_select %p184, %s16, 1
      %s186 = smul.addr %s185, 32
      %s187 = smul.addr %s186, 8
      %s188 = scalar_lea.vmem %s3, %s187
      %p189 = pneg %p131
      %p190 = pneg %p128
      %p191 = scmp.lt.s32.totalorder %s16, 1
      %s192 = scalar_select %p191, %s16, 1
      %s193 = smul.addr %s192, 2
      %s194 = scalar_lea.vmem %s4, %s193
      %p195 = scmp.lt.s32.totalorder %s16, 1
      %s196 = scalar_select %p195, %s16, 1
      %s197 = smul.addr %s196, 32
      %s198 = smul.addr %s197, 8
      %s199 = scalar_lea.vmem %s0, %s198
      %p200 = scmp.lt.s32.totalorder %s16, 1
      %s201 = scalar_select %p200, %s16, 1
      %s202 = smul.addr %s201, 32
      %s203 = smul.addr %s202, 8
      %s204 = scalar_lea.vmem %s3, %s203
      %p205 = scmp.lt.s32.totalorder %s16, 1
      %s206 = scalar_select %p205, %s16, 1
      %s207 = smul.addr %s206, 2
      %s208 = scalar_lea.vmem %s4, %s207
      %v210 = vld [vmem:[%s199] sm:$0xff]
      %v211 = vld [vmem:[%s199 + $0x8] sm:$0xff]
      %v212 = vld [vmem:[%s199 + $0x10] sm:$0xff]
      %v213 = vld [vmem:[%s199 + $0x18] sm:$0xff]
      %v214 = vld [vmem:[%s199 + $0x20] sm:$0xff]
      %v215 = vld [vmem:[%s199 + $0x28] sm:$0xff]
      %v216 = vld [vmem:[%s199 + $0x30] sm:$0xff]
      %v217 = vld [vmem:[%s199 + $0x38] sm:$0xff]
      %v218 = vld [vmem:[%s199 + $0x40] sm:$0xff]
      %v219 = vld [vmem:[%s199 + $0x48] sm:$0xff]
      %v220 = vld [vmem:[%s199 + $0x50] sm:$0xff]
      %v221 = vld [vmem:[%s199 + $0x58] sm:$0xff]
      %v222 = vld [vmem:[%s199 + $0x60] sm:$0xff]
      %v223 = vld [vmem:[%s199 + $0x68] sm:$0xff]
      %v224 = vld [vmem:[%s199 + $0x70] sm:$0xff]
      %v225 = vld [vmem:[%s199 + $0x78] sm:$0xff]
      %v226 = vld [vmem:[%s199 + $0x80] sm:$0xff]
      %v227 = vld [vmem:[%s199 + $0x88] sm:$0xff]
      %v228 = vld [vmem:[%s199 + $0x90] sm:$0xff]
      %v229 = vld [vmem:[%s199 + $0x98] sm:$0xff]
      %v230 = vld [vmem:[%s199 + $0xa0] sm:$0xff]
      %v231 = vld [vmem:[%s199 + $0xa8] sm:$0xff]
      %v232 = vld [vmem:[%s199 + $0xb0] sm:$0xff]
      %v233 = vld [vmem:[%s199 + $0xb8] sm:$0xff]
      %v234 = vld [vmem:[%s199 + $0xc0] sm:$0xff]
      %v235 = vld [vmem:[%s199 + $0xc8] sm:$0xff]
      %v236 = vld [vmem:[%s199 + $0xd0] sm:$0xff]
      %v237 = vld [vmem:[%s199 + $0xd8] sm:$0xff]
      %v238 = vld [vmem:[%s199 + $0xe0] sm:$0xff]
      %v239 = vld [vmem:[%s199 + $0xe8] sm:$0xff]
      %v240 = vld [vmem:[%s199 + $0xf0] sm:$0xff]
      %v241 = vld [vmem:[%s199 + $0xf8] sm:$0xff]
      %v242 = vld [vmem:[%s1] sm:$0xf]
      %v243 = vld [vmem:[%s1 + $0x4] sm:$0xf]
      %v244 = vld [vmem:[%s1 + $0x8] sm:$0xf]
      %v245 = vld [vmem:[%s1 + $0xc] sm:$0xf]
      %v246 = vld [vmem:[%s1 + $0x10] sm:$0xf]
      %v247 = vld [vmem:[%s1 + $0x14] sm:$0xf]
      %v248 = vld [vmem:[%s1 + $0x18] sm:$0xf]
      %v249 = vld [vmem:[%s1 + $0x1c] sm:$0xf]
      %v250 = vld [vmem:[%s1 + $0x20] sm:$0xf]
      %v251 = vld [vmem:[%s1 + $0x24] sm:$0xf]
      %v252 = vld [vmem:[%s1 + $0x28] sm:$0xf]
      %v253 = vld [vmem:[%s1 + $0x2c] sm:$0xf]
      %v254 = vld [vmem:[%s1 + $0x30] sm:$0xf]
      %v255 = vld [vmem:[%s1 + $0x34] sm:$0xf]
      %v256 = vld [vmem:[%s1 + $0x38] sm:$0xf]
      %v257 = vld [vmem:[%s1 + $0x3c] sm:$0xf]
      %v258 = vld [vmem:[%s1 + $0x40] sm:$0xf]
      %v259 = vld [vmem:[%s1 + $0x44] sm:$0xf]
      %v260 = vld [vmem:[%s1 + $0x48] sm:$0xf]
      %v261 = vld [vmem:[%s1 + $0x4c] sm:$0xf]
      %v262 = vld [vmem:[%s1 + $0x50] sm:$0xf]
      %v263 = vld [vmem:[%s1 + $0x54] sm:$0xf]
      %v264 = vld [vmem:[%s1 + $0x58] sm:$0xf]
      %v265 = vld [vmem:[%s1 + $0x5c] sm:$0xf]
      %v266 = vld [vmem:[%s1 + $0x60] sm:$0xf]
      %v267 = vld [vmem:[%s1 + $0x64] sm:$0xf]
      %v268 = vld [vmem:[%s1 + $0x68] sm:$0xf]
      %v269 = vld [vmem:[%s1 + $0x6c] sm:$0xf]
      %v270 = vld [vmem:[%s1 + $0x70] sm:$0xf]
      %v271 = vld [vmem:[%s1 + $0x74] sm:$0xf]
      %v272 = vld [vmem:[%s1 + $0x78] sm:$0xf]
      %v273 = vld [vmem:[%s1 + $0x7c] sm:$0xf]
      %v274 = vld [vmem:[%s1 + $0x80] sm:$0xf]
      %v275 = vld [vmem:[%s1 + $0x84] sm:$0xf]
      %v276 = vld [vmem:[%s1 + $0x88] sm:$0xf]
      %v277 = vld [vmem:[%s1 + $0x8c] sm:$0xf]
      %v278 = vld [vmem:[%s1 + $0x90] sm:$0xf]
      %v279 = vld [vmem:[%s1 + $0x94] sm:$0xf]
      %v280 = vld [vmem:[%s1 + $0x98] sm:$0xf]
      %v281 = vld [vmem:[%s1 + $0x9c] sm:$0xf]
      %v282 = vld [vmem:[%s1 + $0xa0] sm:$0xf]
      %v283 = vld [vmem:[%s1 + $0xa4] sm:$0xf]
      %v284 = vld [vmem:[%s1 + $0xa8] sm:$0xf]
      %v285 = vld [vmem:[%s1 + $0xac] sm:$0xf]
      %v286 = vld [vmem:[%s1 + $0xb0] sm:$0xf]
      %v287 = vld [vmem:[%s1 + $0xb4] sm:$0xf]
      %v288 = vld [vmem:[%s1 + $0xb8] sm:$0xf]
      %v289 = vld [vmem:[%s1 + $0xbc] sm:$0xf]
      %v290 = vld [vmem:[%s1 + $0xc0] sm:$0xf]
      %v291 = vld [vmem:[%s1 + $0xc4] sm:$0xf]
      %v292 = vld [vmem:[%s1 + $0xc8] sm:$0xf]
      %v293 = vld [vmem:[%s1 + $0xcc] sm:$0xf]
      %v294 = vld [vmem:[%s1 + $0xd0] sm:$0xf]
      %v295 = vld [vmem:[%s1 + $0xd4] sm:$0xf]
      %v296 = vld [vmem:[%s1 + $0xd8] sm:$0xf]
      %v297 = vld [vmem:[%s1 + $0xdc] sm:$0xf]
      %v298 = vld [vmem:[%s1 + $0xe0] sm:$0xf]
      %v299 = vld [vmem:[%s1 + $0xe4] sm:$0xf]
      %v300 = vld [vmem:[%s1 + $0xe8] sm:$0xf]
      %v301 = vld [vmem:[%s1 + $0xec] sm:$0xf]
      %v302 = vld [vmem:[%s1 + $0xf0] sm:$0xf]
      %v303 = vld [vmem:[%s1 + $0xf4] sm:$0xf]
      %v304 = vld [vmem:[%s1 + $0xf8] sm:$0xf]
      %v305 = vld [vmem:[%s1 + $0xfc] sm:$0xf]
      %v306 = vld [vmem:[%s1 + $0x100] sm:$0xf]
      %v307 = vld [vmem:[%s1 + $0x104] sm:$0xf]
      %v308 = vld [vmem:[%s1 + $0x108] sm:$0xf]
      %v309 = vld [vmem:[%s1 + $0x10c] sm:$0xf]
      %v310 = vld [vmem:[%s1 + $0x110] sm:$0xf]
      %v311 = vld [vmem:[%s1 + $0x114] sm:$0xf]
      %v312 = vld [vmem:[%s1 + $0x118] sm:$0xf]
      %v313 = vld [vmem:[%s1 + $0x11c] sm:$0xf]
      %v314 = vld [vmem:[%s1 + $0x120] sm:$0xf]
      %v315 = vld [vmem:[%s1 + $0x124] sm:$0xf]
      %v316 = vld [vmem:[%s1 + $0x128] sm:$0xf]
      %v317 = vld [vmem:[%s1 + $0x12c] sm:$0xf]
      %v318 = vld [vmem:[%s1 + $0x130] sm:$0xf]
      %v319 = vld [vmem:[%s1 + $0x134] sm:$0xf]
      %v320 = vld [vmem:[%s1 + $0x138] sm:$0xf]
      %v321 = vld [vmem:[%s1 + $0x13c] sm:$0xf]
      %v322 = vld [vmem:[%s1 + $0x140] sm:$0xf]
      %v323 = vld [vmem:[%s1 + $0x144] sm:$0xf]
      %v324 = vld [vmem:[%s1 + $0x148] sm:$0xf]
      %v325 = vld [vmem:[%s1 + $0x14c] sm:$0xf]
      %v326 = vld [vmem:[%s1 + $0x150] sm:$0xf]
      %v327 = vld [vmem:[%s1 + $0x154] sm:$0xf]
      %v328 = vld [vmem:[%s1 + $0x158] sm:$0xf]
      %v329 = vld [vmem:[%s1 + $0x15c] sm:$0xf]
      %v330 = vld [vmem:[%s1 + $0x160] sm:$0xf]
      %v331 = vld [vmem:[%s1 + $0x164] sm:$0xf]
      %v332 = vld [vmem:[%s1 + $0x168] sm:$0xf]
      %v333 = vld [vmem:[%s1 + $0x16c] sm:$0xf]
      %v334 = vld [vmem:[%s1 + $0x170] sm:$0xf]
      %v335 = vld [vmem:[%s1 + $0x174] sm:$0xf]
      %v336 = vld [vmem:[%s1 + $0x178] sm:$0xf]
      %v337 = vld [vmem:[%s1 + $0x17c] sm:$0xf]
      %v338 = vld [vmem:[%s1 + $0x180] sm:$0xf]
      %v339 = vld [vmem:[%s1 + $0x184] sm:$0xf]
      %v340 = vld [vmem:[%s1 + $0x188] sm:$0xf]
      %v341 = vld [vmem:[%s1 + $0x18c] sm:$0xf]
      %v342 = vld [vmem:[%s1 + $0x190] sm:$0xf]
      %v343 = vld [vmem:[%s1 + $0x194] sm:$0xf]
      %v344 = vld [vmem:[%s1 + $0x198] sm:$0xf]
      %v345 = vld [vmem:[%s1 + $0x19c] sm:$0xf]
      %v346 = vld [vmem:[%s1 + $0x1a0] sm:$0xf]
      %v347 = vld [vmem:[%s1 + $0x1a4] sm:$0xf]
      %v348 = vld [vmem:[%s1 + $0x1a8] sm:$0xf]
      %v349 = vld [vmem:[%s1 + $0x1ac] sm:$0xf]
      %v350 = vld [vmem:[%s1 + $0x1b0] sm:$0xf]
      %v351 = vld [vmem:[%s1 + $0x1b4] sm:$0xf]
      %v352 = vld [vmem:[%s1 + $0x1b8] sm:$0xf]
      %v353 = vld [vmem:[%s1 + $0x1bc] sm:$0xf]
      %v354 = vld [vmem:[%s1 + $0x1c0] sm:$0xf]
      %v355 = vld [vmem:[%s1 + $0x1c4] sm:$0xf]
      %v356 = vld [vmem:[%s1 + $0x1c8] sm:$0xf]
      %v357 = vld [vmem:[%s1 + $0x1cc] sm:$0xf]
      %v358 = vld [vmem:[%s1 + $0x1d0] sm:$0xf]
      %v359 = vld [vmem:[%s1 + $0x1d4] sm:$0xf]
      %v360 = vld [vmem:[%s1 + $0x1d8] sm:$0xf]
      %v361 = vld [vmem:[%s1 + $0x1dc] sm:$0xf]
      %v362 = vld [vmem:[%s1 + $0x1e0] sm:$0xf]
      %v363 = vld [vmem:[%s1 + $0x1e4] sm:$0xf]
      %v364 = vld [vmem:[%s1 + $0x1e8] sm:$0xf]
      %v365 = vld [vmem:[%s1 + $0x1ec] sm:$0xf]
      %v366 = vld [vmem:[%s1 + $0x1f0] sm:$0xf]
      %v367 = vld [vmem:[%s1 + $0x1f4] sm:$0xf]
      %v368 = vld [vmem:[%s1 + $0x1f8] sm:$0xf]
      %v369 = vld [vmem:[%s1 + $0x1fc] sm:$0xf]
      %v370 = vld [vmem:[%s1 + $0x200] sm:$0xf]
      %v371 = vld [vmem:[%s1 + $0x204] sm:$0xf]
      %v372 = vld [vmem:[%s1 + $0x208] sm:$0xf]
      %v373 = vld [vmem:[%s1 + $0x20c] sm:$0xf]
      %v374 = vld [vmem:[%s1 + $0x210] sm:$0xf]
      %v375 = vld [vmem:[%s1 + $0x214] sm:$0xf]
      %v376 = vld [vmem:[%s1 + $0x218] sm:$0xf]
      %v377 = vld [vmem:[%s1 + $0x21c] sm:$0xf]
      %v378 = vld [vmem:[%s1 + $0x220] sm:$0xf]
      %v379 = vld [vmem:[%s1 + $0x224] sm:$0xf]
      %v380 = vld [vmem:[%s1 + $0x228] sm:$0xf]
      %v381 = vld [vmem:[%s1 + $0x22c] sm:$0xf]
      %v382 = vld [vmem:[%s1 + $0x230] sm:$0xf]
      %v383 = vld [vmem:[%s1 + $0x234] sm:$0xf]
      %v384 = vld [vmem:[%s1 + $0x238] sm:$0xf]
      %v385 = vld [vmem:[%s1 + $0x23c] sm:$0xf]
      %v386 = vld [vmem:[%s2] sm:$0x1]
      %v387 = vpack.c.bf16 %v210, %v210
      %v388 = vpack.c.bf16 %v211, %v211
      %v389 = vpack.c.bf16 %v212, %v212
      %v390 = vpack.c.bf16 %v213, %v213
      %v391 = vpack.c.bf16 %v214, %v214
      %v392 = vpack.c.bf16 %v215, %v215
      %v393 = vpack.c.bf16 %v216, %v216
      %v394 = vpack.c.bf16 %v217, %v217
      %v395 = vpack.c.bf16 %v218, %v218
      %v396 = vpack.c.bf16 %v219, %v219
      %v397 = vpack.c.bf16 %v220, %v220
      %v398 = vpack.c.bf16 %v221, %v221
      %v399 = vpack.c.bf16 %v222, %v222
      %v400 = vpack.c.bf16 %v223, %v223
      %v401 = vpack.c.bf16 %v224, %v224
      %v402 = vpack.c.bf16 %v225, %v225
      %v403 = vpack.c.bf16 %v226, %v226
      %v404 = vpack.c.bf16 %v227, %v227
      %v405 = vpack.c.bf16 %v228, %v228
      %v406 = vpack.c.bf16 %v229, %v229
      %v407 = vpack.c.bf16 %v230, %v230
      %v408 = vpack.c.bf16 %v231, %v231
      %v409 = vpack.c.bf16 %v232, %v232
      %v410 = vpack.c.bf16 %v233, %v233
      %v411 = vpack.c.bf16 %v234, %v234
      %v412 = vpack.c.bf16 %v235, %v235
      %v413 = vpack.c.bf16 %v236, %v236
      %v414 = vpack.c.bf16 %v237, %v237
      %v415 = vpack.c.bf16 %v238, %v238
      %v416 = vpack.c.bf16 %v239, %v239
      %v417 = vpack.c.bf16 %v240, %v240
      %v418 = vpack.c.bf16 %v241, %v241
      %v451 = vunpack.c.l.b16 %v387
      %v452 = vunpack.c.l.b16 %v388
      %v453 = vunpack.c.l.b16 %v389
      %v454 = vunpack.c.l.b16 %v390
      %v455 = vunpack.c.l.b16 %v391
      %v456 = vunpack.c.l.b16 %v392
      %v457 = vunpack.c.l.b16 %v393
      %v458 = vunpack.c.l.b16 %v394
      %v459 = vunpack.c.l.b16 %v395
      %v460 = vunpack.c.l.b16 %v396
      %v461 = vunpack.c.l.b16 %v397
      %v462 = vunpack.c.l.b16 %v398
      %v463 = vunpack.c.l.b16 %v399
      %v464 = vunpack.c.l.b16 %v400
      %v465 = vunpack.c.l.b16 %v401
      %v466 = vunpack.c.l.b16 %v402
      %v467 = vunpack.c.l.b16 %v403
      %v468 = vunpack.c.l.b16 %v404
      %v469 = vunpack.c.l.b16 %v405
      %v470 = vunpack.c.l.b16 %v406
      %v471 = vunpack.c.l.b16 %v407
      %v472 = vunpack.c.l.b16 %v408
      %v473 = vunpack.c.l.b16 %v409
      %v474 = vunpack.c.l.b16 %v410
      %v475 = vunpack.c.l.b16 %v411
      %v476 = vunpack.c.l.b16 %v412
      %v477 = vunpack.c.l.b16 %v413
      %v478 = vunpack.c.l.b16 %v414
      %v479 = vunpack.c.l.b16 %v415
      %v480 = vunpack.c.l.b16 %v416
      %v481 = vunpack.c.l.b16 %v417
      %v482 = vunpack.c.l.b16 %v418
      %v483 = vpack.c.b16 %v452, %v451
      %v484 = vpack.c.b16 %v454, %v453
      %v485 = vpack.c.b16 %v456, %v455
      %v486 = vpack.c.b16 %v458, %v457
      %v487 = vpack.c.b16 %v460, %v459
      %v488 = vpack.c.b16 %v462, %v461
      %v489 = vpack.c.b16 %v464, %v463
      %v490 = vpack.c.b16 %v466, %v465
      %v491 = vpack.c.b16 %v468, %v467
      %v492 = vpack.c.b16 %v470, %v469
      %v493 = vpack.c.b16 %v472, %v471
      %v494 = vpack.c.b16 %v474, %v473
      %v495 = vpack.c.b16 %v476, %v475
      %v496 = vpack.c.b16 %v478, %v477
      %v497 = vpack.c.b16 %v480, %v479
      %v498 = vpack.c.b16 %v482, %v481
      %v500 = vshrl.u32 0, 16
      %v502 = vrot.slane %v500, 7
      %v503 = vshll.u32 0, 16
      %v505 = vor.u32 %v502, %v503
      %v507 = vshrl.u32 %v483, 16
      %v509 = vrot.slane %v507, 7
      %v510 = vshll.u32 %v483, 16
      %v512 = vor.u32 %v509, %v510
      %v514 = vshrl.u32 %v484, 16
      %v516 = vrot.slane %v514, 7
      %v517 = vshll.u32 %v484, 16
      %v519 = vor.u32 %v516, %v517
      %v521 = vshrl.u32 %v485, 16
      %v523 = vrot.slane %v521, 7
      %v524 = vshll.u32 %v485, 16
      %v526 = vor.u32 %v523, %v524
      %v528 = vshrl.u32 %v486, 16
      %v530 = vrot.slane %v528, 7
      %v531 = vshll.u32 %v486, 16
      %v533 = vor.u32 %v530, %v531
      %v535 = vshrl.u32 %v487, 16
      %v537 = vrot.slane %v535, 7
      %v538 = vshll.u32 %v487, 16
      %v540 = vor.u32 %v537, %v538
      %v542 = vshrl.u32 %v488, 16
      %v544 = vrot.slane %v542, 7
      %v545 = vshll.u32 %v488, 16
      %v547 = vor.u32 %v544, %v545
      %v549 = vshrl.u32 %v489, 16
      %v551 = vrot.slane %v549, 7
      %v552 = vshll.u32 %v489, 16
      %v554 = vor.u32 %v551, %v552
      %v556 = vshrl.u32 %v490, 16
      %v558 = vrot.slane %v556, 7
      %v559 = vshll.u32 %v490, 16
      %v561 = vor.u32 %v558, %v559
      %v563 = vshrl.u32 %v491, 16
      %v565 = vrot.slane %v563, 7
      %v566 = vshll.u32 %v491, 16
      %v568 = vor.u32 %v565, %v566
      %v570 = vshrl.u32 %v492, 16
      %v572 = vrot.slane %v570, 7
      %v573 = vshll.u32 %v492, 16
      %v575 = vor.u32 %v572, %v573
      %v577 = vshrl.u32 %v493, 16
      %v579 = vrot.slane %v577, 7
      %v580 = vshll.u32 %v493, 16
      %v582 = vor.u32 %v579, %v580
      %v584 = vshrl.u32 %v494, 16
      %v586 = vrot.slane %v584, 7
      %v587 = vshll.u32 %v494, 16
      %v589 = vor.u32 %v586, %v587
      %v591 = vshrl.u32 %v495, 16
      %v593 = vrot.slane %v591, 7
      %v594 = vshll.u32 %v495, 16
      %v596 = vor.u32 %v593, %v594
      %v598 = vshrl.u32 %v496, 16
      %v600 = vrot.slane %v598, 7
      %v601 = vshll.u32 %v496, 16
      %v603 = vor.u32 %v600, %v601
      %v605 = vshrl.u32 %v497, 16
      %v607 = vrot.slane %v605, 7
      %v608 = vshll.u32 %v497, 16
      %v610 = vor.u32 %v607, %v608
      %v612 = vshrl.u32 %v498, 16
      %v614 = vrot.slane %v612, 7
      %v615 = vshll.u32 %v498, 16
      %v617 = vor.u32 %v614, %v615
      %vm652 = vcmask 1040384
      %vm653 = vsmask.f32 256
      %vm654 = vmand %vm652, %vm653
      %v655 = vsel %vm654, 0, %v505
      %v656 = vsel %vm654, 0, %v512
      %v657 = vsel %vm654, 0, %v519
      %v658 = vsel %vm654, 0, %v526
      %v659 = vsel %vm654, 0, %v533
      %v660 = vsel %vm654, 0, %v540
      %v661 = vsel %vm654, 0, %v547
      %v662 = vsel %vm654, 0, %v554
      %v663 = vsel %vm654, 0, %v561
      %v664 = vsel %vm654, 0, %v568
      %v665 = vsel %vm654, 0, %v575
      %v666 = vsel %vm654, 0, %v582
      %v667 = vsel %vm654, 0, %v589
      %v668 = vsel %vm654, 0, %v596
      %v669 = vsel %vm654, 0, %v603
      %v670 = vsel %vm654, 0, %v610
      %v671 = vsel %vm654, 0, %v617
      %v672 = vsel %vm654, %v502, 0
      %v673 = vsel %vm654, %v509, 0
      %v674 = vsel %vm654, %v516, 0
      %v675 = vsel %vm654, %v523, 0
      %v676 = vsel %vm654, %v530, 0
      %v677 = vsel %vm654, %v537, 0
      %v678 = vsel %vm654, %v544, 0
      %v679 = vsel %vm654, %v551, 0
      %v680 = vsel %vm654, %v558, 0
      %v681 = vsel %vm654, %v565, 0
      %v682 = vsel %vm654, %v572, 0
      %v683 = vsel %vm654, %v579, 0
      %v684 = vsel %vm654, %v586, 0
      %v685 = vsel %vm654, %v593, 0
      %v686 = vsel %vm654, %v600, 0
      %v687 = vsel %vm654, %v607, 0
      %v688 = vsel %vm654, %v614, 0
      %vm689 = vsmask.f32 7424
      %v691 = vshrl.u32 %v655, 16
      %v693 = vshll.u32 %v655, 16
      %v695 = vrot.slane %v693, 1
      %v696 = vor.u32 %v691, %v695
      %v698 = vshll.u32 %v672, 16
      %v700 = vrot.slane %v698, 1
      %v701 = vsel %vm689, %v696, %v700
      %v703 = vshrl.u32 %v656, 16
      %v705 = vshll.u32 %v656, 16
      %v707 = vrot.slane %v705, 1
      %v708 = vor.u32 %v703, %v707
      %v710 = vshll.u32 %v673, 16
      %v712 = vrot.slane %v710, 1
      %v713 = vsel %vm689, %v708, %v712
      %v715 = vshrl.u32 %v657, 16
      %v717 = vshll.u32 %v657, 16
      %v719 = vrot.slane %v717, 1
      %v720 = vor.u32 %v715, %v719
      %v722 = vshll.u32 %v674, 16
      %v724 = vrot.slane %v722, 1
      %v725 = vsel %vm689, %v720, %v724
      %v727 = vshrl.u32 %v658, 16
      %v729 = vshll.u32 %v658, 16
      %v731 = vrot.slane %v729, 1
      %v732 = vor.u32 %v727, %v731
      %v734 = vshll.u32 %v675, 16
      %v736 = vrot.slane %v734, 1
      %v737 = vsel %vm689, %v732, %v736
      %v739 = vshrl.u32 %v659, 16
      %v741 = vshll.u32 %v659, 16
      %v743 = vrot.slane %v741, 1
      %v744 = vor.u32 %v739, %v743
      %v746 = vshll.u32 %v676, 16
      %v748 = vrot.slane %v746, 1
      %v749 = vsel %vm689, %v744, %v748
      %v751 = vshrl.u32 %v660, 16
      %v753 = vshll.u32 %v660, 16
      %v755 = vrot.slane %v753, 1
      %v756 = vor.u32 %v751, %v755
      %v758 = vshll.u32 %v677, 16
      %v760 = vrot.slane %v758, 1
      %v761 = vsel %vm689, %v756, %v760
      %v763 = vshrl.u32 %v661, 16
      %v765 = vshll.u32 %v661, 16
      %v767 = vrot.slane %v765, 1
      %v768 = vor.u32 %v763, %v767
      %v770 = vshll.u32 %v678, 16
      %v772 = vrot.slane %v770, 1
      %v773 = vsel %vm689, %v768, %v772
      %v775 = vshrl.u32 %v662, 16
      %v777 = vshll.u32 %v662, 16
      %v779 = vrot.slane %v777, 1
      %v780 = vor.u32 %v775, %v779
      %v782 = vshll.u32 %v679, 16
      %v784 = vrot.slane %v782, 1
      %v785 = vsel %vm689, %v780, %v784
      %v787 = vshrl.u32 %v663, 16
      %v789 = vshll.u32 %v663, 16
      %v791 = vrot.slane %v789, 1
      %v792 = vor.u32 %v787, %v791
      %v794 = vshll.u32 %v680, 16
      %v796 = vrot.slane %v794, 1
      %v797 = vsel %vm689, %v792, %v796
      %v799 = vshrl.u32 %v664, 16
      %v801 = vshll.u32 %v664, 16
      %v803 = vrot.slane %v801, 1
      %v804 = vor.u32 %v799, %v803
      %v806 = vshll.u32 %v681, 16
      %v808 = vrot.slane %v806, 1
      %v809 = vsel %vm689, %v804, %v808
      %v811 = vshrl.u32 %v665, 16
      %v813 = vshll.u32 %v665, 16
      %v815 = vrot.slane %v813, 1
      %v816 = vor.u32 %v811, %v815
      %v818 = vshll.u32 %v682, 16
      %v820 = vrot.slane %v818, 1
      %v821 = vsel %vm689, %v816, %v820
      %v823 = vshrl.u32 %v666, 16
      %v825 = vshll.u32 %v666, 16
      %v827 = vrot.slane %v825, 1
      %v828 = vor.u32 %v823, %v827
      %v830 = vshll.u32 %v683, 16
      %v832 = vrot.slane %v830, 1
      %v833 = vsel %vm689, %v828, %v832
      %v835 = vshrl.u32 %v667, 16
      %v837 = vshll.u32 %v667, 16
      %v839 = vrot.slane %v837, 1
      %v840 = vor.u32 %v835, %v839
      %v842 = vshll.u32 %v684, 16
      %v844 = vrot.slane %v842, 1
      %v845 = vsel %vm689, %v840, %v844
      %v847 = vshrl.u32 %v668, 16
      %v849 = vshll.u32 %v668, 16
      %v851 = vrot.slane %v849, 1
      %v852 = vor.u32 %v847, %v851
      %v854 = vshll.u32 %v685, 16
      %v856 = vrot.slane %v854, 1
      %v857 = vsel %vm689, %v852, %v856
      %v859 = vshrl.u32 %v669, 16
      %v861 = vshll.u32 %v669, 16
      %v863 = vrot.slane %v861, 1
      %v864 = vor.u32 %v859, %v863
      %v866 = vshll.u32 %v686, 16
      %v868 = vrot.slane %v866, 1
      %v869 = vsel %vm689, %v864, %v868
      %v871 = vshrl.u32 %v670, 16
      %v873 = vshll.u32 %v670, 16
      %v875 = vrot.slane %v873, 1
      %v876 = vor.u32 %v871, %v875
      %v878 = vshll.u32 %v687, 16
      %v880 = vrot.slane %v878, 1
      %v881 = vsel %vm689, %v876, %v880
      %vm930 = vcmask 1046528
      %v931 = vrot.slane %v655, 1
      %v932 = vrot.slane %v672, 1
      %v933 = vsel %vm930, %v931, %v932
      %v934 = vrot.slane %v656, 1
      %v935 = vrot.slane %v673, 1
      %v936 = vsel %vm930, %v934, %v935
      %v937 = vrot.slane %v657, 1
      %v938 = vrot.slane %v674, 1
      %v939 = vsel %vm930, %v937, %v938
      %v940 = vrot.slane %v658, 1
      %v941 = vrot.slane %v675, 1
      %v942 = vsel %vm930, %v940, %v941
      %v943 = vrot.slane %v659, 1
      %v944 = vrot.slane %v676, 1
      %v945 = vsel %vm930, %v943, %v944
      %v946 = vrot.slane %v660, 1
      %v947 = vrot.slane %v677, 1
      %v948 = vsel %vm930, %v946, %v947
      %v949 = vrot.slane %v661, 1
      %v950 = vrot.slane %v678, 1
      %v951 = vsel %vm930, %v949, %v950
      %v952 = vrot.slane %v662, 1
      %v953 = vrot.slane %v679, 1
      %v954 = vsel %vm930, %v952, %v953
      %v955 = vrot.slane %v663, 1
      %v956 = vrot.slane %v680, 1
      %v957 = vsel %vm930, %v955, %v956
      %v958 = vrot.slane %v664, 1
      %v959 = vrot.slane %v681, 1
      %v960 = vsel %vm930, %v958, %v959
      %v961 = vrot.slane %v665, 1
      %v962 = vrot.slane %v682, 1
      %v963 = vsel %vm930, %v961, %v962
      %v964 = vrot.slane %v666, 1
      %v965 = vrot.slane %v683, 1
      %v966 = vsel %vm930, %v964, %v965
      %v967 = vrot.slane %v667, 1
      %v968 = vrot.slane %v684, 1
      %v969 = vsel %vm930, %v967, %v968
      %v970 = vrot.slane %v668, 1
      %v971 = vrot.slane %v685, 1
      %v972 = vsel %vm930, %v970, %v971
      %v973 = vrot.slane %v669, 1
      %v974 = vrot.slane %v686, 1
      %v975 = vsel %vm930, %v973, %v974
      %v976 = vrot.slane %v670, 1
      %v977 = vrot.slane %v687, 1
      %v978 = vsel %vm930, %v976, %v977
      %v996 = vshrl.u32 %v671, 16
      %v998 = vshll.u32 %v671, 16
      %v1000 = vrot.slane %v998, 1
      %v1001 = vor.u32 %v996, %v1000
      %v1003 = vshll.u32 %v688, 16
      %v1005 = vrot.slane %v1003, 1
      %v1006 = vsel %vm689, %v1001, %v1005
      %v1010 = vrot.slane %v671, 1
      %v1011 = vrot.slane %v688, 1
      %v1012 = vsel %vm930, %v1010, %v1011
      %v1015 = vperm.slane %v386, 0
      %v1161 = vunpack.c.l.b16 %v242
      %v1162 = vunpack.c.l.b16 %v243
      %v1163 = vunpack.c.l.b16 %v244
      %v1164 = vunpack.c.l.b16 %v245
      %v1165 = vunpack.c.l.b16 %v246
      %v1166 = vunpack.c.l.b16 %v247
      %v1167 = vunpack.c.l.b16 %v248
      %v1168 = vunpack.c.l.b16 %v249
      %v1169 = vunpack.c.l.b16 %v250
      %v1170 = vunpack.c.l.b16 %v251
      %v1171 = vunpack.c.l.b16 %v252
      %v1172 = vunpack.c.l.b16 %v253
      %v1173 = vunpack.c.l.b16 %v254
      %v1174 = vunpack.c.l.b16 %v255
      %v1175 = vunpack.c.l.b16 %v256
      %v1176 = vunpack.c.l.b16 %v257
      %v1177 = vunpack.c.l.b16 %v258
      %v1178 = vunpack.c.l.b16 %v259
      %v1179 = vunpack.c.l.b16 %v260
      %v1180 = vunpack.c.l.b16 %v261
      %v1181 = vunpack.c.l.b16 %v262
      %v1182 = vunpack.c.l.b16 %v263
      %v1183 = vunpack.c.l.b16 %v264
      %v1184 = vunpack.c.l.b16 %v265
      %v1185 = vunpack.c.l.b16 %v266
      %v1186 = vunpack.c.l.b16 %v267
      %v1187 = vunpack.c.l.b16 %v268
      %v1188 = vunpack.c.l.b16 %v269
      %v1189 = vunpack.c.l.b16 %v270
      %v1190 = vunpack.c.l.b16 %v271
      %v1191 = vunpack.c.l.b16 %v272
      %v1192 = vunpack.c.l.b16 %v273
      %v1193 = vunpack.c.l.b16 %v274
      %v1194 = vunpack.c.l.b16 %v275
      %v1195 = vunpack.c.l.b16 %v276
      %v1196 = vunpack.c.l.b16 %v277
      %v1197 = vunpack.c.l.b16 %v278
      %v1198 = vunpack.c.l.b16 %v279
      %v1199 = vunpack.c.l.b16 %v280
      %v1200 = vunpack.c.l.b16 %v281
      %v1201 = vunpack.c.l.b16 %v282
      %v1202 = vunpack.c.l.b16 %v283
      %v1203 = vunpack.c.l.b16 %v284
      %v1204 = vunpack.c.l.b16 %v285
      %v1205 = vunpack.c.l.b16 %v286
      %v1206 = vunpack.c.l.b16 %v287
      %v1207 = vunpack.c.l.b16 %v288
      %v1208 = vunpack.c.l.b16 %v289
      %v1209 = vunpack.c.l.b16 %v290
      %v1210 = vunpack.c.l.b16 %v291
      %v1211 = vunpack.c.l.b16 %v292
      %v1212 = vunpack.c.l.b16 %v293
      %v1213 = vunpack.c.l.b16 %v294
      %v1214 = vunpack.c.l.b16 %v295
      %v1215 = vunpack.c.l.b16 %v296
      %v1216 = vunpack.c.l.b16 %v297
      %v1217 = vunpack.c.l.b16 %v298
      %v1218 = vunpack.c.l.b16 %v299
      %v1219 = vunpack.c.l.b16 %v300
      %v1220 = vunpack.c.l.b16 %v301
      %v1221 = vunpack.c.l.b16 %v302
      %v1222 = vunpack.c.l.b16 %v303
      %v1223 = vunpack.c.l.b16 %v304
      %v1224 = vunpack.c.l.b16 %v305
      %v1225 = vunpack.c.l.b16 %v306
      %v1226 = vunpack.c.l.b16 %v307
      %v1227 = vunpack.c.l.b16 %v308
      %v1228 = vunpack.c.l.b16 %v309
      %v1229 = vunpack.c.l.b16 %v310
      %v1230 = vunpack.c.l.b16 %v311
      %v1231 = vunpack.c.l.b16 %v312
      %v1232 = vunpack.c.l.b16 %v313
      %v1233 = vunpack.c.l.b16 %v314
      %v1234 = vunpack.c.l.b16 %v315
      %v1235 = vunpack.c.l.b16 %v316
      %v1236 = vunpack.c.l.b16 %v317
      %v1237 = vunpack.c.l.b16 %v318
      %v1238 = vunpack.c.l.b16 %v319
      %v1239 = vunpack.c.l.b16 %v320
      %v1240 = vunpack.c.l.b16 %v321
      %v1241 = vunpack.c.l.b16 %v322
      %v1242 = vunpack.c.l.b16 %v323
      %v1243 = vunpack.c.l.b16 %v324
      %v1244 = vunpack.c.l.b16 %v325
      %v1245 = vunpack.c.l.b16 %v326
      %v1246 = vunpack.c.l.b16 %v327
      %v1247 = vunpack.c.l.b16 %v328
      %v1248 = vunpack.c.l.b16 %v329
      %v1249 = vunpack.c.l.b16 %v330
      %v1250 = vunpack.c.l.b16 %v331
      %v1251 = vunpack.c.l.b16 %v332
      %v1252 = vunpack.c.l.b16 %v333
      %v1253 = vunpack.c.l.b16 %v334
      %v1254 = vunpack.c.l.b16 %v335
      %v1255 = vunpack.c.l.b16 %v336
      %v1256 = vunpack.c.l.b16 %v337
      %v1257 = vunpack.c.l.b16 %v338
      %v1258 = vunpack.c.l.b16 %v339
      %v1259 = vunpack.c.l.b16 %v340
      %v1260 = vunpack.c.l.b16 %v341
      %v1261 = vunpack.c.l.b16 %v342
      %v1262 = vunpack.c.l.b16 %v343
      %v1263 = vunpack.c.l.b16 %v344
      %v1264 = vunpack.c.l.b16 %v345
      %v1265 = vunpack.c.l.b16 %v346
      %v1266 = vunpack.c.l.b16 %v347
      %v1267 = vunpack.c.l.b16 %v348
      %v1268 = vunpack.c.l.b16 %v349
      %v1269 = vunpack.c.l.b16 %v350
      %v1270 = vunpack.c.l.b16 %v351
      %v1271 = vunpack.c.l.b16 %v352
      %v1272 = vunpack.c.l.b16 %v353
      %v1273 = vunpack.c.l.b16 %v354
      %v1274 = vunpack.c.l.b16 %v355
      %v1275 = vunpack.c.l.b16 %v356
      %v1276 = vunpack.c.l.b16 %v357
      %v1277 = vunpack.c.l.b16 %v358
      %v1278 = vunpack.c.l.b16 %v359
      %v1279 = vunpack.c.l.b16 %v360
      %v1280 = vunpack.c.l.b16 %v361
      %v1281 = vunpack.c.l.b16 %v362
      %v1282 = vunpack.c.l.b16 %v363
      %v1283 = vunpack.c.l.b16 %v364
      %v1284 = vunpack.c.l.b16 %v365
      %v1285 = vunpack.c.l.b16 %v366
      %v1286 = vunpack.c.l.b16 %v367
      %v1287 = vunpack.c.l.b16 %v368
      %v1288 = vunpack.c.l.b16 %v369
      %v1289 = vunpack.c.l.b16 %v370
      %v1290 = vunpack.c.l.b16 %v371
      %v1291 = vunpack.c.l.b16 %v372
      %v1292 = vunpack.c.l.b16 %v373
      %v1293 = vunpack.c.l.b16 %v374
      %v1294 = vunpack.c.l.b16 %v375
      %v1295 = vunpack.c.l.b16 %v376
      %v1296 = vunpack.c.l.b16 %v377
      %v1297 = vunpack.c.l.b16 %v378
      %v1298 = vunpack.c.l.b16 %v379
      %v1299 = vunpack.c.l.b16 %v380
      %v1300 = vunpack.c.l.b16 %v381
      %v1301 = vunpack.c.l.b16 %v382
      %v1302 = vunpack.c.l.b16 %v383
      %v1303 = vunpack.c.l.b16 %v384
      %v1304 = vunpack.c.l.b16 %v385
      %v1305 = vpack.c.b16 %v1162, %v1161
      %v1306 = vpack.c.b16 %v1164, %v1163
      %v1307 = vpack.c.b16 %v1166, %v1165
      %v1308 = vpack.c.b16 %v1168, %v1167
      %v1309 = vpack.c.b16 %v1170, %v1169
      %v1310 = vpack.c.b16 %v1172, %v1171
      %v1311 = vpack.c.b16 %v1174, %v1173
      %v1312 = vpack.c.b16 %v1176, %v1175
      %v1313 = vpack.c.b16 %v1178, %v1177
      %v1314 = vpack.c.b16 %v1180, %v1179
      %v1315 = vpack.c.b16 %v1182, %v1181
      %v1316 = vpack.c.b16 %v1184, %v1183
      %v1317 = vpack.c.b16 %v1186, %v1185
      %v1318 = vpack.c.b16 %v1188, %v1187
      %v1319 = vpack.c.b16 %v1190, %v1189
      %v1320 = vpack.c.b16 %v1192, %v1191
      %v1321 = vpack.c.b16 %v1194, %v1193
      %v1322 = vpack.c.b16 %v1196, %v1195
      %v1323 = vpack.c.b16 %v1198, %v1197
      %v1324 = vpack.c.b16 %v1200, %v1199
      %v1325 = vpack.c.b16 %v1202, %v1201
      %v1326 = vpack.c.b16 %v1204, %v1203
      %v1327 = vpack.c.b16 %v1206, %v1205
      %v1328 = vpack.c.b16 %v1208, %v1207
      %v1329 = vpack.c.b16 %v1210, %v1209
      %v1330 = vpack.c.b16 %v1212, %v1211
      %v1331 = vpack.c.b16 %v1214, %v1213
      %v1332 = vpack.c.b16 %v1216, %v1215
      %v1333 = vpack.c.b16 %v1218, %v1217
      %v1334 = vpack.c.b16 %v1220, %v1219
      %v1335 = vpack.c.b16 %v1222, %v1221
      %v1336 = vpack.c.b16 %v1224, %v1223
      %v1337 = vpack.c.b16 %v1226, %v1225
      %v1338 = vpack.c.b16 %v1228, %v1227
      %v1339 = vpack.c.b16 %v1230, %v1229
      %v1340 = vpack.c.b16 %v1232, %v1231
      %v1341 = vpack.c.b16 %v1234, %v1233
      %v1342 = vpack.c.b16 %v1236, %v1235
      %v1343 = vpack.c.b16 %v1238, %v1237
      %v1344 = vpack.c.b16 %v1240, %v1239
      %v1345 = vpack.c.b16 %v1242, %v1241
      %v1346 = vpack.c.b16 %v1244, %v1243
      %v1347 = vpack.c.b16 %v1246, %v1245
      %v1348 = vpack.c.b16 %v1248, %v1247
      %v1349 = vpack.c.b16 %v1250, %v1249
      %v1350 = vpack.c.b16 %v1252, %v1251
      %v1351 = vpack.c.b16 %v1254, %v1253
      %v1352 = vpack.c.b16 %v1256, %v1255
      %v1353 = vpack.c.b16 %v1258, %v1257
      %v1354 = vpack.c.b16 %v1260, %v1259
      %v1355 = vpack.c.b16 %v1262, %v1261
      %v1356 = vpack.c.b16 %v1264, %v1263
      %v1357 = vpack.c.b16 %v1266, %v1265
      %v1358 = vpack.c.b16 %v1268, %v1267
      %v1359 = vpack.c.b16 %v1270, %v1269
      %v1360 = vpack.c.b16 %v1272, %v1271
      %v1361 = vpack.c.b16 %v1274, %v1273
      %v1362 = vpack.c.b16 %v1276, %v1275
      %v1363 = vpack.c.b16 %v1278, %v1277
      %v1364 = vpack.c.b16 %v1280, %v1279
      %v1365 = vpack.c.b16 %v1282, %v1281
      %v1366 = vpack.c.b16 %v1284, %v1283
      %v1367 = vpack.c.b16 %v1286, %v1285
      %v1368 = vpack.c.b16 %v1288, %v1287
      %v1369 = vpack.c.b16 %v1290, %v1289
      %v1370 = vpack.c.b16 %v1292, %v1291
      %v1371 = vpack.c.b16 %v1294, %v1293
      %v1372 = vpack.c.b16 %v1296, %v1295
      %v1373 = vpack.c.b16 %v1298, %v1297
      %v1374 = vpack.c.b16 %v1300, %v1299
      %v1375 = vpack.c.b16 %v1302, %v1301
      %v1376 = vpack.c.b16 %v1304, %v1303
      %1449 = vmatpush.bf16.msra.mxu0 %v1312
      %1450 = vmatpush.bf16.msra.mxu0 %v1311
      %1451 = vmatpush.bf16.msra.mxu0 %v1310
      %1452 = vmatpush.bf16.msra.mxu0 %v1309
      %1453 = vmatpush.bf16.msra.mxu0 %v1308
      %1454 = vmatpush.bf16.msra.mxu0 %v1307
      %1455 = vmatpush.bf16.msra.mxu0 %v1306
      %1456 = vmatpush.bf16.msra.mxu0 %v1305
      %1457 = vmatmul.bf16.gmra.mxu0 %v655
      %v1458 = vpop.f32.mrf.mxu0
      %v1459 = vadd.f32 %v1015, %v1458
      %v1460 = vpop.f32.mrf.mxu0
      %v1461 = vadd.f32 %v1015, %v1460
      %1462 = vmatmul.bf16.gmra.mxu0 %v656
      %v1463 = vpop.f32.mrf.mxu0
      %v1464 = vadd.f32 %v1015, %v1463
      %v1465 = vpop.f32.mrf.mxu0
      %v1466 = vadd.f32 %v1015, %v1465
      %1467 = vmatmul.bf16.gmra.mxu0 %v657
      %v1468 = vpop.f32.mrf.mxu0
      %v1469 = vadd.f32 %v1015, %v1468
      %v1470 = vpop.f32.mrf.mxu0
      %v1471 = vadd.f32 %v1015, %v1470
      %1472 = vmatmul.bf16.gmra.mxu0 %v658
      %v1473 = vpop.f32.mrf.mxu0
      %v1474 = vadd.f32 %v1015, %v1473
      %v1475 = vpop.f32.mrf.mxu0
      %v1476 = vadd.f32 %v1015, %v1475
      %1477 = vmatmul.bf16.gmra.mxu0 %v659
      %v1478 = vpop.f32.mrf.mxu0
      %v1479 = vadd.f32 %v1015, %v1478
      %v1480 = vpop.f32.mrf.mxu0
      %v1481 = vadd.f32 %v1015, %v1480
      %1482 = vmatmul.bf16.gmra.mxu0 %v660
      %v1483 = vpop.f32.mrf.mxu0
      %v1484 = vadd.f32 %v1015, %v1483
      %v1485 = vpop.f32.mrf.mxu0
      %v1486 = vadd.f32 %v1015, %v1485
      %1487 = vmatmul.bf16.gmra.mxu0 %v661
      %v1488 = vpop.f32.mrf.mxu0
      %v1489 = vadd.f32 %v1015, %v1488
      %v1490 = vpop.f32.mrf.mxu0
      %v1491 = vadd.f32 %v1015, %v1490
      %1492 = vmatmul.bf16.gmra.mxu0 %v662
      %v1493 = vpop.f32.mrf.mxu0
      %v1494 = vadd.f32 %v1015, %v1493
      %v1495 = vpop.f32.mrf.mxu0
      %v1496 = vadd.f32 %v1015, %v1495
      %1497 = vmatmul.bf16.gmra.mxu0 %v663
      %v1498 = vpop.f32.mrf.mxu0
      %v1499 = vadd.f32 %v1015, %v1498
      %v1500 = vpop.f32.mrf.mxu0
      %v1501 = vadd.f32 %v1015, %v1500
      %1502 = vmatmul.bf16.gmra.mxu0 %v664
      %v1503 = vpop.f32.mrf.mxu0
      %v1504 = vadd.f32 %v1015, %v1503
      %v1505 = vpop.f32.mrf.mxu0
      %v1506 = vadd.f32 %v1015, %v1505
      %1507 = vmatmul.bf16.gmra.mxu0 %v665
      %v1508 = vpop.f32.mrf.mxu0
      %v1509 = vadd.f32 %v1015, %v1508
      %v1510 = vpop.f32.mrf.mxu0
      %v1511 = vadd.f32 %v1015, %v1510
      %1512 = vmatmul.bf16.gmra.mxu0 %v666
      %v1513 = vpop.f32.mrf.mxu0
      %v1514 = vadd.f32 %v1015, %v1513
      %v1515 = vpop.f32.mrf.mxu0
      %v1516 = vadd.f32 %v1015, %v1515
      %1517 = vmatmul.bf16.gmra.mxu0 %v667
      %v1518 = vpop.f32.mrf.mxu0
      %v1519 = vadd.f32 %v1015, %v1518
      %v1520 = vpop.f32.mrf.mxu0
      %v1521 = vadd.f32 %v1015, %v1520
      %1522 = vmatmul.bf16.gmra.mxu0 %v668
      %v1523 = vpop.f32.mrf.mxu0
      %v1524 = vadd.f32 %v1015, %v1523
      %v1525 = vpop.f32.mrf.mxu0
      %v1526 = vadd.f32 %v1015, %v1525
      %1527 = vmatmul.bf16.gmra.mxu0 %v669
      %v1528 = vpop.f32.mrf.mxu0
      %v1529 = vadd.f32 %v1015, %v1528
      %v1530 = vpop.f32.mrf.mxu0
      %v1531 = vadd.f32 %v1015, %v1530
      %1532 = vmatmul.bf16.gmra.mxu0 %v670
      %v1533 = vpop.f32.mrf.mxu0
      %v1534 = vadd.f32 %v1015, %v1533
      %v1535 = vpop.f32.mrf.mxu0
      %v1536 = vadd.f32 %v1015, %v1535
      %1537 = vdwg.mxu0
      %1538 = vmatpush.bf16.msra.mxu0 %v1320
      %1539 = vmatpush.bf16.msra.mxu0 %v1319
      %1540 = vmatpush.bf16.msra.mxu0 %v1318
      %1541 = vmatpush.bf16.msra.mxu0 %v1317
      %1542 = vmatpush.bf16.msra.mxu0 %v1316
      %1543 = vmatpush.bf16.msra.mxu0 %v1315
      %1544 = vmatpush.bf16.msra.mxu0 %v1314
      %1545 = vmatpush.bf16.msra.mxu0 %v1313
      %1546 = vmatmul.bf16.gmra.mxu0 %v701
      %v1547 = vpop.f32.mrf.mxu0
      %v1548 = vadd.f32 %v1459, %v1547
      %v1549 = vpop.f32.mrf.mxu0
      %v1550 = vadd.f32 %v1461, %v1549
      %1551 = vmatmul.bf16.gmra.mxu0 %v713
      %v1552 = vpop.f32.mrf.mxu0
      %v1553 = vadd.f32 %v1464, %v1552
      %v1554 = vpop.f32.mrf.mxu0
      %v1555 = vadd.f32 %v1466, %v1554
      %1556 = vmatmul.bf16.gmra.mxu0 %v725
      %v1557 = vpop.f32.mrf.mxu0
      %v1558 = vadd.f32 %v1469, %v1557
      %v1559 = vpop.f32.mrf.mxu0
      %v1560 = vadd.f32 %v1471, %v1559
      %1561 = vmatmul.bf16.gmra.mxu0 %v737
      %v1562 = vpop.f32.mrf.mxu0
      %v1563 = vadd.f32 %v1474, %v1562
      %v1564 = vpop.f32.mrf.mxu0
      %v1565 = vadd.f32 %v1476, %v1564
      %1566 = vmatmul.bf16.gmra.mxu0 %v749
      %v1567 = vpop.f32.mrf.mxu0
      %v1568 = vadd.f32 %v1479, %v1567
      %v1569 = vpop.f32.mrf.mxu0
      %v1570 = vadd.f32 %v1481, %v1569
      %1571 = vmatmul.bf16.gmra.mxu0 %v761
      %v1572 = vpop.f32.mrf.mxu0
      %v1573 = vadd.f32 %v1484, %v1572
      %v1574 = vpop.f32.mrf.mxu0
      %v1575 = vadd.f32 %v1486, %v1574
      %1576 = vmatmul.bf16.gmra.mxu0 %v773
      %v1577 = vpop.f32.mrf.mxu0
      %v1578 = vadd.f32 %v1489, %v1577
      %v1579 = vpop.f32.mrf.mxu0
      %v1580 = vadd.f32 %v1491, %v1579
      %1581 = vmatmul.bf16.gmra.mxu0 %v785
      %v1582 = vpop.f32.mrf.mxu0
      %v1583 = vadd.f32 %v1494, %v1582
      %v1584 = vpop.f32.mrf.mxu0
      %v1585 = vadd.f32 %v1496, %v1584
      %1586 = vmatmul.bf16.gmra.mxu0 %v797
      %v1587 = vpop.f32.mrf.mxu0
      %v1588 = vadd.f32 %v1499, %v1587
      %v1589 = vpop.f32.mrf.mxu0
      %v1590 = vadd.f32 %v1501, %v1589
      %1591 = vmatmul.bf16.gmra.mxu0 %v809
      %v1592 = vpop.f32.mrf.mxu0
      %v1593 = vadd.f32 %v1504, %v1592
      %v1594 = vpop.f32.mrf.mxu0
      %v1595 = vadd.f32 %v1506, %v1594
      %1596 = vmatmul.bf16.gmra.mxu0 %v821
      %v1597 = vpop.f32.mrf.mxu0
      %v1598 = vadd.f32 %v1509, %v1597
      %v1599 = vpop.f32.mrf.mxu0
      %v1600 = vadd.f32 %v1511, %v1599
      %1601 = vmatmul.bf16.gmra.mxu0 %v833
      %v1602 = vpop.f32.mrf.mxu0
      %v1603 = vadd.f32 %v1514, %v1602
      %v1604 = vpop.f32.mrf.mxu0
      %v1605 = vadd.f32 %v1516, %v1604
      %1606 = vmatmul.bf16.gmra.mxu0 %v845
      %v1607 = vpop.f32.mrf.mxu0
      %v1608 = vadd.f32 %v1519, %v1607
      %v1609 = vpop.f32.mrf.mxu0
      %v1610 = vadd.f32 %v1521, %v1609
      %1611 = vmatmul.bf16.gmra.mxu0 %v857
      %v1612 = vpop.f32.mrf.mxu0
      %v1613 = vadd.f32 %v1524, %v1612
      %v1614 = vpop.f32.mrf.mxu0
      %v1615 = vadd.f32 %v1526, %v1614
      %1616 = vmatmul.bf16.gmra.mxu0 %v869
      %v1617 = vpop.f32.mrf.mxu0
      %v1618 = vadd.f32 %v1529, %v1617
      %v1619 = vpop.f32.mrf.mxu0
      %v1620 = vadd.f32 %v1531, %v1619
      %1621 = vmatmul.bf16.gmra.mxu0 %v881
      %v1622 = vpop.f32.mrf.mxu0
      %v1623 = vadd.f32 %v1534, %v1622
      %v1624 = vpop.f32.mrf.mxu0
      %v1625 = vadd.f32 %v1536, %v1624
      %1626 = vdwg.mxu0
      %1627 = vmatpush.bf16.msra.mxu0 %v1328
      %1628 = vmatpush.bf16.msra.mxu0 %v1327
      %1629 = vmatpush.bf16.msra.mxu0 %v1326
      %1630 = vmatpush.bf16.msra.mxu0 %v1325
      %1631 = vmatpush.bf16.msra.mxu0 %v1324
      %1632 = vmatpush.bf16.msra.mxu0 %v1323
      %1633 = vmatpush.bf16.msra.mxu0 %v1322
      %1634 = vmatpush.bf16.msra.mxu0 %v1321
      %1635 = vmatmul.bf16.gmra.mxu0 %v933
      %v1636 = vpop.f32.mrf.mxu0
      %v1637 = vadd.f32 %v1548, %v1636
      %v1638 = vpop.f32.mrf.mxu0
      %v1639 = vadd.f32 %v1550, %v1638
      %1640 = vmatmul.bf16.gmra.mxu0 %v936
      %v1641 = vpop.f32.mrf.mxu0
      %v1642 = vadd.f32 %v1553, %v1641
      %v1643 = vpop.f32.mrf.mxu0
      %v1644 = vadd.f32 %v1555, %v1643
      %1645 = vmatmul.bf16.gmra.mxu0 %v939
      %v1646 = vpop.f32.mrf.mxu0
      %v1647 = vadd.f32 %v1558, %v1646
      %v1648 = vpop.f32.mrf.mxu0
      %v1649 = vadd.f32 %v1560, %v1648
      %1650 = vmatmul.bf16.gmra.mxu0 %v942
      %v1651 = vpop.f32.mrf.mxu0
      %v1652 = vadd.f32 %v1563, %v1651
      %v1653 = vpop.f32.mrf.mxu0
      %v1654 = vadd.f32 %v1565, %v1653
      %1655 = vmatmul.bf16.gmra.mxu0 %v945
      %v1656 = vpop.f32.mrf.mxu0
      %v1657 = vadd.f32 %v1568, %v1656
      %v1658 = vpop.f32.mrf.mxu0
      %v1659 = vadd.f32 %v1570, %v1658
      %1660 = vmatmul.bf16.gmra.mxu0 %v948
      %v1661 = vpop.f32.mrf.mxu0
      %v1662 = vadd.f32 %v1573, %v1661
      %v1663 = vpop.f32.mrf.mxu0
      %v1664 = vadd.f32 %v1575, %v1663
      %1665 = vmatmul.bf16.gmra.mxu0 %v951
      %v1666 = vpop.f32.mrf.mxu0
      %v1667 = vadd.f32 %v1578, %v1666
      %v1668 = vpop.f32.mrf.mxu0
      %v1669 = vadd.f32 %v1580, %v1668
      %1670 = vmatmul.bf16.gmra.mxu0 %v954
      %v1671 = vpop.f32.mrf.mxu0
      %v1672 = vadd.f32 %v1583, %v1671
      %v1673 = vpop.f32.mrf.mxu0
      %v1674 = vadd.f32 %v1585, %v1673
      %1675 = vmatmul.bf16.gmra.mxu0 %v957
      %v1676 = vpop.f32.mrf.mxu0
      %v1677 = vadd.f32 %v1588, %v1676
      %v1678 = vpop.f32.mrf.mxu0
      %v1679 = vadd.f32 %v1590, %v1678
      %1680 = vmatmul.bf16.gmra.mxu0 %v960
      %v1681 = vpop.f32.mrf.mxu0
      %v1682 = vadd.f32 %v1593, %v1681
      %v1683 = vpop.f32.mrf.mxu0
      %v1684 = vadd.f32 %v1595, %v1683
      %1685 = vmatmul.bf16.gmra.mxu0 %v963
      %v1686 = vpop.f32.mrf.mxu0
      %v1687 = vadd.f32 %v1598, %v1686
      %v1688 = vpop.f32.mrf.mxu0
      %v1689 = vadd.f32 %v1600, %v1688
      %1690 = vmatmul.bf16.gmra.mxu0 %v966
      %v1691 = vpop.f32.mrf.mxu0
      %v1692 = vadd.f32 %v1603, %v1691
      %v1693 = vpop.f32.mrf.mxu0
      %v1694 = vadd.f32 %v1605, %v1693
      %1695 = vmatmul.bf16.gmra.mxu0 %v969
      %v1696 = vpop.f32.mrf.mxu0
      %v1697 = vadd.f32 %v1608, %v1696
      %v1698 = vpop.f32.mrf.mxu0
      %v1699 = vadd.f32 %v1610, %v1698
      %1700 = vmatmul.bf16.gmra.mxu0 %v972
      %v1701 = vpop.f32.mrf.mxu0
      %v1702 = vadd.f32 %v1613, %v1701
      %v1703 = vpop.f32.mrf.mxu0
      %v1704 = vadd.f32 %v1615, %v1703
      %1705 = vmatmul.bf16.gmra.mxu0 %v975
      %v1706 = vpop.f32.mrf.mxu0
      %v1707 = vadd.f32 %v1618, %v1706
      %v1708 = vpop.f32.mrf.mxu0
      %v1709 = vadd.f32 %v1620, %v1708
      %1710 = vmatmul.bf16.gmra.mxu0 %v978
      %v1711 = vpop.f32.mrf.mxu0
      %v1712 = vadd.f32 %v1623, %v1711
      %v1713 = vpop.f32.mrf.mxu0
      %v1714 = vadd.f32 %v1625, %v1713
      %1715 = vdwg.mxu0
      %1716 = vmatpush.bf16.msra.mxu0 %v1336
      %1717 = vmatpush.bf16.msra.mxu0 %v1335
      %1718 = vmatpush.bf16.msra.mxu0 %v1334
      %1719 = vmatpush.bf16.msra.mxu0 %v1333
      %1720 = vmatpush.bf16.msra.mxu0 %v1332
      %1721 = vmatpush.bf16.msra.mxu0 %v1331
      %1722 = vmatpush.bf16.msra.mxu0 %v1330
      %1723 = vmatpush.bf16.msra.mxu0 %v1329
      %1724 = vmatmul.bf16.gmra.mxu0 %v656
      %v1725 = vpop.f32.mrf.mxu0
      %v1726 = vadd.f32 %v1637, %v1725
      %v1727 = vpop.f32.mrf.mxu0
      %v1728 = vadd.f32 %v1639, %v1727
      %1729 = vmatmul.bf16.gmra.mxu0 %v657
      %v1730 = vpop.f32.mrf.mxu0
      %v1731 = vadd.f32 %v1642, %v1730
      %v1732 = vpop.f32.mrf.mxu0
      %v1733 = vadd.f32 %v1644, %v1732
      %1734 = vmatmul.bf16.gmra.mxu0 %v658
      %v1735 = vpop.f32.mrf.mxu0
      %v1736 = vadd.f32 %v1647, %v1735
      %v1737 = vpop.f32.mrf.mxu0
      %v1738 = vadd.f32 %v1649, %v1737
      %1739 = vmatmul.bf16.gmra.mxu0 %v659
      %v1740 = vpop.f32.mrf.mxu0
      %v1741 = vadd.f32 %v1652, %v1740
      %v1742 = vpop.f32.mrf.mxu0
      %v1743 = vadd.f32 %v1654, %v1742
      %1744 = vmatmul.bf16.gmra.mxu0 %v660
      %v1745 = vpop.f32.mrf.mxu0
      %v1746 = vadd.f32 %v1657, %v1745
      %v1747 = vpop.f32.mrf.mxu0
      %v1748 = vadd.f32 %v1659, %v1747
      %1749 = vmatmul.bf16.gmra.mxu0 %v661
      %v1750 = vpop.f32.mrf.mxu0
      %v1751 = vadd.f32 %v1662, %v1750
      %v1752 = vpop.f32.mrf.mxu0
      %v1753 = vadd.f32 %v1664, %v1752
      %1754 = vmatmul.bf16.gmra.mxu0 %v662
      %v1755 = vpop.f32.mrf.mxu0
      %v1756 = vadd.f32 %v1667, %v1755
      %v1757 = vpop.f32.mrf.mxu0
      %v1758 = vadd.f32 %v1669, %v1757
      %1759 = vmatmul.bf16.gmra.mxu0 %v663
      %v1760 = vpop.f32.mrf.mxu0
      %v1761 = vadd.f32 %v1672, %v1760
      %v1762 = vpop.f32.mrf.mxu0
      %v1763 = vadd.f32 %v1674, %v1762
      %1764 = vmatmul.bf16.gmra.mxu0 %v664
      %v1765 = vpop.f32.mrf.mxu0
      %v1766 = vadd.f32 %v1677, %v1765
      %v1767 = vpop.f32.mrf.mxu0
      %v1768 = vadd.f32 %v1679, %v1767
      %1769 = vmatmul.bf16.gmra.mxu0 %v665
      %v1770 = vpop.f32.mrf.mxu0
      %v1771 = vadd.f32 %v1682, %v1770
      %v1772 = vpop.f32.mrf.mxu0
      %v1773 = vadd.f32 %v1684, %v1772
      %1774 = vmatmul.bf16.gmra.mxu0 %v666
      %v1775 = vpop.f32.mrf.mxu0
      %v1776 = vadd.f32 %v1687, %v1775
      %v1777 = vpop.f32.mrf.mxu0
      %v1778 = vadd.f32 %v1689, %v1777
      %1779 = vmatmul.bf16.gmra.mxu0 %v667
      %v1780 = vpop.f32.mrf.mxu0
      %v1781 = vadd.f32 %v1692, %v1780
      %v1782 = vpop.f32.mrf.mxu0
      %v1783 = vadd.f32 %v1694, %v1782
      %1784 = vmatmul.bf16.gmra.mxu0 %v668
      %v1785 = vpop.f32.mrf.mxu0
      %v1786 = vadd.f32 %v1697, %v1785
      %v1787 = vpop.f32.mrf.mxu0
      %v1788 = vadd.f32 %v1699, %v1787
      %1789 = vmatmul.bf16.gmra.mxu0 %v669
      %v1790 = vpop.f32.mrf.mxu0
      %v1791 = vadd.f32 %v1702, %v1790
      %v1792 = vpop.f32.mrf.mxu0
      %v1793 = vadd.f32 %v1704, %v1792
      %1794 = vmatmul.bf16.gmra.mxu0 %v670
      %v1795 = vpop.f32.mrf.mxu0
      %v1796 = vadd.f32 %v1707, %v1795
      %v1797 = vpop.f32.mrf.mxu0
      %v1798 = vadd.f32 %v1709, %v1797
      %1799 = vmatmul.bf16.gmra.mxu0 %v671
      %v1800 = vpop.f32.mrf.mxu0
      %v1801 = vadd.f32 %v1712, %v1800
      %v1802 = vpop.f32.mrf.mxu0
      %v1803 = vadd.f32 %v1714, %v1802
      %1804 = vdwg.mxu0
      %1805 = vmatpush.bf16.msra.mxu0 %v1344
      %1806 = vmatpush.bf16.msra.mxu0 %v1343
      %1807 = vmatpush.bf16.msra.mxu0 %v1342
      %1808 = vmatpush.bf16.msra.mxu0 %v1341
      %1809 = vmatpush.bf16.msra.mxu0 %v1340
      %1810 = vmatpush.bf16.msra.mxu0 %v1339
      %1811 = vmatpush.bf16.msra.mxu0 %v1338
      %1812 = vmatpush.bf16.msra.mxu0 %v1337
      %1813 = vmatmul.bf16.gmra.mxu0 %v713
      %v1814 = vpop.f32.mrf.mxu0
      %v1815 = vadd.f32 %v1726, %v1814
      %v1816 = vpop.f32.mrf.mxu0
      %v1817 = vadd.f32 %v1728, %v1816
      %1818 = vmatmul.bf16.gmra.mxu0 %v725
      %v1819 = vpop.f32.mrf.mxu0
      %v1820 = vadd.f32 %v1731, %v1819
      %v1821 = vpop.f32.mrf.mxu0
      %v1822 = vadd.f32 %v1733, %v1821
      %1823 = vmatmul.bf16.gmra.mxu0 %v737
      %v1824 = vpop.f32.mrf.mxu0
      %v1825 = vadd.f32 %v1736, %v1824
      %v1826 = vpop.f32.mrf.mxu0
      %v1827 = vadd.f32 %v1738, %v1826
      %1828 = vmatmul.bf16.gmra.mxu0 %v749
      %v1829 = vpop.f32.mrf.mxu0
      %v1830 = vadd.f32 %v1741, %v1829
      %v1831 = vpop.f32.mrf.mxu0
      %v1832 = vadd.f32 %v1743, %v1831
      %1833 = vmatmul.bf16.gmra.mxu0 %v761
      %v1834 = vpop.f32.mrf.mxu0
      %v1835 = vadd.f32 %v1746, %v1834
      %v1836 = vpop.f32.mrf.mxu0
      %v1837 = vadd.f32 %v1748, %v1836
      %1838 = vmatmul.bf16.gmra.mxu0 %v773
      %v1839 = vpop.f32.mrf.mxu0
      %v1840 = vadd.f32 %v1751, %v1839
      %v1841 = vpop.f32.mrf.mxu0
      %v1842 = vadd.f32 %v1753, %v1841
      %1843 = vmatmul.bf16.gmra.mxu0 %v785
      %v1844 = vpop.f32.mrf.mxu0
      %v1845 = vadd.f32 %v1756, %v1844
      %v1846 = vpop.f32.mrf.mxu0
      %v1847 = vadd.f32 %v1758, %v1846
      %1848 = vmatmul.bf16.gmra.mxu0 %v797
      %v1849 = vpop.f32.mrf.mxu0
      %v1850 = vadd.f32 %v1761, %v1849
      %v1851 = vpop.f32.mrf.mxu0
      %v1852 = vadd.f32 %v1763, %v1851
      %1853 = vmatmul.bf16.gmra.mxu0 %v809
      %v1854 = vpop.f32.mrf.mxu0
      %v1855 = vadd.f32 %v1766, %v1854
      %v1856 = vpop.f32.mrf.mxu0
      %v1857 = vadd.f32 %v1768, %v1856
      %1858 = vmatmul.bf16.gmra.mxu0 %v821
      %v1859 = vpop.f32.mrf.mxu0
      %v1860 = vadd.f32 %v1771, %v1859
      %v1861 = vpop.f32.mrf.mxu0
      %v1862 = vadd.f32 %v1773, %v1861
      %1863 = vmatmul.bf16.gmra.mxu0 %v833
      %v1864 = vpop.f32.mrf.mxu0
      %v1865 = vadd.f32 %v1776, %v1864
      %v1866 = vpop.f32.mrf.mxu0
      %v1867 = vadd.f32 %v1778, %v1866
      %1868 = vmatmul.bf16.gmra.mxu0 %v845
      %v1869 = vpop.f32.mrf.mxu0
      %v1870 = vadd.f32 %v1781, %v1869
      %v1871 = vpop.f32.mrf.mxu0
      %v1872 = vadd.f32 %v1783, %v1871
      %1873 = vmatmul.bf16.gmra.mxu0 %v857
      %v1874 = vpop.f32.mrf.mxu0
      %v1875 = vadd.f32 %v1786, %v1874
      %v1876 = vpop.f32.mrf.mxu0
      %v1877 = vadd.f32 %v1788, %v1876
      %1878 = vmatmul.bf16.gmra.mxu0 %v869
      %v1879 = vpop.f32.mrf.mxu0
      %v1880 = vadd.f32 %v1791, %v1879
      %v1881 = vpop.f32.mrf.mxu0
      %v1882 = vadd.f32 %v1793, %v1881
      %1883 = vmatmul.bf16.gmra.mxu0 %v881
      %v1884 = vpop.f32.mrf.mxu0
      %v1885 = vadd.f32 %v1796, %v1884
      %v1886 = vpop.f32.mrf.mxu0
      %v1887 = vadd.f32 %v1798, %v1886
      %1888 = vmatmul.bf16.gmra.mxu0 %v1006
      %v1889 = vpop.f32.mrf.mxu0
      %v1890 = vadd.f32 %v1801, %v1889
      %v1891 = vpop.f32.mrf.mxu0
      %v1892 = vadd.f32 %v1803, %v1891
      %1893 = vdwg.mxu0
      %1894 = vmatpush.bf16.msra.mxu0 %v1352
      %1895 = vmatpush.bf16.msra.mxu0 %v1351
      %1896 = vmatpush.bf16.msra.mxu0 %v1350
      %1897 = vmatpush.bf16.msra.mxu0 %v1349
      %1898 = vmatpush.bf16.msra.mxu0 %v1348
      %1899 = vmatpush.bf16.msra.mxu0 %v1347
      %1900 = vmatpush.bf16.msra.mxu0 %v1346
      %1901 = vmatpush.bf16.msra.mxu0 %v1345
      %1902 = vmatmul.bf16.gmra.mxu0 %v936
      %v1903 = vpop.f32.mrf.mxu0
      %v1904 = vadd.f32 %v1815, %v1903
      %v1905 = vpop.f32.mrf.mxu0
      %v1906 = vadd.f32 %v1817, %v1905
      %1907 = vmatmul.bf16.gmra.mxu0 %v939
      %v1908 = vpop.f32.mrf.mxu0
      %v1909 = vadd.f32 %v1820, %v1908
      %v1910 = vpop.f32.mrf.mxu0
      %v1911 = vadd.f32 %v1822, %v1910
      %1912 = vmatmul.bf16.gmra.mxu0 %v942
      %v1913 = vpop.f32.mrf.mxu0
      %v1914 = vadd.f32 %v1825, %v1913
      %v1915 = vpop.f32.mrf.mxu0
      %v1916 = vadd.f32 %v1827, %v1915
      %1917 = vmatmul.bf16.gmra.mxu0 %v945
      %v1918 = vpop.f32.mrf.mxu0
      %v1919 = vadd.f32 %v1830, %v1918
      %v1920 = vpop.f32.mrf.mxu0
      %v1921 = vadd.f32 %v1832, %v1920
      %1922 = vmatmul.bf16.gmra.mxu0 %v948
      %v1923 = vpop.f32.mrf.mxu0
      %v1924 = vadd.f32 %v1835, %v1923
      %v1925 = vpop.f32.mrf.mxu0
      %v1926 = vadd.f32 %v1837, %v1925
      %1927 = vmatmul.bf16.gmra.mxu0 %v951
      %v1928 = vpop.f32.mrf.mxu0
      %v1929 = vadd.f32 %v1840, %v1928
      %v1930 = vpop.f32.mrf.mxu0
      %v1931 = vadd.f32 %v1842, %v1930
      %1932 = vmatmul.bf16.gmra.mxu0 %v954
      %v1933 = vpop.f32.mrf.mxu0
      %v1934 = vadd.f32 %v1845, %v1933
      %v1935 = vpop.f32.mrf.mxu0
      %v1936 = vadd.f32 %v1847, %v1935
      %1937 = vmatmul.bf16.gmra.mxu0 %v957
      %v1938 = vpop.f32.mrf.mxu0
      %v1939 = vadd.f32 %v1850, %v1938
      %v1940 = vpop.f32.mrf.mxu0
      %v1941 = vadd.f32 %v1852, %v1940
      %1942 = vmatmul.bf16.gmra.mxu0 %v960
      %v1943 = vpop.f32.mrf.mxu0
      %v1944 = vadd.f32 %v1855, %v1943
      %v1945 = vpop.f32.mrf.mxu0
      %v1946 = vadd.f32 %v1857, %v1945
      %1947 = vmatmul.bf16.gmra.mxu0 %v963
      %v1948 = vpop.f32.mrf.mxu0
      %v1949 = vadd.f32 %v1860, %v1948
      %v1950 = vpop.f32.mrf.mxu0
      %v1951 = vadd.f32 %v1862, %v1950
      %1952 = vmatmul.bf16.gmra.mxu0 %v966
      %v1953 = vpop.f32.mrf.mxu0
      %v1954 = vadd.f32 %v1865, %v1953
      %v1955 = vpop.f32.mrf.mxu0
      %v1956 = vadd.f32 %v1867, %v1955
      %1957 = vmatmul.bf16.gmra.mxu0 %v969
      %v1958 = vpop.f32.mrf.mxu0
      %v1959 = vadd.f32 %v1870, %v1958
      %v1960 = vpop.f32.mrf.mxu0
      %v1961 = vadd.f32 %v1872, %v1960
      %1962 = vmatmul.bf16.gmra.mxu0 %v972
      %v1963 = vpop.f32.mrf.mxu0
      %v1964 = vadd.f32 %v1875, %v1963
      %v1965 = vpop.f32.mrf.mxu0
      %v1966 = vadd.f32 %v1877, %v1965
      %1967 = vmatmul.bf16.gmra.mxu0 %v975
      %v1968 = vpop.f32.mrf.mxu0
      %v1969 = vadd.f32 %v1880, %v1968
      %v1970 = vpop.f32.mrf.mxu0
      %v1971 = vadd.f32 %v1882, %v1970
      %1972 = vmatmul.bf16.gmra.mxu0 %v978
      %v1973 = vpop.f32.mrf.mxu0
      %v1974 = vadd.f32 %v1885, %v1973
      %v1975 = vpop.f32.mrf.mxu0
      %v1976 = vadd.f32 %v1887, %v1975
      %1977 = vmatmul.bf16.gmra.mxu0 %v1012
      %v1978 = vpop.f32.mrf.mxu0
      %v1979 = vadd.f32 %v1890, %v1978
      %v1980 = vpop.f32.mrf.mxu0
      %v1981 = vadd.f32 %v1892, %v1980
      %1982 = vdwg.mxu0
      %1983 = vmatpush.bf16.msra.mxu0 %v1360
      %1984 = vmatpush.bf16.msra.mxu0 %v1359
      %1985 = vmatpush.bf16.msra.mxu0 %v1358
      %1986 = vmatpush.bf16.msra.mxu0 %v1357
      %1987 = vmatpush.bf16.msra.mxu0 %v1356
      %1988 = vmatpush.bf16.msra.mxu0 %v1355
      %1989 = vmatpush.bf16.msra.mxu0 %v1354
      %1990 = vmatpush.bf16.msra.mxu0 %v1353
      %1991 = vmatmul.bf16.gmra.mxu0 %v657
      %v1992 = vpop.f32.mrf.mxu0
      %v1993 = vadd.f32 %v1904, %v1992
      %v1994 = vpop.f32.mrf.mxu0
      %v1995 = vadd.f32 %v1906, %v1994
      %1996 = vmatmul.bf16.gmra.mxu0 %v658
      %v1997 = vpop.f32.mrf.mxu0
      %v1998 = vadd.f32 %v1909, %v1997
      %v1999 = vpop.f32.mrf.mxu0
      %v2000 = vadd.f32 %v1911, %v1999
      %2001 = vmatmul.bf16.gmra.mxu0 %v659
      %v2002 = vpop.f32.mrf.mxu0
      %v2003 = vadd.f32 %v1914, %v2002
      %v2004 = vpop.f32.mrf.mxu0
      %v2005 = vadd.f32 %v1916, %v2004
      %2006 = vmatmul.bf16.gmra.mxu0 %v660
      %v2007 = vpop.f32.mrf.mxu0
      %v2008 = vadd.f32 %v1919, %v2007
      %v2009 = vpop.f32.mrf.mxu0
      %v2010 = vadd.f32 %v1921, %v2009
      %2011 = vmatmul.bf16.gmra.mxu0 %v661
      %v2012 = vpop.f32.mrf.mxu0
      %v2013 = vadd.f32 %v1924, %v2012
      %v2014 = vpop.f32.mrf.mxu0
      %v2015 = vadd.f32 %v1926, %v2014
      %2016 = vmatmul.bf16.gmra.mxu0 %v662
      %v2017 = vpop.f32.mrf.mxu0
      %v2018 = vadd.f32 %v1929, %v2017
      %v2019 = vpop.f32.mrf.mxu0
      %v2020 = vadd.f32 %v1931, %v2019
      %2021 = vmatmul.bf16.gmra.mxu0 %v663
      %v2022 = vpop.f32.mrf.mxu0
      %v2023 = vadd.f32 %v1934, %v2022
      %v2024 = vpop.f32.mrf.mxu0
      %v2025 = vadd.f32 %v1936, %v2024
      %2026 = vmatmul.bf16.gmra.mxu0 %v664
      %v2027 = vpop.f32.mrf.mxu0
      %v2028 = vadd.f32 %v1939, %v2027
      %v2029 = vpop.f32.mrf.mxu0
      %v2030 = vadd.f32 %v1941, %v2029
      %2031 = vmatmul.bf16.gmra.mxu0 %v665
      %v2032 = vpop.f32.mrf.mxu0
      %v2033 = vadd.f32 %v1944, %v2032
      %v2034 = vpop.f32.mrf.mxu0
      %v2035 = vadd.f32 %v1946, %v2034
      %2036 = vmatmul.bf16.gmra.mxu0 %v666
      %v2037 = vpop.f32.mrf.mxu0
      %v2038 = vadd.f32 %v1949, %v2037
      %v2039 = vpop.f32.mrf.mxu0
      %v2040 = vadd.f32 %v1951, %v2039
      %2041 = vmatmul.bf16.gmra.mxu0 %v667
      %v2042 = vpop.f32.mrf.mxu0
      %v2043 = vadd.f32 %v1954, %v2042
      %v2044 = vpop.f32.mrf.mxu0
      %v2045 = vadd.f32 %v1956, %v2044
      %2046 = vmatmul.bf16.gmra.mxu0 %v668
      %v2047 = vpop.f32.mrf.mxu0
      %v2048 = vadd.f32 %v1959, %v2047
      %v2049 = vpop.f32.mrf.mxu0
      %v2050 = vadd.f32 %v1961, %v2049
      %2051 = vmatmul.bf16.gmra.mxu0 %v669
      %v2052 = vpop.f32.mrf.mxu0
      %v2053 = vadd.f32 %v1964, %v2052
      %v2054 = vpop.f32.mrf.mxu0
      %v2055 = vadd.f32 %v1966, %v2054
      %2056 = vmatmul.bf16.gmra.mxu0 %v670
      %v2057 = vpop.f32.mrf.mxu0
      %v2058 = vadd.f32 %v1969, %v2057
      %v2059 = vpop.f32.mrf.mxu0
      %v2060 = vadd.f32 %v1971, %v2059
      %2061 = vmatmul.bf16.gmra.mxu0 %v671
      %v2062 = vpop.f32.mrf.mxu0
      %v2063 = vadd.f32 %v1974, %v2062
      %v2064 = vpop.f32.mrf.mxu0
      %v2065 = vadd.f32 %v1976, %v2064
      %2066 = vmatmul.bf16.gmra.mxu0 %v655
      %v2067 = vpop.f32.mrf.mxu0
      %v2068 = vadd.f32 %v1979, %v2067
      %v2069 = vpop.f32.mrf.mxu0
      %v2070 = vadd.f32 %v1981, %v2069
      %2071 = vdwg.mxu0
      %2072 = vmatpush.bf16.msra.mxu0 %v1368
      %2073 = vmatpush.bf16.msra.mxu0 %v1367
      %2074 = vmatpush.bf16.msra.mxu0 %v1366
      %2075 = vmatpush.bf16.msra.mxu0 %v1365
      %2076 = vmatpush.bf16.msra.mxu0 %v1364
      %2077 = vmatpush.bf16.msra.mxu0 %v1363
      %2078 = vmatpush.bf16.msra.mxu0 %v1362
      %2079 = vmatpush.bf16.msra.mxu0 %v1361
      %2080 = vmatmul.bf16.gmra.mxu0 %v725
      %v2081 = vpop.f32.mrf.mxu0
      %v2082 = vadd.f32 %v1993, %v2081
      %v2083 = vpop.f32.mrf.mxu0
      %v2084 = vadd.f32 %v1995, %v2083
      %2085 = vmatmul.bf16.gmra.mxu0 %v737
      %v2086 = vpop.f32.mrf.mxu0
      %v2087 = vadd.f32 %v1998, %v2086
      %v2088 = vpop.f32.mrf.mxu0
      %v2089 = vadd.f32 %v2000, %v2088
      %2090 = vmatmul.bf16.gmra.mxu0 %v749
      %v2091 = vpop.f32.mrf.mxu0
      %v2092 = vadd.f32 %v2003, %v2091
      %v2093 = vpop.f32.mrf.mxu0
      %v2094 = vadd.f32 %v2005, %v2093
      %2095 = vmatmul.bf16.gmra.mxu0 %v761
      %v2096 = vpop.f32.mrf.mxu0
      %v2097 = vadd.f32 %v2008, %v2096
      %v2098 = vpop.f32.mrf.mxu0
      %v2099 = vadd.f32 %v2010, %v2098
      %2100 = vmatmul.bf16.gmra.mxu0 %v773
      %v2101 = vpop.f32.mrf.mxu0
      %v2102 = vadd.f32 %v2013, %v2101
      %v2103 = vpop.f32.mrf.mxu0
      %v2104 = vadd.f32 %v2015, %v2103
      %2105 = vmatmul.bf16.gmra.mxu0 %v785
      %v2106 = vpop.f32.mrf.mxu0
      %v2107 = vadd.f32 %v2018, %v2106
      %v2108 = vpop.f32.mrf.mxu0
      %v2109 = vadd.f32 %v2020, %v2108
      %2110 = vmatmul.bf16.gmra.mxu0 %v797
      %v2111 = vpop.f32.mrf.mxu0
      %v2112 = vadd.f32 %v2023, %v2111
      %v2113 = vpop.f32.mrf.mxu0
      %v2114 = vadd.f32 %v2025, %v2113
      %2115 = vmatmul.bf16.gmra.mxu0 %v809
      %v2116 = vpop.f32.mrf.mxu0
      %v2117 = vadd.f32 %v2028, %v2116
      %v2118 = vpop.f32.mrf.mxu0
      %v2119 = vadd.f32 %v2030, %v2118
      %2120 = vmatmul.bf16.gmra.mxu0 %v821
      %v2121 = vpop.f32.mrf.mxu0
      %v2122 = vadd.f32 %v2033, %v2121
      %v2123 = vpop.f32.mrf.mxu0
      %v2124 = vadd.f32 %v2035, %v2123
      %2125 = vmatmul.bf16.gmra.mxu0 %v833
      %v2126 = vpop.f32.mrf.mxu0
      %v2127 = vadd.f32 %v2038, %v2126
      %v2128 = vpop.f32.mrf.mxu0
      %v2129 = vadd.f32 %v2040, %v2128
      %2130 = vmatmul.bf16.gmra.mxu0 %v845
      %v2131 = vpop.f32.mrf.mxu0
      %v2132 = vadd.f32 %v2043, %v2131
      %v2133 = vpop.f32.mrf.mxu0
      %v2134 = vadd.f32 %v2045, %v2133
      %2135 = vmatmul.bf16.gmra.mxu0 %v857
      %v2136 = vpop.f32.mrf.mxu0
      %v2137 = vadd.f32 %v2048, %v2136
      %v2138 = vpop.f32.mrf.mxu0
      %v2139 = vadd.f32 %v2050, %v2138
      %2140 = vmatmul.bf16.gmra.mxu0 %v869
      %v2141 = vpop.f32.mrf.mxu0
      %v2142 = vadd.f32 %v2053, %v2141
      %v2143 = vpop.f32.mrf.mxu0
      %v2144 = vadd.f32 %v2055, %v2143
      %2145 = vmatmul.bf16.gmra.mxu0 %v881
      %v2146 = vpop.f32.mrf.mxu0
      %v2147 = vadd.f32 %v2058, %v2146
      %v2148 = vpop.f32.mrf.mxu0
      %v2149 = vadd.f32 %v2060, %v2148
      %2150 = vmatmul.bf16.gmra.mxu0 %v1006
      %v2151 = vpop.f32.mrf.mxu0
      %v2152 = vadd.f32 %v2063, %v2151
      %v2153 = vpop.f32.mrf.mxu0
      %v2154 = vadd.f32 %v2065, %v2153
      %2155 = vmatmul.bf16.gmra.mxu0 %v701
      %v2156 = vpop.f32.mrf.mxu0
      %v2157 = vadd.f32 %v2068, %v2156
      %v2158 = vpop.f32.mrf.mxu0
      %v2159 = vadd.f32 %v2070, %v2158
      %2160 = vdwg.mxu0
      %2161 = vmatpush.bf16.msra.mxu0 %v1376
      %2162 = vmatpush.bf16.msra.mxu0 %v1375
      %2163 = vmatpush.bf16.msra.mxu0 %v1374
      %2164 = vmatpush.bf16.msra.mxu0 %v1373
      %2165 = vmatpush.bf16.msra.mxu0 %v1372
      %2166 = vmatpush.bf16.msra.mxu0 %v1371
      %2167 = vmatpush.bf16.msra.mxu0 %v1370
      %2168 = vmatpush.bf16.msra.mxu0 %v1369
      %2169 = vmatmul.bf16.gmra.mxu0 %v939
      %v2170 = vpop.f32.mrf.mxu0
      %v2171 = vadd.f32 %v2082, %v2170
      %v2172 = vpop.f32.mrf.mxu0
      %v2173 = vadd.f32 %v2084, %v2172
      %2174 = vmatmul.bf16.gmra.mxu0 %v942
      %v2175 = vpop.f32.mrf.mxu0
      %v2176 = vadd.f32 %v2087, %v2175
      %v2177 = vpop.f32.mrf.mxu0
      %v2178 = vadd.f32 %v2089, %v2177
      %2179 = vmatmul.bf16.gmra.mxu0 %v945
      %v2180 = vpop.f32.mrf.mxu0
      %v2181 = vadd.f32 %v2092, %v2180
      %v2182 = vpop.f32.mrf.mxu0
      %v2183 = vadd.f32 %v2094, %v2182
      %2184 = vmatmul.bf16.gmra.mxu0 %v948
      %v2185 = vpop.f32.mrf.mxu0
      %v2186 = vadd.f32 %v2097, %v2185
      %v2187 = vpop.f32.mrf.mxu0
      %v2188 = vadd.f32 %v2099, %v2187
      %2189 = vmatmul.bf16.gmra.mxu0 %v951
      %v2190 = vpop.f32.mrf.mxu0
      %v2191 = vadd.f32 %v2102, %v2190
      %v2192 = vpop.f32.mrf.mxu0
      %v2193 = vadd.f32 %v2104, %v2192
      %2194 = vmatmul.bf16.gmra.mxu0 %v954
      %v2195 = vpop.f32.mrf.mxu0
      %v2196 = vadd.f32 %v2107, %v2195
      %v2197 = vpop.f32.mrf.mxu0
      %v2198 = vadd.f32 %v2109, %v2197
      %2199 = vmatmul.bf16.gmra.mxu0 %v957
      %v2200 = vpop.f32.mrf.mxu0
      %v2201 = vadd.f32 %v2112, %v2200
      %v2202 = vpop.f32.mrf.mxu0
      %v2203 = vadd.f32 %v2114, %v2202
      %2204 = vmatmul.bf16.gmra.mxu0 %v960
      %v2205 = vpop.f32.mrf.mxu0
      %v2206 = vadd.f32 %v2117, %v2205
      %v2207 = vpop.f32.mrf.mxu0
      %v2208 = vadd.f32 %v2119, %v2207
      %2209 = vmatmul.bf16.gmra.mxu0 %v963
      %v2210 = vpop.f32.mrf.mxu0
      %v2211 = vadd.f32 %v2122, %v2210
      %v2212 = vpop.f32.mrf.mxu0
      %v2213 = vadd.f32 %v2124, %v2212
      %2214 = vmatmul.bf16.gmra.mxu0 %v966
      %v2215 = vpop.f32.mrf.mxu0
      %v2216 = vadd.f32 %v2127, %v2215
      %v2217 = vpop.f32.mrf.mxu0
      %v2218 = vadd.f32 %v2129, %v2217
      %2219 = vmatmul.bf16.gmra.mxu0 %v969
      %v2220 = vpop.f32.mrf.mxu0
      %v2221 = vadd.f32 %v2132, %v2220
      %v2222 = vpop.f32.mrf.mxu0
      %v2223 = vadd.f32 %v2134, %v2222
      %2224 = vmatmul.bf16.gmra.mxu0 %v972
      %v2225 = vpop.f32.mrf.mxu0
      %v2226 = vadd.f32 %v2137, %v2225
      %v2227 = vpop.f32.mrf.mxu0
      %v2228 = vadd.f32 %v2139, %v2227
      %2229 = vmatmul.bf16.gmra.mxu0 %v975
      %v2230 = vpop.f32.mrf.mxu0
      %v2231 = vadd.f32 %v2142, %v2230
      %v2232 = vpop.f32.mrf.mxu0
      %v2233 = vadd.f32 %v2144, %v2232
      %2234 = vmatmul.bf16.gmra.mxu0 %v978
      %v2235 = vpop.f32.mrf.mxu0
      %v2236 = vadd.f32 %v2147, %v2235
      %v2237 = vpop.f32.mrf.mxu0
      %v2238 = vadd.f32 %v2149, %v2237
      %2239 = vmatmul.bf16.gmra.mxu0 %v1012
      %v2240 = vpop.f32.mrf.mxu0
      %v2241 = vadd.f32 %v2152, %v2240
      %v2242 = vpop.f32.mrf.mxu0
      %v2243 = vadd.f32 %v2154, %v2242
      %2244 = vmatmul.bf16.gmra.mxu0 %v933
      %v2245 = vpop.f32.mrf.mxu0
      %v2246 = vadd.f32 %v2157, %v2245
      %v2247 = vpop.f32.mrf.mxu0
      %v2248 = vadd.f32 %v2159, %v2247
      %2249 = vdwg.mxu0
      %2250 = vst [vmem:[%s204] sm:$0xff] %v2171
      %2251 = vst [vmem:[%s204 + $0x8] sm:$0xff] %v2173
      %2252 = vst [vmem:[%s204 + $0x10] sm:$0xff] %v2176
      %2253 = vst [vmem:[%s204 + $0x18] sm:$0xff] %v2178
      %2254 = vst [vmem:[%s204 + $0x20] sm:$0xff] %v2181
      %2255 = vst [vmem:[%s204 + $0x28] sm:$0xff] %v2183
      %2256 = vst [vmem:[%s204 + $0x30] sm:$0xff] %v2186
      %2257 = vst [vmem:[%s204 + $0x38] sm:$0xff] %v2188
      %2258 = vst [vmem:[%s204 + $0x40] sm:$0xff] %v2191
      %2259 = vst [vmem:[%s204 + $0x48] sm:$0xff] %v2193
      %2260 = vst [vmem:[%s204 + $0x50] sm:$0xff] %v2196
      %2261 = vst [vmem:[%s204 + $0x58] sm:$0xff] %v2198
      %2262 = vst [vmem:[%s204 + $0x60] sm:$0xff] %v2201
      %2263 = vst [vmem:[%s204 + $0x68] sm:$0xff] %v2203
      %2264 = vst [vmem:[%s204 + $0x70] sm:$0xff] %v2206
      %2265 = vst [vmem:[%s204 + $0x78] sm:$0xff] %v2208
      %2266 = vst [vmem:[%s204 + $0x80] sm:$0xff] %v2211
      %2267 = vst [vmem:[%s204 + $0x88] sm:$0xff] %v2213
      %2268 = vst [vmem:[%s204 + $0x90] sm:$0xff] %v2216
      %2269 = vst [vmem:[%s204 + $0x98] sm:$0xff] %v2218
      %2270 = vst [vmem:[%s204 + $0xa0] sm:$0xff] %v2221
      %2271 = vst [vmem:[%s204 + $0xa8] sm:$0xff] %v2223
      %2272 = vst [vmem:[%s204 + $0xb0] sm:$0xff] %v2226
      %2273 = vst [vmem:[%s204 + $0xb8] sm:$0xff] %v2228
      %2274 = vst [vmem:[%s204 + $0xc0] sm:$0xff] %v2231
      %2275 = vst [vmem:[%s204 + $0xc8] sm:$0xff] %v2233
      %2276 = vst [vmem:[%s204 + $0xd0] sm:$0xff] %v2236
      %2277 = vst [vmem:[%s204 + $0xd8] sm:$0xff] %v2238
      %2278 = vst [vmem:[%s204 + $0xe0] sm:$0xff] %v2241
      %2279 = vst [vmem:[%s204 + $0xe8] sm:$0xff] %v2243
      %2280 = vst [vmem:[%s204 + $0xf0] sm:$0xff] %v2246
      %2281 = vst [vmem:[%s204 + $0xf8] sm:$0xff] %v2248
      %v2282 = vadd.f32 %v2171, %v2173
      %v2283 = vadd.f32 %v2282, %v2176
      %v2284 = vadd.f32 %v2283, %v2178
      %v2285 = vadd.f32 %v2284, %v2181
      %v2286 = vadd.f32 %v2285, %v2183
      %v2287 = vadd.f32 %v2286, %v2186
      %v2288 = vadd.f32 %v2287, %v2188
      %v2289 = vadd.f32 %v2288, %v2191
      %v2290 = vadd.f32 %v2289, %v2193
      %v2291 = vadd.f32 %v2290, %v2196
      %v2292 = vadd.f32 %v2291, %v2198
      %v2293 = vadd.f32 %v2292, %v2201
      %v2294 = vadd.f32 %v2293, %v2203
      %v2295 = vadd.f32 %v2294, %v2206
      %v2296 = vadd.f32 %v2295, %v2208
      %v2297 = vadd.f32 %v2296, %v2211
      %v2298 = vadd.f32 %v2297, %v2213
      %v2299 = vadd.f32 %v2298, %v2216
      %v2300 = vadd.f32 %v2299, %v2218
      %v2301 = vadd.f32 %v2300, %v2221
      %v2302 = vadd.f32 %v2301, %v2223
      %v2303 = vadd.f32 %v2302, %v2226
      %v2304 = vadd.f32 %v2303, %v2228
      %v2305 = vadd.f32 %v2304, %v2231
      %v2306 = vadd.f32 %v2305, %v2233
      %v2307 = vadd.f32 %v2306, %v2236
      %v2308 = vadd.f32 %v2307, %v2238
      %v2309 = vadd.f32 %v2308, %v2241
      %v2310 = vadd.f32 %v2309, %v2243
      %v2311 = vadd.f32 %v2310, %v2246
      %v2312 = vadd.f32 %v2311, %v2248
      %v2313 = vrot.slane %v2312, 4
      %v2314 = vadd.f32 %v2312, %v2313
      %v2315 = vrot.slane %v2314, 2
      %v2316 = vadd.f32 %v2314, %v2315
      %v2317 = vrot.slane %v2316, 1
      %v2318 = vadd.f32 %v2316, %v2317
      %v2319 = vmul.f32 %v2171, %v2171
      %v2320 = vmul.f32 %v2173, %v2173
      %v2321 = vmul.f32 %v2176, %v2176
      %v2322 = vmul.f32 %v2178, %v2178
      %v2323 = vmul.f32 %v2181, %v2181
      %v2324 = vmul.f32 %v2183, %v2183
      %v2325 = vmul.f32 %v2186, %v2186
      %v2326 = vmul.f32 %v2188, %v2188
      %v2327 = vmul.f32 %v2191, %v2191
      %v2328 = vmul.f32 %v2193, %v2193
      %v2329 = vmul.f32 %v2196, %v2196
      %v2330 = vmul.f32 %v2198, %v2198
      %v2331 = vmul.f32 %v2201, %v2201
      %v2332 = vmul.f32 %v2203, %v2203
      %v2333 = vmul.f32 %v2206, %v2206
      %v2334 = vmul.f32 %v2208, %v2208
      %v2335 = vmul.f32 %v2211, %v2211
      %v2336 = vmul.f32 %v2213, %v2213
      %v2337 = vmul.f32 %v2216, %v2216
      %v2338 = vmul.f32 %v2218, %v2218
      %v2339 = vmul.f32 %v2221, %v2221
      %v2340 = vmul.f32 %v2223, %v2223
      %v2341 = vmul.f32 %v2226, %v2226
      %v2342 = vmul.f32 %v2228, %v2228
      %v2343 = vmul.f32 %v2231, %v2231
      %v2344 = vmul.f32 %v2233, %v2233
      %v2345 = vmul.f32 %v2236, %v2236
      %v2346 = vmul.f32 %v2238, %v2238
      %v2347 = vmul.f32 %v2241, %v2241
      %v2348 = vmul.f32 %v2243, %v2243
      %v2349 = vmul.f32 %v2246, %v2246
      %v2350 = vmul.f32 %v2248, %v2248
      %v2351 = vadd.f32 %v2319, %v2320
      %v2352 = vadd.f32 %v2351, %v2321
      %v2353 = vadd.f32 %v2352, %v2322
      %v2354 = vadd.f32 %v2353, %v2323
      %v2355 = vadd.f32 %v2354, %v2324
      %v2356 = vadd.f32 %v2355, %v2325
      %v2357 = vadd.f32 %v2356, %v2326
      %v2358 = vadd.f32 %v2357, %v2327
      %v2359 = vadd.f32 %v2358, %v2328
      %v2360 = vadd.f32 %v2359, %v2329
      %v2361 = vadd.f32 %v2360, %v2330
      %v2362 = vadd.f32 %v2361, %v2331
      %v2363 = vadd.f32 %v2362, %v2332
      %v2364 = vadd.f32 %v2363, %v2333
      %v2365 = vadd.f32 %v2364, %v2334
      %v2366 = vadd.f32 %v2365, %v2335
      %v2367 = vadd.f32 %v2366, %v2336
      %v2368 = vadd.f32 %v2367, %v2337
      %v2369 = vadd.f32 %v2368, %v2338
      %v2370 = vadd.f32 %v2369, %v2339
      %v2371 = vadd.f32 %v2370, %v2340
      %v2372 = vadd.f32 %v2371, %v2341
      %v2373 = vadd.f32 %v2372, %v2342
      %v2374 = vadd.f32 %v2373, %v2343
      %v2375 = vadd.f32 %v2374, %v2344
      %v2376 = vadd.f32 %v2375, %v2345
      %v2377 = vadd.f32 %v2376, %v2346
      %v2378 = vadd.f32 %v2377, %v2347
      %v2379 = vadd.f32 %v2378, %v2348
      %v2380 = vadd.f32 %v2379, %v2349
      %v2381 = vadd.f32 %v2380, %v2350
      %v2382 = vrot.slane %v2381, 4
      %v2383 = vadd.f32 %v2381, %v2382
      %v2384 = vrot.slane %v2383, 2
      %v2385 = vadd.f32 %v2383, %v2384
      %v2386 = vrot.slane %v2385, 1
      %v2387 = vadd.f32 %v2385, %v2386
      %vm2388 = vcmask 1040384
      %v2389 = vsel %vm2388, %v2318, %v2387
      %2390 = vst [vmem:[%s208] sm:$0x3] %v2389
      %p2391 = scmp.lt.s32.totalorder %s16, 1
      %s2392 = scalar_select %p2391, %s16, 1
      %s2393 = smul.addr %s2392, 32
      %s2394 = smul.addr %s2393, 8
      %s2395 = scalar_lea.vmem %s3, %s2394
      %p2396 = scmp.lt.s32.totalorder %s16, 1
      %s2397 = scalar_select %p2396, %s16, 1
      %s2398 = smul.addr %s2397, 2
      %s2399 = scalar_lea.vmem %s4, %s2398
      // Predicated region
      $region33: #{basic_block_pallas.3} parent=31 // pred_check
        %p2400 = pneg %p102
      $region34: #{basic_block_pallas.3} parent=31 // pred_check_branch
        %2402 = sbr.rel (%p2400) target = $region36
      $region35: #{basic_block_pallas.3} parent=31 // pred_region
        _
      $region36: #{basic_block_pallas.3} parent=31 // pred_fallthru
        _
      // Predicated region
      $region37: #{basic_block_pallas.3} parent=31 // pred_check
        %p2403 = pneg %p128
      $region38: #{basic_block_pallas.3} parent=31 // pred_check_branch
        %2405 = sbr.rel (%p2403) target = $region40
      $region39: #{basic_block_pallas.3} parent=31 // pred_region
        _
      $region40: #{basic_block_pallas.3} parent=31 // pred_fallthru
        _
    $region32: #{basic_block_pallas.3} parent=5 // pred_fallthru
      _
    %p2406 = scmp.le.s32.totalorder 2, %s11
    // Predicated region
    $region41: #{basic_block_pallas.3} parent=5 // pred_check
      %p2407 = pneg %p2406
    $region42: #{basic_block_pallas.3} parent=5 // pred_check_branch
      %2409 = sbr.rel (%p2407) target = $region44
    $region43: #{basic_block_pallas.3} parent=5 // pred_region
      %s2410 = ssub.s32 %s11, 2
      // Predicated region
      $region45: #{basic_block_pallas.3} parent=43 // pred_check
        %p2411 = pneg %p108
      $region46: #{basic_block_pallas.3} parent=43 // pred_check_branch
        %2413 = sbr.rel (%p2411) target = $region48
      $region47: #{basic_block_pallas.3} parent=43 // pred_region
        %p2414 = scmp.lt.s32.totalorder %s17, 1
        %s2415 = scalar_select %p2414, %s17, 1
        %s2416 = smul.addr %s2415, 32
        %s2417 = smul.addr %s2416, 8
        %s2418 = scalar_lea.vmem %s3, %s2417
      $region48: #{basic_block_pallas.3} parent=43 // pred_fallthru
        _
      // Predicated region
      $region49: #{basic_block_pallas.3} parent=43 // pred_check
        %p2419 = pneg %p134
      $region50: #{basic_block_pallas.3} parent=43 // pred_check_branch
        %2421 = sbr.rel (%p2419) target = $region52
      $region51: #{basic_block_pallas.3} parent=43 // pred_region
        %p2422 = scmp.lt.s32.totalorder %s17, 1
        %s2423 = scalar_select %p2422, %s17, 1
        %s2424 = smul.addr %s2423, 2
        %s2425 = scalar_lea.vmem %s4, %s2424
      $region52: #{basic_block_pallas.3} parent=43 // pred_fallthru
        _
    $region44: #{basic_block_pallas.3} parent=5 // pred_fallthru
      _
  $region6: #{basic_block_pallas.3} parent=0 // loop_footer
    %s15 = sadd.s32 1, %s11
  $region7: #{basic_block_pallas.3} parent=0 // loop_footer_branch
    %10 = sbr.rel target = $region3
  $region8: #{basic_block_pallas.3} parent=0 // loop_exit
    _

</llo_original>
